<compile_context>
chip_gen: v6e
topology: v6e:2x2x1
jax: 0.10.0
libtpu: 0.0.40
codegen_flags: <defaults>
</compile_context>

<pallas_src>
import functools

import jax
import jax.numpy as jnp
from jax.experimental import pallas as pl
from jax.experimental.pallas import tpu as pltpu


# --------------------------------------------------------------------------------------
# small helpers
# --------------------------------------------------------------------------------------

def _round_up(x, m):
    return (x + m - 1) // m * m


def _pick_tile(n, target=512):
    """Row-tile size: multiple of 8, <= target, >= 2 grid blocks whenever n > 8."""
    if n <= 8:
        return 8
    half = _round_up((n + 1) // 2, 8)
    return min(_round_up(target, 8), half)


def _pick_conv_rows(Ho, Wp, Cin, budget_bytes=2 * 1024 * 1024):
    """Conv row-tile: multiple of 8, sized so the (th, Wp, Cin) bf16 block fits a byte budget."""
    per_row = max(1, Wp * Cin * 2)                     # bf16 bytes per padded input row
    th = (budget_bytes // per_row) // 8 * 8
    th = max(8, min(th, _round_up(Ho, 8)))
    if Ho > 8:                                         # keep >= 2 row tiles (megacore at B=1)
        th = min(th, _round_up((Ho + 1) // 2, 8))
    return max(8, th)


def _fit_rows(x, rows_valid, rows_target):
    """Slice garbage tail rows and/or pad so x.shape[1] == rows_target (no-op when aligned)."""
    if x.shape[1] > rows_valid:
        x = x[:, :rows_valid]
    if x.shape[1] < rows_target:
        x = jnp.pad(x, ((0, 0), (0, rows_target - x.shape[1]), (0, 0)))
    return x


def _fold(w, b, bn=None, eps=1e-5):
    """Fold bias + eval-mode BN into (bf16 weight, f32 shift) so y = x@w_eff + shift."""
    if bn is None:
        s = jnp.ones_like(b)
        sh = b
    else:
        gamma, beta, mean, var = bn
        s = gamma / jnp.sqrt(var + eps)
        sh = (b - mean) * s + beta
    return (w * s).astype(jnp.bfloat16), sh.reshape(1, -1).astype(jnp.float32)


def _cp(*sems):
    return pltpu.CompilerParams(dimension_semantics=tuple(sems),
                                vmem_limit_bytes=64 * 1024 * 1024)


# --------------------------------------------------------------------------------------
# Kernel A: row-tiled 3x3 conv (+ folded BN + ReLU), bf16 input, 2-row halo via second spec
# --------------------------------------------------------------------------------------

def _conv3x3_kernel(xm_ref, xh_ref, w_ref, b_ref, o_ref, *, th, W):
    """One (th x W) output row tile.
    xm: (1, th, W+2, Cin) main rows; xh: (1, 8, W+2, Cin) halo rows (first 2 used)."""
    Cin = xm_ref.shape[-1]
    rows = jnp.concatenate([xm_ref[0], xh_ref[0, :2]], axis=0)       # (th+2, W+2, Cin) bf16
    acc = jnp.zeros(o_ref.shape[1:], jnp.float32)                    # (th*W, Cout)
    # TODO(synk): for small Cin a single (th*W, 9*Cin)x(9*Cin, Cout) matmul fills the MXU
    #             better (the stride-4 backbone below does exactly that); the 9-accumulate
    #             form is kept here because conv3x3_ocr's Cin is large on real HRNet.
    for dy in range(3):
        for dx in range(3):
            tap = rows[dy:dy + th, dx:dx + W, :].reshape(th * W, Cin)
            acc = acc + jnp.dot(tap, w_ref[dy, dx], preferred_element_type=jnp.float32)
    o_ref[0] = jnp.maximum(acc + b_ref[...], 0.0).astype(o_ref.dtype)


def conv3x3_bn_relu(x_nhwc, w_eff, shift, *, out_dtype=jnp.bfloat16):
    """x (B,Ho,Wo,Cin) bf16, w_eff (3,3,Cin,Cout) bf16, shift (1,Cout) f32 -> (B, Hc*Wo, Cout)."""
    B, Ho, Wo, Cin = x_nhwc.shape
    Cout = w_eff.shape[-1]
    Wp = Wo + 2
    th = _pick_conv_rows(Ho, Wp, Cin)
    Hc = _round_up(Ho, th)
    Rtot = Hc + th                                   # all main & halo blocks stay in-bounds
    xp = jnp.pad(x_nhwc, ((0, 0), (1, Rtot - Ho - 1), (1, 1), (0, 0)))   # bf16, no f32 copy
    halo = th // 8
    return pl.pallas_call(
        functools.partial(_conv3x3_kernel, th=th, W=Wo),
        out_shape=jax.ShapeDtypeStruct((B, Hc * Wo, Cout), out_dtype),
        grid=(B, Hc // th),
        in_specs=[
            pl.BlockSpec((1, th, Wp, Cin), lambda b, t: (b, t, 0, 0)),
            pl.BlockSpec((1, 8, Wp, Cin), lambda b, t: (b, t * halo + halo, 0, 0)),
            pl.BlockSpec((3, 3, Cin, Cout), lambda b, t: (0, 0, 0, 0)),
            pl.BlockSpec((1, Cout), lambda b, t: (0, 0)),
        ],
        out_specs=pl.BlockSpec((1, th * Wo, Cout), lambda b, t: (b, t, 0)),
        compiler_params=_cp("parallel", "parallel"),
    )(xp, xp, w_eff, shift)


# --------------------------------------------------------------------------------------
# Kernel B: stride-4 backbone stand-in (single K=27 matmul) fused with the whole aux head
# --------------------------------------------------------------------------------------

def _backbone_aux_kernel(x_ref, wb_ref, bb_ref, w1_ref, b1_ref, w2_ref, b2_ref,
                         hl_ref, aux_ref):
    h0 = jnp.dot(x_ref[0], wb_ref[...], preferred_element_type=jnp.float32) + bb_ref[...]
    h0 = jnp.maximum(h0, 0.0)                                        # backbone stand-in
    hl_ref[0] = h0.astype(hl_ref.dtype)
    h1 = jnp.dot(h0.astype(jnp.bfloat16), w1_ref[...],
                 preferred_element_type=jnp.float32) + b1_ref[...]
    h1 = jnp.maximum(h1, 0.0)                                        # aux 1x1 + BN + ReLU
    aux = jnp.dot(h1.astype(jnp.bfloat16), w2_ref[...],
                  preferred_element_type=jnp.float32) + b2_ref[...]  # aux cls (padded lanes)
    aux_ref[0] = aux.astype(aux_ref.dtype)


def backbone_aux(x9, wb, bb, w1, b1, w2, b2, *, thw):
    B, HWp, C9 = x9.shape
    hlc = wb.shape[-1]
    KP = w2.shape[-1]
    return pl.pallas_call(
        _backbone_aux_kernel,
        out_shape=(jax.ShapeDtypeStruct((B, HWp, hlc), jnp.bfloat16),
                   jax.ShapeDtypeStruct((B, HWp, KP), jnp.float32)),
        grid=(B, HWp // thw),
        in_specs=[
            pl.BlockSpec((1, thw, C9), lambda b, t: (b, t, 0)),
            pl.BlockSpec(wb.shape, lambda b, t: (0, 0)),
            pl.BlockSpec(bb.shape, lambda b, t: (0, 0)),
            pl.BlockSpec(w1.shape, lambda b, t: (0, 0)),
            pl.BlockSpec(b1.shape, lambda b, t: (0, 0)),
            pl.BlockSpec(w2.shape, lambda b, t: (0, 0)),
            pl.BlockSpec(b2.shape, lambda b, t: (0, 0)),
        ],
        out_specs=(pl.BlockSpec((1, thw, hlc), lambda b, t: (b, t, 0)),
                   pl.BlockSpec((1, thw, KP), lambda b, t: (b, t, 0))),
        compiler_params=_cp("parallel", "parallel"),
    )(x9, wb, bb, w1, b1, w2, b2)


# --------------------------------------------------------------------------------------
# Kernel C: SpatialGather as online softmax over HW tiles, fused with f_object / f_down
# --------------------------------------------------------------------------------------

def _gather_object_kernel(aux_ref, feats_ref, wo1_ref, bo1_ref, wo2_ref, bo2_ref,
                          wd_ref, bd_ref, koT_ref, valT_ref, m_sc, l_sc, ctx_sc,
                          *, num_classes, thw, hw_valid):
    t = pl.program_id(1)

    @pl.when(t == 0)
    def _():
        m_sc[...] = jnp.full_like(m_sc, -jnp.inf)
        l_sc[...] = jnp.zeros_like(l_sc)
        ctx_sc[...] = jnp.zeros_like(ctx_sc)

    a = aux_ref[0, :, :num_classes]                                  # (thw, K) f32 logits
    row = t * thw + jax.lax.broadcasted_iota(jnp.int32, (thw, 1), 0)
    a = jnp.where(row < hw_valid, a, -jnp.inf)                       # mask tail pad rows

    m_new = jnp.maximum(m_sc[...], jnp.max(a, axis=0, keepdims=True))   # (1, K)
    corr = jnp.exp(m_sc[...] - m_new)
    e = jnp.exp(a - m_new)                                           # (thw, K) un-normalized
    l_sc[...] = corr * l_sc[...] + jnp.sum(e, axis=0, keepdims=True)
    # ctx^T[c, k] += sum_hw feats[hw, c] * e[hw, k]   (normalization deferred)
    ctx_sc[...] = corr * ctx_sc[...] + jax.lax.dot_general(
        feats_ref[0], e.astype(jnp.bfloat16), (((0,), (0,)), ((), ())),
        preferred_element_type=jnp.float32)
    m_sc[...] = m_new

    @pl.when(t == pl.num_programs(1) - 1)
    def _():
        # normalize after the matmul: mid*K multiplies instead of HW*K divides
        ctx = (ctx_sc[...] * pl.reciprocal(l_sc[...], approx=True)).astype(jnp.bfloat16)
        k1 = jnp.maximum(
            jax.lax.dot_general(wo1_ref[...], ctx, (((0,), (0,)), ((), ())),
                                preferred_element_type=jnp.float32) + bo1_ref[...], 0.0)
        k2 = jnp.maximum(
            jax.lax.dot_general(wo2_ref[...], k1.astype(jnp.bfloat16),
                                (((0,), (0,)), ((), ())),
                                preferred_element_type=jnp.float32) + bo2_ref[...], 0.0)
        v = jnp.maximum(
            jax.lax.dot_general(wd_ref[...], ctx, (((0,), (0,)), ((), ())),
                                preferred_element_type=jnp.float32) + bd_ref[...], 0.0)
        koT_ref[0] = k2.astype(koT_ref.dtype)                        # (kc, K)
        valT_ref[0] = v.astype(valT_ref.dtype)                       # (kc, K)


def gather_and_object(aux, feats, wo1, bo1, wo2, bo2, wd, bd, *, num_classes, thw, hw_valid):
    B, HWp, KP = aux.shape
    mid = feats.shape[-1]
    kc = wo1.shape[-1]
    K = num_classes
    kern = functools.partial(_gather_object_kernel, num_classes=K, thw=thw, hw_valid=hw_valid)
    return pl.pallas_call(
        kern,
        out_shape=(jax.ShapeDtypeStruct((B, kc, K), jnp.bfloat16),
                   jax.ShapeDtypeStruct((B, kc, K), jnp.bfloat16)),
        grid=(B, HWp // thw),
        in_specs=[
            pl.BlockSpec((1, thw, KP), lambda b, t: (b, t, 0)),
            pl.BlockSpec((1, thw, mid), lambda b, t: (b, t, 0)),
            pl.BlockSpec(wo1.shape, lambda b, t: (0, 0)),
            pl.BlockSpec(bo1.shape, lambda b, t: (0, 0)),
            pl.BlockSpec(wo2.shape, lambda b, t: (0, 0)),
            pl.BlockSpec(bo2.shape, lambda b, t: (0, 0)),
            pl.BlockSpec(wd.shape, lambda b, t: (0, 0)),
            pl.BlockSpec(bd.shape, lambda b, t: (0, 0)),
        ],
        out_specs=(pl.BlockSpec((1, kc, K), lambda b, t: (b, 0, 0)),
                   pl.BlockSpec((1, kc, K), lambda b, t: (b, 0, 0))),
        scratch_shapes=[pltpu.VMEM((1, K), jnp.float32),
                        pltpu.VMEM((1, K), jnp.float32),
                        pltpu.VMEM((mid, K), jnp.float32)],
        compiler_params=_cp("parallel", "arbitrary"),
    )(aux, feats, wo1, bo1, wo2, bo2, wd, bd)


# --------------------------------------------------------------------------------------
# Kernel D: full pixel path  f_pixel -> attention -> f_up -> out-conv(concat) -> cls_head
# --------------------------------------------------------------------------------------

def _pixel_path_kernel(f_ref, koT_ref, valT_ref,
                       wp1_ref, bp1_ref, wp2_ref, bp2_ref,
                       wup_ref, bup_ref, woc_ref, wof_ref, bout_ref,
                       wcls_ref, bcls_ref, o_ref):
    f = f_ref[0]                                                     # (thw, mid) bf16
    # f_pixel: two fused (1x1 conv + folded BN + ReLU); attention scale folded into wp2/bp2
    q = jnp.maximum(jnp.dot(f, wp1_ref[...],
                            preferred_element_type=jnp.float32) + bp1_ref[...], 0.0)
    q = jnp.maximum(jnp.dot(q.astype(jnp.bfloat16), wp2_ref[...],
                            preferred_element_type=jnp.float32) + bp2_ref[...], 0.0)
    # object attention: softmax(Q K^T) V over the K classes (exact denominator)
    sim = jnp.dot(q.astype(jnp.bfloat16), koT_ref[0],
                  preferred_element_type=jnp.float32)                # (thw, K)
    m = jnp.max(sim, axis=-1, keepdims=True)
    e = jnp.exp(sim - m)
    p = e / jnp.sum(e, axis=-1, keepdims=True)
    ctx = jax.lax.dot_general(p.astype(jnp.bfloat16), valT_ref[0],
                              (((1,), (1,)), ((), ())),
                              preferred_element_type=jnp.float32)    # (thw, kc)
    # f_up: 1x1 conv + BN + ReLU
    up = jnp.maximum(jnp.dot(ctx.astype(jnp.bfloat16), wup_ref[...],
                             preferred_element_type=jnp.float32) + bup_ref[...], 0.0)
    # conv_bn_dropout on concat([ctx_up, feats]) as split matmul (dropout = eval identity)
    y = jnp.dot(up.astype(jnp.bfloat16), woc_ref[...], preferred_element_type=jnp.float32)
    y = y + jnp.dot(f, wof_ref[...], preferred_element_type=jnp.float32)
    ocr = jnp.maximum(y + bout_ref[...], 0.0)                        # (thw, mid)
    # cls head (1x1 conv, lane-dense padded class dim)
    cls = jnp.dot(ocr.astype(jnp.bfloat16), wcls_ref[...],
                  preferred_element_type=jnp.float32) + bcls_ref[...]
    o_ref[0] = cls.astype(o_ref.dtype)


def pixel_path(feats, koT, valT, wp1, bp1, wp2, bp2, wup, bup, woc, wof, bout,
               wcls, bcls, *, thw):
    B, HWp, mid = feats.shape
    kc, K = koT.shape[1], koT.shape[2]
    KP = wcls.shape[-1]

    def wspec(shape):
        return pl.BlockSpec(shape, lambda b, t: (0, 0))

    return pl.pallas_call(
        _pixel_path_kernel,
        out_shape=jax.ShapeDtypeStruct((B, HWp, KP), jnp.float32),
        grid=(B, HWp // thw),
        in_specs=[
            pl.BlockSpec((1, thw, mid), lambda b, t: (b, t, 0)),
            pl.BlockSpec((1, kc, K), lambda b, t: (b, 0, 0)),
            pl.BlockSpec((1, kc, K), lambda b, t: (b, 0, 0)),
            wspec(wp1.shape), wspec(bp1.shape), wspec(wp2.shape), wspec(bp2.shape),
            wspec(wup.shape), wspec(bup.shape),
            wspec(woc.shape), wspec(wof.shape), wspec(bout.shape),
            wspec(wcls.shape), wspec(bcls.shape),
        ],
        out_specs=pl.BlockSpec((1, thw, KP), lambda b, t: (b, t, 0)),
        compiler_params=_cp("parallel", "parallel"),
    )(feats, koT, valT, wp1, bp1, wp2, bp2, wup, bup, woc, wof, bout, wcls, bcls)


# --------------------------------------------------------------------------------------
# Parameters (deterministic, same structure as the reference)
# --------------------------------------------------------------------------------------

def init_params(key, *, in_ch=3, hlc=16, mid=32, key_ch=16, classes=4):
    keys = iter(jax.random.split(key, 80))

    def w(shape, s=0.1):
        return s * jax.random.normal(next(keys), shape, dtype=jnp.float32)

    def zeros(c):
        return jnp.zeros((c,), jnp.float32)

    def bn(c):
        return (1.0 + 0.1 * jax.random.normal(next(keys), (c,), jnp.float32),
                0.05 * jax.random.normal(next(keys), (c,), jnp.float32),
                0.05 * jax.random.normal(next(keys), (c,), jnp.float32),
                1.0 + 0.1 * jnp.abs(jax.random.normal(next(keys), (c,), jnp.float32)))

    return {
        'backbone': {'w': w((3, 3, in_ch, hlc)), 'b': w((hlc,))},
        'conv3x3_ocr': {'w': w((3, 3, hlc, mid)), 'b': w((mid,)), 'bn': bn(mid)},
        'aux_head': {'w1': w((hlc, hlc)), 'b1': w((hlc,)), 'bn1': bn(hlc),
                     'w2': w((hlc, classes)), 'b2': w((classes,))},
        'distri': {
            'f_pixel_w1': w((mid, key_ch)), 'f_pixel_b1': zeros(key_ch), 'f_pixel_bn1': bn(key_ch),
            'f_pixel_w2': w((key_ch, key_ch)), 'f_pixel_b2': zeros(key_ch), 'f_pixel_bn2': bn(key_ch),
            'f_object_w1': w((mid, key_ch)), 'f_object_b1': zeros(key_ch), 'f_object_bn1': bn(key_ch),
            'f_object_w2': w((key_ch, key_ch)), 'f_object_b2': zeros(key_ch), 'f_object_bn2': bn(key_ch),
            'f_down_w': w((mid, key_ch)), 'f_down_b': zeros(key_ch), 'f_down_bn': bn(key_ch),
            'f_up_w': w((key_ch, mid)), 'f_up_b': zeros(mid), 'f_up_bn': bn(mid),
            'out_w': w((2 * mid, mid)), 'out_bn': bn(mid),           # out conv: bias=False
        },
        'cls_head': {'w': w((mid, classes)), 'b': w((classes,))},
    }


# --------------------------------------------------------------------------------------
# Forward
# --------------------------------------------------------------------------------------

def ocrnet_forward(params, l_img_nchw, *, thw_target=512):
    B, Cin_img, Hi, Wi = l_img_nchw.shape
    x = jnp.transpose(l_img_nchw, (0, 2, 3, 1)).astype(jnp.bfloat16)      # NHWC bf16

    Ho, Wo = (Hi + 3) // 4, (Wi + 3) // 4
    HW = Ho * Wo
    thw = _pick_tile(HW, thw_target)        # TODO(synk): raise to 1024 on v6e, 256-512 on v7x
    HWp = _round_up(HW, thw)

    # ---- backbone stand-in at stride 4 only: 9 strided taps -> (B, HW, 9*Cin) im2col slab ----
    xp = jnp.pad(x, ((0, 0), (1, 1), (1, 1), (0, 0)))
    taps = [xp[:, dy::4, dx::4, :][:, :Ho, :Wo, :] for dy in range(3) for dx in range(3)]
    x9 = jnp.concatenate(taps, axis=-1).reshape(B, HW, 9 * Cin_img)
    if HWp > HW:
        x9 = jnp.pad(x9, ((0, 0), (0, HWp - HW), (0, 0)))   # TODO(synk): in-kernel tail mask

    pb = params['backbone']
    wb, shb = _fold(pb['w'], pb['b'])
    wb2d = wb.reshape(9 * Cin_img, -1)
    hlc = wb2d.shape[-1]

    pa = params['aux_head']
    w1, b1 = _fold(pa['w1'], pa['b1'], pa['bn1'])
    w2, b2 = _fold(pa['w2'], pa['b2'])
    K = w2.shape[-1]
    KP = max(128, _round_up(K, 128))                         # lane-dense padded class dim
    w2p = jnp.pad(w2, ((0, 0), (0, KP - K)))
    b2p = jnp.pad(b2, ((0, 0), (0, KP - K)))

    hl, aux = backbone_aux(x9, wb2d, shb, w1, b1, w2p, b2p, thw=thw)
    # hl (B, HWp, hlc) bf16 ; aux (B, HWp, KP) f32 (only first K columns meaningful)

    hlf = hl[:, :HW, :].reshape(B, Ho, Wo, hlc)

    # ---- conv3x3_ocr: row-tiled 3x3 conv + BN + ReLU (bf16 input) ----
    p3 = params['conv3x3_ocr']
    wc, shc = _fold(p3['w'], p3['b'], p3['bn'])
    mid = wc.shape[-1]
    feats = conv3x3_bn_relu(hlf, wc, shc)                    # (B, Hc*Wo, mid) bf16
    feats = _fit_rows(feats, HW, HWp)                        # align with aux tiling

    # ---- SpatialGather + f_object / f_down (online softmax over HW tiles) ----
    pd = params['distri']
    wo1, bo1 = _fold(pd['f_object_w1'], pd['f_object_b1'], pd['f_object_bn1'])
    wo2, bo2 = _fold(pd['f_object_w2'], pd['f_object_b2'], pd['f_object_bn2'])
    wd, bd = _fold(pd['f_down_w'], pd['f_down_b'], pd['f_down_bn'])
    koT, valT = gather_and_object(aux, feats, wo1, bo1.reshape(-1, 1), wo2, bo2.reshape(-1, 1),
                                  wd, bd.reshape(-1, 1),
                                  num_classes=K, thw=thw, hw_valid=HW)   # (B, kc, K) bf16

    # ---- pixel path: f_pixel -> attention -> f_up -> out-conv(concat) -> cls_head ----
    key_ch = pd['f_pixel_w1'].shape[1]
    scale = float(key_ch) ** -0.5
    wp1, bp1 = _fold(pd['f_pixel_w1'], pd['f_pixel_b1'], pd['f_pixel_bn1'])
    wp2, bp2 = _fold(pd['f_pixel_w2'], pd['f_pixel_b2'], pd['f_pixel_bn2'])
    wp2 = (wp2.astype(jnp.float32) * scale).astype(jnp.bfloat16)     # fold attention scale
    bp2 = bp2 * scale
    wup, bup = _fold(pd['f_up_w'], pd['f_up_b'], pd['f_up_bn'])
    wout, bout = _fold(pd['out_w'], jnp.zeros((mid,), jnp.float32), pd['out_bn'])
    woc, wof = wout[:mid], wout[mid:]                                # concat([ctx_up, feats])
    pc = params['cls_head']
    wcls, bcls = _fold(pc['w'], pc['b'])
    wclsp = jnp.pad(wcls, ((0, 0), (0, KP - K)))
    bclsp = jnp.pad(bcls, ((0, 0), (0, KP - K)))
    cls = pixel_path(feats, koT, valT, wp1, bp1, wp2, bp2, wup, bup, woc, wof, bout,
                     wclsp, bclsp, thw=thw)                          # (B, HWp, KP) f32

    # ---- scale_as: bilinear upsample to input resolution (align_corners=False) ----
    cls_nhwc = cls[:, :HW, :K].reshape(B, Ho, Wo, K)
    aux_nhwc = aux[:, :HW, :K].reshape(B, Ho, Wo, K)
    seg = jax.image.resize(cls_nhwc, (B, Hi, Wi, K), method='bilinear')
    seg_aux = jax.image.resize(aux_nhwc, (B, Hi, Wi, K), method='bilinear')

    return {
        'seg': jnp.transpose(seg, (0, 3, 1, 2)),
        'seg_aux': jnp.transpose(seg_aux, (0, 3, 1, 2)),
    }


# --------------------------------------------------------------------------------------

if __name__ == "__main__":
    key = jax.random.PRNGKey(0)
    k_param, k_img = jax.random.split(key)

    # small shapes: batch=2, RGB 32x32 input, high_level_ch=16, mid=32, key=16, classes=4
    params = init_params(k_param, in_ch=3, hlc=16, mid=32, key_ch=16, classes=4)
    l_img = jax.random.normal(k_img, (2, 3, 32, 32), dtype=jnp.float32)   # NCHW like PyTorch

    out = jax.jit(ocrnet_forward)(params, l_img)
    jax.block_until_ready(out)

    assert out['seg'].shape == (2, 4, 32, 32), out['seg'].shape
    assert out['seg_aux'].shape == (2, 4, 32, 32), out['seg_aux'].shape
    assert jnp.all(jnp.isfinite(out['seg'])) and jnp.all(jnp.isfinite(out['seg_aux']))
    print("KERNEL_OK")
</pallas_src>

<mosaic_0001>
module attributes {stable_mosaic.version = 11 : i64} {
  func.func @_backbone_aux_kernel(%arg0: i32, %arg1: i32, %arg2: memref<1x32x27xbf16, #tpu.memory_space<vmem>>, %arg3: memref<27x16xbf16, #tpu.memory_space<vmem>>, %arg4: memref<1x16xf32, #tpu.memory_space<vmem>>, %arg5: memref<16x16xbf16, #tpu.memory_space<vmem>>, %arg6: memref<1x16xf32, #tpu.memory_space<vmem>>, %arg7: memref<16x128xbf16, #tpu.memory_space<vmem>>, %arg8: memref<1x128xf32, #tpu.memory_space<vmem>>, %arg9: memref<1x32x16xbf16, #tpu.memory_space<vmem>>, %arg10: memref<1x32x128xf32, #tpu.memory_space<vmem>>) attributes {dimension_semantics = [#tpu.dimension_semantics<parallel>, #tpu.dimension_semantics<parallel>], iteration_bounds = array<i64: 2, 2>, scalar_prefetch = 0 : i64, scratch_operands = 0 : i64, tpu.core_type = #tpu.core_type<tc>, window_params = [{transform_indices = @transform_0, window_bounds = array<i64: 1, 32, 27>}, {pipeline_mode = #tpu.pipeline_mode<synchronous>, transform_indices = @transform_1, window_bounds = array<i64: 27, 16>}, {pipeline_mode = #tpu.pipeline_mode<synchronous>, transform_indices = @transform_2, window_bounds = array<i64: 1, 16>}, {pipeline_mode = #tpu.pipeline_mode<synchronous>, transform_indices = @transform_3, window_bounds = array<i64: 16, 16>}, {pipeline_mode = #tpu.pipeline_mode<synchronous>, transform_indices = @transform_4, window_bounds = array<i64: 1, 16>}, {pipeline_mode = #tpu.pipeline_mode<synchronous>, transform_indices = @transform_5, window_bounds = array<i64: 16, 128>}, {pipeline_mode = #tpu.pipeline_mode<synchronous>, transform_indices = @transform_6, window_bounds = array<i64: 1, 128>}, {transform_indices = @transform_7, window_bounds = array<i64: 1, 32, 16>}, {transform_indices = @transform_8, window_bounds = array<i64: 1, 32, 128>}]} {
    %c0 = arith.constant 0 : index
    %c0_0 = arith.constant 0 : index
    %c0_1 = arith.constant 0 : index
    %0 = vector.load %arg2[%c0, %c0_0, %c0_1] : memref<1x32x27xbf16, #tpu.memory_space<vmem>>, vector<1x32x27xbf16>
    %1 = vector.shape_cast %0 : vector<1x32x27xbf16> to vector<32x27xbf16>
    %c0_2 = arith.constant 0 : index
    %c0_3 = arith.constant 0 : index
    %2 = vector.load %arg3[%c0_2, %c0_3] : memref<27x16xbf16, #tpu.memory_space<vmem>>, vector<27x16xbf16>
    %cst = arith.constant dense<0.000000e+00> : vector<32x16xf32>
    %3 = tpu.matmul %1, %2, %cst {dimension_numbers = #tpu.dot_dimension_numbers<[1], [0], [0], [1], [0, 0, 1, 1], [], []>} : vector<32x27xbf16>, vector<27x16xbf16>, vector<32x16xf32> -> vector<32x16xf32>
    %c0_4 = arith.constant 0 : index
    %c0_5 = arith.constant 0 : index
    %4 = vector.load %arg4[%c0_4, %c0_5] : memref<1x16xf32, #tpu.memory_space<vmem>>, vector<1x16xf32>
    %5 = vector.broadcast %4 : vector<1x16xf32> to vector<32x16xf32>
    %6 = arith.addf %3, %5 : vector<32x16xf32>
    %cst_6 = arith.constant 0.000000e+00 : f32
    %7 = vector.broadcast %cst_6 : f32 to vector<32x16xf32>
    %8 = arith.maximumf %6, %7 : vector<32x16xf32>
    %9 = arith.truncf %8 : vector<32x16xf32> to vector<32x16xbf16>
    %c0_7 = arith.constant 0 : index
    %c0_8 = arith.constant 0 : index
    %c0_9 = arith.constant 0 : index
    %10 = vector.load %arg9[%c0_7, %c0_8, %c0_9] : memref<1x32x16xbf16, #tpu.memory_space<vmem>>, vector<1x32x16xbf16>
    %11 = vector.shape_cast %10 : vector<1x32x16xbf16> to vector<32x16xbf16>
    %12 = vector.shape_cast %9 : vector<32x16xbf16> to vector<1x32x16xbf16>
    tpu.vector_store %arg9[%c0_7, %c0_8, %c0_9], %12 {strides = array<i32>} : memref<1x32x16xbf16, #tpu.memory_space<vmem>>, vector<1x32x16xbf16>,
    %13 = arith.truncf %8 : vector<32x16xf32> to vector<32x16xbf16>
    %c0_10 = arith.constant 0 : index
    %c0_11 = arith.constant 0 : index
    %14 = vector.load %arg5[%c0_10, %c0_11] : memref<16x16xbf16, #tpu.memory_space<vmem>>, vector<16x16xbf16>
    %cst_12 = arith.constant dense<0.000000e+00> : vector<32x16xf32>
    %15 = tpu.matmul %13, %14, %cst_12 {dimension_numbers = #tpu.dot_dimension_numbers<[1], [0], [0], [1], [0, 0, 1, 1], [], []>} : vector<32x16xbf16>, vector<16x16xbf16>, vector<32x16xf32> -> vector<32x16xf32>
    %c0_13 = arith.constant 0 : index
    %c0_14 = arith.constant 0 : index
    %16 = vector.load %arg6[%c0_13, %c0_14] : memref<1x16xf32, #tpu.memory_space<vmem>>, vector<1x16xf32>
    %17 = vector.broadcast %16 : vector<1x16xf32> to vector<32x16xf32>
    %18 = arith.addf %15, %17 : vector<32x16xf32>
    %cst_15 = arith.constant 0.000000e+00 : f32
    %19 = vector.broadcast %cst_15 : f32 to vector<32x16xf32>
    %20 = arith.maximumf %18, %19 : vector<32x16xf32>
    %21 = arith.truncf %20 : vector<32x16xf32> to vector<32x16xbf16>
    %c0_16 = arith.constant 0 : index
    %c0_17 = arith.constant 0 : index
    %22 = vector.load %arg7[%c0_16, %c0_17] : memref<16x128xbf16, #tpu.memory_space<vmem>>, vector<16x128xbf16>
    %cst_18 = arith.constant dense<0.000000e+00> : vector<32x128xf32>
    %23 = tpu.matmul %21, %22, %cst_18 {dimension_numbers = #tpu.dot_dimension_numbers<[1], [0], [0], [1], [0, 0, 1, 1], [], []>} : vector<32x16xbf16>, vector<16x128xbf16>, vector<32x128xf32> -> vector<32x128xf32>
    %c0_19 = arith.constant 0 : index
    %c0_20 = arith.constant 0 : index
    %24 = vector.load %arg8[%c0_19, %c0_20] : memref<1x128xf32, #tpu.memory_space<vmem>>, vector<1x128xf32>
    %25 = vector.broadcast %24 : vector<1x128xf32> to vector<32x128xf32>
    %26 = arith.addf %23, %25 : vector<32x128xf32>
    %c0_21 = arith.constant 0 : index
    %c0_22 = arith.constant 0 : index
    %c0_23 = arith.constant 0 : index
    %27 = vector.load %arg10[%c0_21, %c0_22, %c0_23] : memref<1x32x128xf32, #tpu.memory_space<vmem>>, vector<1x32x128xf32>
    %28 = vector.shape_cast %27 : vector<1x32x128xf32> to vector<32x128xf32>
    %29 = vector.shape_cast %26 : vector<32x128xf32> to vector<1x32x128xf32>
    tpu.vector_store %arg10[%c0_21, %c0_22, %c0_23], %29 {strides = array<i32>} : memref<1x32x128xf32, #tpu.memory_space<vmem>>, vector<1x32x128xf32>,
    return
  }
  func.func @transform_0(%arg0: i32, %arg1: i32) -> (i32, i32, i32) {
    %c0_i32 = arith.constant 0 : i32
    %c0_i32_0 = arith.constant 0 : i32
    return %arg0, %arg1, %c0_i32 : i32, i32, i32
  }
  func.func @transform_1(%arg0: i32, %arg1: i32) -> (i32, i32) {
    %c0_i32 = arith.constant 0 : i32
    %c0_i32_0 = arith.constant 0 : i32
    %c0_i32_1 = arith.constant 0 : i32
    return %c0_i32, %c0_i32_0 : i32, i32
  }
  func.func @transform_2(%arg0: i32, %arg1: i32) -> (i32, i32) {
    %c0_i32 = arith.constant 0 : i32
    %c0_i32_0 = arith.constant 0 : i32
    %c0_i32_1 = arith.constant 0 : i32
    return %c0_i32, %c0_i32_0 : i32, i32
  }
  func.func @transform_3(%arg0: i32, %arg1: i32) -> (i32, i32) {
    %c0_i32 = arith.constant 0 : i32
    %c0_i32_0 = arith.constant 0 : i32
    %c0_i32_1 = arith.constant 0 : i32
    return %c0_i32, %c0_i32_0 : i32, i32
  }
  func.func @transform_4(%arg0: i32, %arg1: i32) -> (i32, i32) {
    %c0_i32 = arith.constant 0 : i32
    %c0_i32_0 = arith.constant 0 : i32
    %c0_i32_1 = arith.constant 0 : i32
    return %c0_i32, %c0_i32_0 : i32, i32
  }
  func.func @transform_5(%arg0: i32, %arg1: i32) -> (i32, i32) {
    %c0_i32 = arith.constant 0 : i32
    %c0_i32_0 = arith.constant 0 : i32
    %c0_i32_1 = arith.constant 0 : i32
    return %c0_i32, %c0_i32_0 : i32, i32
  }
  func.func @transform_6(%arg0: i32, %arg1: i32) -> (i32, i32) {
    %c0_i32 = arith.constant 0 : i32
    %c0_i32_0 = arith.constant 0 : i32
    %c0_i32_1 = arith.constant 0 : i32
    return %c0_i32, %c0_i32_0 : i32, i32
  }
  func.func @transform_7(%arg0: i32, %arg1: i32) -> (i32, i32, i32) {
    %c0_i32 = arith.constant 0 : i32
    %c0_i32_0 = arith.constant 0 : i32
    return %arg0, %arg1, %c0_i32 : i32, i32, i32
  }
  func.func @transform_8(%arg0: i32, %arg1: i32) -> (i32, i32, i32) {
    %c0_i32 = arith.constant 0 : i32
    %c0_i32_0 = arith.constant 0 : i32
    return %arg0, %arg1, %c0_i32 : i32, i32, i32
  }
}

module attributes {stable_mosaic.version = 11 : i64} {
  func.func @_conv3x3_kernel(%arg0: i32, %arg1: i32, %arg2: memref<1x8x10x16xbf16, #tpu.memory_space<vmem>>, %arg3: memref<1x8x10x16xbf16, #tpu.memory_space<vmem>>, %arg4: memref<3x3x16x32xbf16, #tpu.memory_space<vmem>>, %arg5: memref<1x32xf32, #tpu.memory_space<vmem>>, %arg6: memref<1x64x32xbf16, #tpu.memory_space<vmem>>) attributes {dimension_semantics = [#tpu.dimension_semantics<parallel>, #tpu.dimension_semantics<parallel>], iteration_bounds = array<i64: 2, 1>, scalar_prefetch = 0 : i64, scratch_operands = 0 : i64, tpu.core_type = #tpu.core_type<tc>, window_params = [{transform_indices = @transform_0, window_bounds = array<i64: 1, 8, 10, 16>}, {transform_indices = @transform_1, window_bounds = array<i64: 1, 8, 10, 16>}, {pipeline_mode = #tpu.pipeline_mode<synchronous>, transform_indices = @transform_2, window_bounds = array<i64: 3, 3, 16, 32>}, {pipeline_mode = #tpu.pipeline_mode<synchronous>, transform_indices = @transform_3, window_bounds = array<i64: 1, 32>}, {transform_indices = @transform_4, window_bounds = array<i64: 1, 64, 32>}]} {
    %c0 = arith.constant 0 : index
    %c0_0 = arith.constant 0 : index
    %c0_1 = arith.constant 0 : index
    %c0_2 = arith.constant 0 : index
    %0 = vector.load %arg2[%c0, %c0_0, %c0_1, %c0_2] : memref<1x8x10x16xbf16, #tpu.memory_space<vmem>>, vector<1x8x10x16xbf16>
    %1 = vector.shape_cast %0 : vector<1x8x10x16xbf16> to vector<8x10x16xbf16>
    %c0_3 = arith.constant 0 : index
    %c0_4 = arith.constant 0 : index
    %c0_5 = arith.constant 0 : index
    %c0_6 = arith.constant 0 : index
    %2 = vector.load %arg3[%c0_3, %c0_4, %c0_5, %c0_6] : memref<1x8x10x16xbf16, #tpu.memory_space<vmem>>, vector<1x2x10x16xbf16>
    %3 = vector.shape_cast %2 : vector<1x2x10x16xbf16> to vector<2x10x16xbf16>
    %4 = tpu.concatenate %1, %3 in 0 : vector<8x10x16xbf16>, vector<2x10x16xbf16> -> vector<10x10x16xbf16>
    %cst = arith.constant 0.000000e+00 : f32
    %5 = vector.broadcast %cst : f32 to vector<64x32xf32>
    %6 = vector.extract_strided_slice %4 {offsets = [0, 0, 0], sizes = [8, 8, 16], strides = [1, 1, 1]} : vector<10x10x16xbf16> to vector<8x8x16xbf16>
    %7 = vector.shape_cast %6 : vector<8x8x16xbf16> to vector<64x16xbf16>
    %c0_7 = arith.constant 0 : index
    %c0_8 = arith.constant 0 : index
    %c0_9 = arith.constant 0 : index
    %c0_10 = arith.constant 0 : index
    %8 = vector.load %arg4[%c0_7, %c0_8, %c0_9, %c0_10] : memref<3x3x16x32xbf16, #tpu.memory_space<vmem>>, vector<1x1x16x32xbf16>
    %9 = vector.shape_cast %8 : vector<1x1x16x32xbf16> to vector<16x32xbf16>
    %cst_11 = arith.constant dense<0.000000e+00> : vector<64x32xf32>
    %10 = tpu.matmul %7, %9, %cst_11 {dimension_numbers = #tpu.dot_dimension_numbers<[1], [0], [0], [1], [0, 0, 1, 1], [], []>} : vector<64x16xbf16>, vector<16x32xbf16>, vector<64x32xf32> -> vector<64x32xf32>
    %11 = arith.addf %5, %10 : vector<64x32xf32>
    %12 = vector.extract_strided_slice %4 {offsets = [0, 1, 0], sizes = [8, 8, 16], strides = [1, 1, 1]} : vector<10x10x16xbf16> to vector<8x8x16xbf16>
    %13 = vector.shape_cast %12 : vector<8x8x16xbf16> to vector<64x16xbf16>
    %c0_12 = arith.constant 0 : index
    %c1 = arith.constant 1 : index
    %c0_13 = arith.constant 0 : index
    %c0_14 = arith.constant 0 : index
    %14 = vector.load %arg4[%c0_12, %c1, %c0_13, %c0_14] : memref<3x3x16x32xbf16, #tpu.memory_space<vmem>>, vector<1x1x16x32xbf16>
    %15 = vector.shape_cast %14 : vector<1x1x16x32xbf16> to vector<16x32xbf16>
    %cst_15 = arith.constant dense<0.000000e+00> : vector<64x32xf32>
    %16 = tpu.matmul %13, %15, %cst_15 {dimension_numbers = #tpu.dot_dimension_numbers<[1], [0], [0], [1], [0, 0, 1, 1], [], []>} : vector<64x16xbf16>, vector<16x32xbf16>, vector<64x32xf32> -> vector<64x32xf32>
    %17 = arith.addf %11, %16 : vector<64x32xf32>
    %18 = vector.extract_strided_slice %4 {offsets = [0, 2, 0], sizes = [8, 8, 16], strides = [1, 1, 1]} : vector<10x10x16xbf16> to vector<8x8x16xbf16>
    %19 = vector.shape_cast %18 : vector<8x8x16xbf16> to vector<64x16xbf16>
    %c0_16 = arith.constant 0 : index
    %c2 = arith.constant 2 : index
    %c0_17 = arith.constant 0 : index
    %c0_18 = arith.constant 0 : index
    %20 = vector.load %arg4[%c0_16, %c2, %c0_17, %c0_18] : memref<3x3x16x32xbf16, #tpu.memory_space<vmem>>, vector<1x1x16x32xbf16>
    %21 = vector.shape_cast %20 : vector<1x1x16x32xbf16> to vector<16x32xbf16>
    %cst_19 = arith.constant dense<0.000000e+00> : vector<64x32xf32>
    %22 = tpu.matmul %19, %21, %cst_19 {dimension_numbers = #tpu.dot_dimension_numbers<[1], [0], [0], [1], [0, 0, 1, 1], [], []>} : vector<64x16xbf16>, vector<16x32xbf16>, vector<64x32xf32> -> vector<64x32xf32>
    %23 = arith.addf %17, %22 : vector<64x32xf32>
    %24 = vector.extract_strided_slice %4 {offsets = [1, 0, 0], sizes = [8, 8, 16], strides = [1, 1, 1]} : vector<10x10x16xbf16> to vector<8x8x16xbf16>
    %25 = vector.shape_cast %24 : vector<8x8x16xbf16> to vector<64x16xbf16>
    %c1_20 = arith.constant 1 : index
    %c0_21 = arith.constant 0 : index
    %c0_22 = arith.constant 0 : index
    %c0_23 = arith.constant 0 : index
    %26 = vector.load %arg4[%c1_20, %c0_21, %c0_22, %c0_23] : memref<3x3x16x32xbf16, #tpu.memory_space<vmem>>, vector<1x1x16x32xbf16>
    %27 = vector.shape_cast %26 : vector<1x1x16x32xbf16> to vector<16x32xbf16>
    %cst_24 = arith.constant dense<0.000000e+00> : vector<64x32xf32>
    %28 = tpu.matmul %25, %27, %cst_24 {dimension_numbers = #tpu.dot_dimension_numbers<[1], [0], [0], [1], [0, 0, 1, 1], [], []>} : vector<64x16xbf16>, vector<16x32xbf16>, vector<64x32xf32> -> vector<64x32xf32>
    %29 = arith.addf %23, %28 : vector<64x32xf32>
    %30 = vector.extract_strided_slice %4 {offsets = [1, 1, 0], sizes = [8, 8, 16], strides = [1, 1, 1]} : vector<10x10x16xbf16> to vector<8x8x16xbf16>
    %31 = vector.shape_cast %30 : vector<8x8x16xbf16> to vector<64x16xbf16>
    %c1_25 = arith.constant 1 : index
    %c1_26 = arith.constant 1 : index
    %c0_27 = arith.constant 0 : index
    %c0_28 = arith.constant 0 : index
    %32 = vector.load %arg4[%c1_25, %c1_26, %c0_27, %c0_28] : memref<3x3x16x32xbf16, #tpu.memory_space<vmem>>, vector<1x1x16x32xbf16>
    %33 = vector.shape_cast %32 : vector<1x1x16x32xbf16> to vector<16x32xbf16>
    %cst_29 = arith.constant dense<0.000000e+00> : vector<64x32xf32>
    %34 = tpu.matmul %31, %33, %cst_29 {dimension_numbers = #tpu.dot_dimension_numbers<[1], [0], [0], [1], [0, 0, 1, 1], [], []>} : vector<64x16xbf16>, vector<16x32xbf16>, vector<64x32xf32> -> vector<64x32xf32>
    %35 = arith.addf %29, %34 : vector<64x32xf32>
    %36 = vector.extract_strided_slice %4 {offsets = [1, 2, 0], sizes = [8, 8, 16], strides = [1, 1, 1]} : vector<10x10x16xbf16> to vector<8x8x16xbf16>
    %37 = vector.shape_cast %36 : vector<8x8x16xbf16> to vector<64x16xbf16>
    %c1_30 = arith.constant 1 : index
    %c2_31 = arith.constant 2 : index
    %c0_32 = arith.constant 0 : index
    %c0_33 = arith.constant 0 : index
    %38 = vector.load %arg4[%c1_30, %c2_31, %c0_32, %c0_33] : memref<3x3x16x32xbf16, #tpu.memory_space<vmem>>, vector<1x1x16x32xbf16>
    %39 = vector.shape_cast %38 : vector<1x1x16x32xbf16> to vector<16x32xbf16>
    %cst_34 = arith.constant dense<0.000000e+00> : vector<64x32xf32>
    %40 = tpu.matmul %37, %39, %cst_34 {dimension_numbers = #tpu.dot_dimension_numbers<[1], [0], [0], [1], [0, 0, 1, 1], [], []>} : vector<64x16xbf16>, vector<16x32xbf16>, vector<64x32xf32> -> vector<64x32xf32>
    %41 = arith.addf %35, %40 : vector<64x32xf32>
    %42 = vector.extract_strided_slice %4 {offsets = [2, 0, 0], sizes = [8, 8, 16], strides = [1, 1, 1]} : vector<10x10x16xbf16> to vector<8x8x16xbf16>
    %43 = vector.shape_cast %42 : vector<8x8x16xbf16> to vector<64x16xbf16>
    %c2_35 = arith.constant 2 : index
    %c0_36 = arith.constant 0 : index
    %c0_37 = arith.constant 0 : index
    %c0_38 = arith.constant 0 : index
    %44 = vector.load %arg4[%c2_35, %c0_36, %c0_37, %c0_38] : memref<3x3x16x32xbf16, #tpu.memory_space<vmem>>, vector<1x1x16x32xbf16>
    %45 = vector.shape_cast %44 : vector<1x1x16x32xbf16> to vector<16x32xbf16>
    %cst_39 = arith.constant dense<0.000000e+00> : vector<64x32xf32>
    %46 = tpu.matmul %43, %45, %cst_39 {dimension_numbers = #tpu.dot_dimension_numbers<[1], [0], [0], [1], [0, 0, 1, 1], [], []>} : vector<64x16xbf16>, vector<16x32xbf16>, vector<64x32xf32> -> vector<64x32xf32>
    %47 = arith.addf %41, %46 : vector<64x32xf32>
    %48 = vector.extract_strided_slice %4 {offsets = [2, 1, 0], sizes = [8, 8, 16], strides = [1, 1, 1]} : vector<10x10x16xbf16> to vector<8x8x16xbf16>
    %49 = vector.shape_cast %48 : vector<8x8x16xbf16> to vector<64x16xbf16>
    %c2_40 = arith.constant 2 : index
    %c1_41 = arith.constant 1 : index
    %c0_42 = arith.constant 0 : index
    %c0_43 = arith.constant 0 : index
    %50 = vector.load %arg4[%c2_40, %c1_41, %c0_42, %c0_43] : memref<3x3x16x32xbf16, #tpu.memory_space<vmem>>, vector<1x1x16x32xbf16>
    %51 = vector.shape_cast %50 : vector<1x1x16x32xbf16> to vector<16x32xbf16>
    %cst_44 = arith.constant dense<0.000000e+00> : vector<64x32xf32>
    %52 = tpu.matmul %49, %51, %cst_44 {dimension_numbers = #tpu.dot_dimension_numbers<[1], [0], [0], [1], [0, 0, 1, 1], [], []>} : vector<64x16xbf16>, vector<16x32xbf16>, vector<64x32xf32> -> vector<64x32xf32>
    %53 = arith.addf %47, %52 : vector<64x32xf32>
    %54 = vector.extract_strided_slice %4 {offsets = [2, 2, 0], sizes = [8, 8, 16], strides = [1, 1, 1]} : vector<10x10x16xbf16> to vector<8x8x16xbf16>
    %55 = vector.shape_cast %54 : vector<8x8x16xbf16> to vector<64x16xbf16>
    %c2_45 = arith.constant 2 : index
    %c2_46 = arith.constant 2 : index
    %c0_47 = arith.constant 0 : index
    %c0_48 = arith.constant 0 : index
    %56 = vector.load %arg4[%c2_45, %c2_46, %c0_47, %c0_48] : memref<3x3x16x32xbf16, #tpu.memory_space<vmem>>, vector<1x1x16x32xbf16>
    %57 = vector.shape_cast %56 : vector<1x1x16x32xbf16> to vector<16x32xbf16>
    %cst_49 = arith.constant dense<0.000000e+00> : vector<64x32xf32>
    %58 = tpu.matmul %55, %57, %cst_49 {dimension_numbers = #tpu.dot_dimension_numbers<[1], [0], [0], [1], [0, 0, 1, 1], [], []>} : vector<64x16xbf16>, vector<16x32xbf16>, vector<64x32xf32> -> vector<64x32xf32>
    %59 = arith.addf %53, %58 : vector<64x32xf32>
    %c0_50 = arith.constant 0 : index
    %c0_51 = arith.constant 0 : index
    %60 = vector.load %arg5[%c0_50, %c0_51] : memref<1x32xf32, #tpu.memory_space<vmem>>, vector<1x32xf32>
    %61 = vector.broadcast %60 : vector<1x32xf32> to vector<64x32xf32>
    %62 = arith.addf %59, %61 : vector<64x32xf32>
    %cst_52 = arith.constant 0.000000e+00 : f32
    %63 = vector.broadcast %cst_52 : f32 to vector<64x32xf32>
    %64 = arith.maximumf %62, %63 : vector<64x32xf32>
    %65 = arith.truncf %64 : vector<64x32xf32> to vector<64x32xbf16>
    %c0_53 = arith.constant 0 : index
    %c0_54 = arith.constant 0 : index
    %c0_55 = arith.constant 0 : index
    %66 = vector.load %arg6[%c0_53, %c0_54, %c0_55] : memref<1x64x32xbf16, #tpu.memory_space<vmem>>, vector<1x64x32xbf16>
    %67 = vector.shape_cast %66 : vector<1x64x32xbf16> to vector<64x32xbf16>
    %68 = vector.shape_cast %65 : vector<64x32xbf16> to vector<1x64x32xbf16>
    tpu.vector_store %arg6[%c0_53, %c0_54, %c0_55], %68 {strides = array<i32>} : memref<1x64x32xbf16, #tpu.memory_space<vmem>>, vector<1x64x32xbf16>,
    return
  }
  func.func @transform_0(%arg0: i32, %arg1: i32) -> (i32, i32, i32, i32) {
    %c0_i32 = arith.constant 0 : i32
    %c0_i32_0 = arith.constant 0 : i32
    %c0_i32_1 = arith.constant 0 : i32
    return %arg0, %arg1, %c0_i32, %c0_i32_0 : i32, i32, i32, i32
  }
  func.func @transform_1(%arg0: i32, %arg1: i32) -> (i32, i32, i32, i32) {
    %c1_i32 = arith.constant 1 : i32
    %0 = arith.muli %arg1, %c1_i32 : i32
    %c1_i32_0 = arith.constant 1 : i32
    %1 = arith.addi %0, %c1_i32_0 : i32
    %c0_i32 = arith.constant 0 : i32
    %c0_i32_1 = arith.constant 0 : i32
    %c0_i32_2 = arith.constant 0 : i32
    return %arg0, %1, %c0_i32, %c0_i32_1 : i32, i32, i32, i32
  }
  func.func @transform_2(%arg0: i32, %arg1: i32) -> (i32, i32, i32, i32) {
    %c0_i32 = arith.constant 0 : i32
    %c0_i32_0 = arith.constant 0 : i32
    %c0_i32_1 = arith.constant 0 : i32
    %c0_i32_2 = arith.constant 0 : i32
    %c0_i32_3 = arith.constant 0 : i32
    return %c0_i32, %c0_i32_0, %c0_i32_1, %c0_i32_2 : i32, i32, i32, i32
  }
  func.func @transform_3(%arg0: i32, %arg1: i32) -> (i32, i32) {
    %c0_i32 = arith.constant 0 : i32
    %c0_i32_0 = arith.constant 0 : i32
    %c0_i32_1 = arith.constant 0 : i32
    return %c0_i32, %c0_i32_0 : i32, i32
  }
  func.func @transform_4(%arg0: i32, %arg1: i32) -> (i32, i32, i32) {
    %c0_i32 = arith.constant 0 : i32
    %c0_i32_0 = arith.constant 0 : i32
    return %arg0, %arg1, %c0_i32 : i32, i32, i32
  }
}

module attributes {stable_mosaic.version = 11 : i64} {
  func.func @_gather_object_kernel(%arg0: i32, %arg1: i32, %arg2: memref<1x32x128xf32, #tpu.memory_space<vmem>>, %arg3: memref<1x32x32xbf16, #tpu.memory_space<vmem>>, %arg4: memref<32x16xbf16, #tpu.memory_space<vmem>>, %arg5: memref<16x1xf32, #tpu.memory_space<vmem>>, %arg6: memref<16x16xbf16, #tpu.memory_space<vmem>>, %arg7: memref<16x1xf32, #tpu.memory_space<vmem>>, %arg8: memref<32x16xbf16, #tpu.memory_space<vmem>>, %arg9: memref<16x1xf32, #tpu.memory_space<vmem>>, %arg10: memref<1x16x4xbf16, #tpu.memory_space<vmem>>, %arg11: memref<1x16x4xbf16, #tpu.memory_space<vmem>>, %arg12: memref<1x4xf32, #tpu.memory_space<vmem>>, %arg13: memref<1x4xf32, #tpu.memory_space<vmem>>, %arg14: memref<32x4xf32, #tpu.memory_space<vmem>>) attributes {dimension_semantics = [#tpu.dimension_semantics<parallel>, #tpu.dimension_semantics<arbitrary>], iteration_bounds = array<i64: 2, 2>, scalar_prefetch = 0 : i64, scratch_operands = 3 : i64, tpu.core_type = #tpu.core_type<tc>, window_params = [{transform_indices = @transform_0, window_bounds = array<i64: 1, 32, 128>}, {transform_indices = @transform_1, window_bounds = array<i64: 1, 32, 32>}, {pipeline_mode = #tpu.pipeline_mode<synchronous>, transform_indices = @transform_2, window_bounds = array<i64: 32, 16>}, {pipeline_mode = #tpu.pipeline_mode<synchronous>, transform_indices = @transform_3, window_bounds = array<i64: 16, 1>}, {pipeline_mode = #tpu.pipeline_mode<synchronous>, transform_indices = @transform_4, window_bounds = array<i64: 16, 16>}, {pipeline_mode = #tpu.pipeline_mode<synchronous>, transform_indices = @transform_5, window_bounds = array<i64: 16, 1>}, {pipeline_mode = #tpu.pipeline_mode<synchronous>, transform_indices = @transform_6, window_bounds = array<i64: 32, 16>}, {pipeline_mode = #tpu.pipeline_mode<synchronous>, transform_indices = @transform_7, window_bounds = array<i64: 16, 1>}, {transform_indices = @transform_8, window_bounds = array<i64: 1, 16, 4>}, {transform_indices = @transform_9, window_bounds = array<i64: 1, 16, 4>}]} {
    %c0_i32 = arith.constant 0 : i32
    %0 = arith.cmpi eq, %arg1, %c0_i32 : i32
    %1 = arith.extui %0 : i1 to i32
    %c0_i32_0 = arith.constant 0 : i32
    %2 = arith.cmpi ne, %1, %c0_i32_0 : i32
    scf.if %2 {
      %cst_24 = arith.constant 0xFF800000 : f32
      %44 = vector.broadcast %cst_24 : f32 to vector<1x4xf32>
      %c0_25 = arith.constant 0 : index
      %c0_26 = arith.constant 0 : index
      %45 = vector.load %arg12[%c0_25, %c0_26] : memref<1x4xf32, #tpu.memory_space<vmem>>, vector<1x4xf32>
      tpu.vector_store %arg12[%c0_25, %c0_26], %44 {strides = array<i32>} : memref<1x4xf32, #tpu.memory_space<vmem>>, vector<1x4xf32>,
      %cst_27 = arith.constant 0.000000e+00 : f32
      %46 = vector.broadcast %cst_27 : f32 to vector<1x4xf32>
      %c0_28 = arith.constant 0 : index
      %c0_29 = arith.constant 0 : index
      %47 = vector.load %arg13[%c0_28, %c0_29] : memref<1x4xf32, #tpu.memory_space<vmem>>, vector<1x4xf32>
      tpu.vector_store %arg13[%c0_28, %c0_29], %46 {strides = array<i32>} : memref<1x4xf32, #tpu.memory_space<vmem>>, vector<1x4xf32>,
      %cst_30 = arith.constant 0.000000e+00 : f32
      %48 = vector.broadcast %cst_30 : f32 to vector<32x4xf32>
      %c0_31 = arith.constant 0 : index
      %c0_32 = arith.constant 0 : index
      %49 = vector.load %arg14[%c0_31, %c0_32] : memref<32x4xf32, #tpu.memory_space<vmem>>, vector<32x4xf32>
      tpu.vector_store %arg14[%c0_31, %c0_32], %48 {strides = array<i32>} : memref<32x4xf32, #tpu.memory_space<vmem>>, vector<32x4xf32>,
    } else {
    }
    %c0 = arith.constant 0 : index
    %c0_1 = arith.constant 0 : index
    %c0_2 = arith.constant 0 : index
    %3 = vector.load %arg2[%c0, %c0_1, %c0_2] : memref<1x32x128xf32, #tpu.memory_space<vmem>>, vector<1x32x4xf32>
    %4 = vector.shape_cast %3 : vector<1x32x4xf32> to vector<32x4xf32>
    %c32_i32 = arith.constant 32 : i32
    %5 = arith.muli %arg1, %c32_i32 : i32
    %6 = tpu.iota {dimensions = array<i32: 0>} : vector<32x1xi32>
    %7 = vector.broadcast %5 : i32 to vector<32x1xi32>
    %8 = arith.addi %7, %6 : vector<32x1xi32>
    %c64_i32 = arith.constant 64 : i32
    %9 = vector.broadcast %c64_i32 : i32 to vector<32x1xi32>
    %10 = arith.cmpi slt, %8, %9 : vector<32x1xi32>
    %cst = arith.constant 0xFF800000 : f32
    %11 = vector.shape_cast %10 : vector<32x1xi1> to vector<32x1xi1>
    %12 = vector.broadcast %11 : vector<32x1xi1> to vector<32x4xi1>
    %13 = vector.broadcast %cst : f32 to vector<32x4xf32>
    %14 = arith.select %12, %4, %13 : vector<32x4xi1>, vector<32x4xf32>
    %c0_3 = arith.constant 0 : index
    %c0_4 = arith.constant 0 : index
    %15 = vector.load %arg12[%c0_3, %c0_4] : memref<1x4xf32, #tpu.memory_space<vmem>>, vector<1x4xf32>
    %cst_5 = arith.constant dense<0xFF800000> : vector<4xf32>
    %16 = vector.multi_reduction <maximumf>, %14, %cst_5 [0] : vector<32x4xf32> to vector<4xf32>
    %17 = vector.shape_cast %16 : vector<4xf32> to vector<1x4xf32>
    %18 = arith.maximumf %15, %17 : vector<1x4xf32>
    %c0_6 = arith.constant 0 : index
    %c0_7 = arith.constant 0 : index
    %19 = vector.load %arg12[%c0_6, %c0_7] : memref<1x4xf32, #tpu.memory_space<vmem>>, vector<1x4xf32>
    %20 = arith.subf %19, %18 : vector<1x4xf32>
    %21 = math.exp %20 : vector<1x4xf32>
    %22 = vector.broadcast %18 : vector<1x4xf32> to vector<32x4xf32>
    %23 = arith.subf %14, %22 : vector<32x4xf32>
    %24 = math.exp %23 : vector<32x4xf32>
    %c0_8 = arith.constant 0 : index
    %c0_9 = arith.constant 0 : index
    %25 = vector.load %arg13[%c0_8, %c0_9] : memref<1x4xf32, #tpu.memory_space<vmem>>, vector<1x4xf32>
    %26 = arith.mulf %21, %25 : vector<1x4xf32>
    %cst_10 = arith.constant dense<0.000000e+00> : vector<4xf32>
    %27 = vector.multi_reduction <add>, %24, %cst_10 [0] : vector<32x4xf32> to vector<4xf32>
    %28 = vector.shape_cast %27 : vector<4xf32> to vector<1x4xf32>
    %29 = arith.addf %26, %28 : vector<1x4xf32>
    %c0_11 = arith.constant 0 : index
    %c0_12 = arith.constant 0 : index
    %30 = vector.load %arg13[%c0_11, %c0_12] : memref<1x4xf32, #tpu.memory_space<vmem>>, vector<1x4xf32>
    tpu.vector_store %arg13[%c0_11, %c0_12], %29 {strides = array<i32>} : memref<1x4xf32, #tpu.memory_space<vmem>>, vector<1x4xf32>,
    %c0_13 = arith.constant 0 : index
    %c0_14 = arith.constant 0 : index
    %31 = vector.load %arg14[%c0_13, %c0_14] : memref<32x4xf32, #tpu.memory_space<vmem>>, vector<32x4xf32>
    %32 = vector.broadcast %21 : vector<1x4xf32> to vector<32x4xf32>
    %33 = arith.mulf %32, %31 : vector<32x4xf32>
    %c0_15 = arith.constant 0 : index
    %c0_16 = arith.constant 0 : index
    %c0_17 = arith.constant 0 : index
    %34 = vector.load %arg3[%c0_15, %c0_16, %c0_17] : memref<1x32x32xbf16, #tpu.memory_space<vmem>>, vector<1x32x32xbf16>
    %35 = vector.shape_cast %34 : vector<1x32x32xbf16> to vector<32x32xbf16>
    %36 = arith.truncf %24 : vector<32x4xf32> to vector<32x4xbf16>
    %cst_18 = arith.constant dense<0.000000e+00> : vector<32x4xf32>
    %37 = tpu.matmul %35, %36, %cst_18 {dimension_numbers = #tpu.dot_dimension_numbers<[0], [0], [1], [1], [0, 1, 1, 1], [], []>} : vector<32x32xbf16>, vector<32x4xbf16>, vector<32x4xf32> -> vector<32x4xf32>
    %38 = arith.addf %33, %37 : vector<32x4xf32>
    %c0_19 = arith.constant 0 : index
    %c0_20 = arith.constant 0 : index
    %39 = vector.load %arg14[%c0_19, %c0_20] : memref<32x4xf32, #tpu.memory_space<vmem>>, vector<32x4xf32>
    tpu.vector_store %arg14[%c0_19, %c0_20], %38 {strides = array<i32>} : memref<32x4xf32, #tpu.memory_space<vmem>>, vector<32x4xf32>,
    %c0_21 = arith.constant 0 : index
    %c0_22 = arith.constant 0 : index
    %40 = vector.load %arg12[%c0_21, %c0_22] : memref<1x4xf32, #tpu.memory_space<vmem>>, vector<1x4xf32>
    tpu.vector_store %arg12[%c0_21, %c0_22], %18 {strides = array<i32>} : memref<1x4xf32, #tpu.memory_space<vmem>>, vector<1x4xf32>,
    %c1_i32 = arith.constant 1 : i32
    %41 = arith.cmpi eq, %arg1, %c1_i32 : i32
    %42 = arith.extui %41 : i1 to i32
    %c0_i32_23 = arith.constant 0 : i32
    %43 = arith.cmpi ne, %42, %c0_i32_23 : i32
    scf.if %43 {
      %c0_24 = arith.constant 0 : index
      %c0_25 = arith.constant 0 : index
      %44 = vector.load %arg14[%c0_24, %c0_25] : memref<32x4xf32, #tpu.memory_space<vmem>>, vector<32x4xf32>
      %c0_26 = arith.constant 0 : index
      %c0_27 = arith.constant 0 : index
      %45 = vector.load %arg13[%c0_26, %c0_27] : memref<1x4xf32, #tpu.memory_space<vmem>>, vector<1x4xf32>
      %46 = tpu.reciprocal %45 {approx = true} : vector<1x4xf32> -> vector<1x4xf32>
      %47 = vector.broadcast %46 : vector<1x4xf32> to vector<32x4xf32>
      %48 = arith.mulf %44, %47 : vector<32x4xf32>
      %49 = arith.truncf %48 : vector<32x4xf32> to vector<32x4xbf16>
      %c0_28 = arith.constant 0 : index
      %c0_29 = arith.constant 0 : index
      %50 = vector.load %arg4[%c0_28, %c0_29] : memref<32x16xbf16, #tpu.memory_space<vmem>>, vector<32x16xbf16>
      %cst_30 = arith.constant dense<0.000000e+00> : vector<16x4xf32>
      %51 = tpu.matmul %50, %49, %cst_30 {dimension_numbers = #tpu.dot_dimension_numbers<[0], [0], [1], [1], [0, 1, 1, 1], [], []>} : vector<32x16xbf16>, vector<32x4xbf16>, vector<16x4xf32> -> vector<16x4xf32>
      %c0_31 = arith.constant 0 : index
      %c0_32 = arith.constant 0 : index
      %52 = vector.load %arg5[%c0_31, %c0_32] : memref<16x1xf32, #tpu.memory_space<vmem>>, vector<16x1xf32>
      %53 = vector.broadcast %52 : vector<16x1xf32> to vector<16x4xf32>
      %54 = arith.addf %51, %53 : vector<16x4xf32>
      %cst_33 = arith.constant 0.000000e+00 : f32
      %55 = vector.broadcast %cst_33 : f32 to vector<16x4xf32>
      %56 = arith.maximumf %54, %55 : vector<16x4xf32>
      %c0_34 = arith.constant 0 : index
      %c0_35 = arith.constant 0 : index
      %57 = vector.load %arg6[%c0_34, %c0_35] : memref<16x16xbf16, #tpu.memory_space<vmem>>, vector<16x16xbf16>
      %58 = arith.truncf %56 : vector<16x4xf32> to vector<16x4xbf16>
      %cst_36 = arith.constant dense<0.000000e+00> : vector<16x4xf32>
      %59 = tpu.matmul %57, %58, %cst_36 {dimension_numbers = #tpu.dot_dimension_numbers<[0], [0], [1], [1], [0, 1, 1, 1], [], []>} : vector<16x16xbf16>, vector<16x4xbf16>, vector<16x4xf32> -> vector<16x4xf32>
      %c0_37 = arith.constant 0 : index
      %c0_38 = arith.constant 0 : index
      %60 = vector.load %arg7[%c0_37, %c0_38] : memref<16x1xf32, #tpu.memory_space<vmem>>, vector<16x1xf32>
      %61 = vector.broadcast %60 : vector<16x1xf32> to vector<16x4xf32>
      %62 = arith.addf %59, %61 : vector<16x4xf32>
      %cst_39 = arith.constant 0.000000e+00 : f32
      %63 = vector.broadcast %cst_39 : f32 to vector<16x4xf32>
      %64 = arith.maximumf %62, %63 : vector<16x4xf32>
      %c0_40 = arith.constant 0 : index
      %c0_41 = arith.constant 0 : index
      %65 = vector.load %arg8[%c0_40, %c0_41] : memref<32x16xbf16, #tpu.memory_space<vmem>>, vector<32x16xbf16>
      %cst_42 = arith.constant dense<0.000000e+00> : vector<16x4xf32>
      %66 = tpu.matmul %65, %49, %cst_42 {dimension_numbers = #tpu.dot_dimension_numbers<[0], [0], [1], [1], [0, 1, 1, 1], [], []>} : vector<32x16xbf16>, vector<32x4xbf16>, vector<16x4xf32> -> vector<16x4xf32>
      %c0_43 = arith.constant 0 : index
      %c0_44 = arith.constant 0 : index
      %67 = vector.load %arg9[%c0_43, %c0_44] : memref<16x1xf32, #tpu.memory_space<vmem>>, vector<16x1xf32>
      %68 = vector.broadcast %67 : vector<16x1xf32> to vector<16x4xf32>
      %69 = arith.addf %66, %68 : vector<16x4xf32>
      %cst_45 = arith.constant 0.000000e+00 : f32
      %70 = vector.broadcast %cst_45 : f32 to vector<16x4xf32>
      %71 = arith.maximumf %69, %70 : vector<16x4xf32>
      %72 = arith.truncf %64 : vector<16x4xf32> to vector<16x4xbf16>
      %c0_46 = arith.constant 0 : index
      %c0_47 = arith.constant 0 : index
      %c0_48 = arith.constant 0 : index
      %73 = vector.load %arg10[%c0_46, %c0_47, %c0_48] : memref<1x16x4xbf16, #tpu.memory_space<vmem>>, vector<1x16x4xbf16>
      %74 = vector.shape_cast %73 : vector<1x16x4xbf16> to vector<16x4xbf16>
      %75 = vector.shape_cast %72 : vector<16x4xbf16> to vector<1x16x4xbf16>
      tpu.vector_store %arg10[%c0_46, %c0_47, %c0_48], %75 {strides = array<i32>} : memref<1x16x4xbf16, #tpu.memory_space<vmem>>, vector<1x16x4xbf16>,
      %76 = arith.truncf %71 : vector<16x4xf32> to vector<16x4xbf16>
      %c0_49 = arith.constant 0 : index
      %c0_50 = arith.constant 0 : index
      %c0_51 = arith.constant 0 : index
      %77 = vector.load %arg11[%c0_49, %c0_50, %c0_51] : memref<1x16x4xbf16, #tpu.memory_space<vmem>>, vector<1x16x4xbf16>
      %78 = vector.shape_cast %77 : vector<1x16x4xbf16> to vector<16x4xbf16>
      %79 = vector.shape_cast %76 : vector<16x4xbf16> to vector<1x16x4xbf16>
      tpu.vector_store %arg11[%c0_49, %c0_50, %c0_51], %79 {strides = array<i32>} : memref<1x16x4xbf16, #tpu.memory_space<vmem>>, vector<1x16x4xbf16>,
    } else {
    }
    return
  }
  func.func @transform_0(%arg0: i32, %arg1: i32) -> (i32, i32, i32) {
    %c0_i32 = arith.constant 0 : i32
    %c0_i32_0 = arith.constant 0 : i32
    return %arg0, %arg1, %c0_i32 : i32, i32, i32
  }
  func.func @transform_1(%arg0: i32, %arg1: i32) -> (i32, i32, i32) {
    %c0_i32 = arith.constant 0 : i32
    %c0_i32_0 = arith.constant 0 : i32
    return %arg0, %arg1, %c0_i32 : i32, i32, i32
  }
  func.func @transform_2(%arg0: i32, %arg1: i32) -> (i32, i32) {
    %c0_i32 = arith.constant 0 : i32
    %c0_i32_0 = arith.constant 0 : i32
    %c0_i32_1 = arith.constant 0 : i32
    return %c0_i32, %c0_i32_0 : i32, i32
  }
  func.func @transform_3(%arg0: i32, %arg1: i32) -> (i32, i32) {
    %c0_i32 = arith.constant 0 : i32
    %c0_i32_0 = arith.constant 0 : i32
    %c0_i32_1 = arith.constant 0 : i32
    return %c0_i32, %c0_i32_0 : i32, i32
  }
  func.func @transform_4(%arg0: i32, %arg1: i32) -> (i32, i32) {
    %c0_i32 = arith.constant 0 : i32
    %c0_i32_0 = arith.constant 0 : i32
    %c0_i32_1 = arith.constant 0 : i32
    return %c0_i32, %c0_i32_0 : i32, i32
  }
  func.func @transform_5(%arg0: i32, %arg1: i32) -> (i32, i32) {
    %c0_i32 = arith.constant 0 : i32
    %c0_i32_0 = arith.constant 0 : i32
    %c0_i32_1 = arith.constant 0 : i32
    return %c0_i32, %c0_i32_0 : i32, i32
  }
  func.func @transform_6(%arg0: i32, %arg1: i32) -> (i32, i32) {
    %c0_i32 = arith.constant 0 : i32
    %c0_i32_0 = arith.constant 0 : i32
    %c0_i32_1 = arith.constant 0 : i32
    return %c0_i32, %c0_i32_0 : i32, i32
  }
  func.func @transform_7(%arg0: i32, %arg1: i32) -> (i32, i32) {
    %c0_i32 = arith.constant 0 : i32
    %c0_i32_0 = arith.constant 0 : i32
    %c0_i32_1 = arith.constant 0 : i32
    return %c0_i32, %c0_i32_0 : i32, i32
  }
  func.func @transform_8(%arg0: i32, %arg1: i32) -> (i32, i32, i32) {
    %c0_i32 = arith.constant 0 : i32
    %c0_i32_0 = arith.constant 0 : i32
    %c0_i32_1 = arith.constant 0 : i32
    return %arg0, %c0_i32, %c0_i32_0 : i32, i32, i32
  }
  func.func @transform_9(%arg0: i32, %arg1: i32) -> (i32, i32, i32) {
    %c0_i32 = arith.constant 0 : i32
    %c0_i32_0 = arith.constant 0 : i32
    %c0_i32_1 = arith.constant 0 : i32
    return %arg0, %c0_i32, %c0_i32_0 : i32, i32, i32
  }
}

module attributes {stable_mosaic.version = 11 : i64} {
  func.func @_pixel_path_kernel(%arg0: i32, %arg1: i32, %arg2: memref<1x32x32xbf16, #tpu.memory_space<vmem>>, %arg3: memref<1x16x4xbf16, #tpu.memory_space<vmem>>, %arg4: memref<1x16x4xbf16, #tpu.memory_space<vmem>>, %arg5: memref<32x16xbf16, #tpu.memory_space<vmem>>, %arg6: memref<1x16xf32, #tpu.memory_space<vmem>>, %arg7: memref<16x16xbf16, #tpu.memory_space<vmem>>, %arg8: memref<1x16xf32, #tpu.memory_space<vmem>>, %arg9: memref<16x32xbf16, #tpu.memory_space<vmem>>, %arg10: memref<1x32xf32, #tpu.memory_space<vmem>>, %arg11: memref<32x32xbf16, #tpu.memory_space<vmem>>, %arg12: memref<32x32xbf16, #tpu.memory_space<vmem>>, %arg13: memref<1x32xf32, #tpu.memory_space<vmem>>, %arg14: memref<32x128xbf16, #tpu.memory_space<vmem>>, %arg15: memref<1x128xf32, #tpu.memory_space<vmem>>, %arg16: memref<1x32x128xf32, #tpu.memory_space<vmem>>) attributes {dimension_semantics = [#tpu.dimension_semantics<parallel>, #tpu.dimension_semantics<parallel>], iteration_bounds = array<i64: 2, 2>, scalar_prefetch = 0 : i64, scratch_operands = 0 : i64, tpu.core_type = #tpu.core_type<tc>, window_params = [{transform_indices = @transform_0, window_bounds = array<i64: 1, 32, 32>}, {transform_indices = @transform_1, window_bounds = array<i64: 1, 16, 4>}, {transform_indices = @transform_2, window_bounds = array<i64: 1, 16, 4>}, {pipeline_mode = #tpu.pipeline_mode<synchronous>, transform_indices = @transform_3, window_bounds = array<i64: 32, 16>}, {pipeline_mode = #tpu.pipeline_mode<synchronous>, transform_indices = @transform_4, window_bounds = array<i64: 1, 16>}, {pipeline_mode = #tpu.pipeline_mode<synchronous>, transform_indices = @transform_5, window_bounds = array<i64: 16, 16>}, {pipeline_mode = #tpu.pipeline_mode<synchronous>, transform_indices = @transform_6, window_bounds = array<i64: 1, 16>}, {pipeline_mode = #tpu.pipeline_mode<synchronous>, transform_indices = @transform_7, window_bounds = array<i64: 16, 32>}, {pipeline_mode = #tpu.pipeline_mode<synchronous>, transform_indices = @transform_8, window_bounds = array<i64: 1, 32>}, {pipeline_mode = #tpu.pipeline_mode<synchronous>, transform_indices = @transform_9, window_bounds = array<i64: 32, 32>}, {pipeline_mode = #tpu.pipeline_mode<synchronous>, transform_indices = @transform_10, window_bounds = array<i64: 32, 32>}, {pipeline_mode = #tpu.pipeline_mode<synchronous>, transform_indices = @transform_11, window_bounds = array<i64: 1, 32>}, {pipeline_mode = #tpu.pipeline_mode<synchronous>, transform_indices = @transform_12, window_bounds = array<i64: 32, 128>}, {pipeline_mode = #tpu.pipeline_mode<synchronous>, transform_indices = @transform_13, window_bounds = array<i64: 1, 128>}, {transform_indices = @transform_14, window_bounds = array<i64: 1, 32, 128>}]} {
    %c0 = arith.constant 0 : index
    %c0_0 = arith.constant 0 : index
    %c0_1 = arith.constant 0 : index
    %0 = vector.load %arg2[%c0, %c0_0, %c0_1] : memref<1x32x32xbf16, #tpu.memory_space<vmem>>, vector<1x32x32xbf16>
    %1 = vector.shape_cast %0 : vector<1x32x32xbf16> to vector<32x32xbf16>
    %c0_2 = arith.constant 0 : index
    %c0_3 = arith.constant 0 : index
    %2 = vector.load %arg5[%c0_2, %c0_3] : memref<32x16xbf16, #tpu.memory_space<vmem>>, vector<32x16xbf16>
    %cst = arith.constant dense<0.000000e+00> : vector<32x16xf32>
    %3 = tpu.matmul %1, %2, %cst {dimension_numbers = #tpu.dot_dimension_numbers<[1], [0], [0], [1], [0, 0, 1, 1], [], []>} : vector<32x32xbf16>, vector<32x16xbf16>, vector<32x16xf32> -> vector<32x16xf32>
    %c0_4 = arith.constant 0 : index
    %c0_5 = arith.constant 0 : index
    %4 = vector.load %arg6[%c0_4, %c0_5] : memref<1x16xf32, #tpu.memory_space<vmem>>, vector<1x16xf32>
    %5 = vector.broadcast %4 : vector<1x16xf32> to vector<32x16xf32>
    %6 = arith.addf %3, %5 : vector<32x16xf32>
    %cst_6 = arith.constant 0.000000e+00 : f32
    %7 = vector.broadcast %cst_6 : f32 to vector<32x16xf32>
    %8 = arith.maximumf %6, %7 : vector<32x16xf32>
    %9 = arith.truncf %8 : vector<32x16xf32> to vector<32x16xbf16>
    %c0_7 = arith.constant 0 : index
    %c0_8 = arith.constant 0 : index
    %10 = vector.load %arg7[%c0_7, %c0_8] : memref<16x16xbf16, #tpu.memory_space<vmem>>, vector<16x16xbf16>
    %cst_9 = arith.constant dense<0.000000e+00> : vector<32x16xf32>
    %11 = tpu.matmul %9, %10, %cst_9 {dimension_numbers = #tpu.dot_dimension_numbers<[1], [0], [0], [1], [0, 0, 1, 1], [], []>} : vector<32x16xbf16>, vector<16x16xbf16>, vector<32x16xf32> -> vector<32x16xf32>
    %c0_10 = arith.constant 0 : index
    %c0_11 = arith.constant 0 : index
    %12 = vector.load %arg8[%c0_10, %c0_11] : memref<1x16xf32, #tpu.memory_space<vmem>>, vector<1x16xf32>
    %13 = vector.broadcast %12 : vector<1x16xf32> to vector<32x16xf32>
    %14 = arith.addf %11, %13 : vector<32x16xf32>
    %cst_12 = arith.constant 0.000000e+00 : f32
    %15 = vector.broadcast %cst_12 : f32 to vector<32x16xf32>
    %16 = arith.maximumf %14, %15 : vector<32x16xf32>
    %17 = arith.truncf %16 : vector<32x16xf32> to vector<32x16xbf16>
    %c0_13 = arith.constant 0 : index
    %c0_14 = arith.constant 0 : index
    %c0_15 = arith.constant 0 : index
    %18 = vector.load %arg3[%c0_13, %c0_14, %c0_15] : memref<1x16x4xbf16, #tpu.memory_space<vmem>>, vector<1x16x4xbf16>
    %19 = vector.shape_cast %18 : vector<1x16x4xbf16> to vector<16x4xbf16>
    %cst_16 = arith.constant dense<0.000000e+00> : vector<32x4xf32>
    %20 = tpu.matmul %17, %19, %cst_16 {dimension_numbers = #tpu.dot_dimension_numbers<[1], [0], [0], [1], [0, 0, 1, 1], [], []>} : vector<32x16xbf16>, vector<16x4xbf16>, vector<32x4xf32> -> vector<32x4xf32>
    %cst_17 = arith.constant dense<0xFF800000> : vector<32xf32>
    %21 = vector.multi_reduction <maximumf>, %20, %cst_17 [1] : vector<32x4xf32> to vector<32xf32>
    %22 = vector.shape_cast %21 : vector<32xf32> to vector<32x1xf32>
    %23 = vector.broadcast %22 : vector<32x1xf32> to vector<32x4xf32>
    %24 = arith.subf %20, %23 : vector<32x4xf32>
    %25 = math.exp %24 : vector<32x4xf32>
    %cst_18 = arith.constant dense<0.000000e+00> : vector<32xf32>
    %26 = vector.multi_reduction <add>, %25, %cst_18 [1] : vector<32x4xf32> to vector<32xf32>
    %27 = vector.shape_cast %26 : vector<32xf32> to vector<32x1xf32>
    %28 = vector.broadcast %27 : vector<32x1xf32> to vector<32x4xf32>
    %29 = arith.divf %25, %28 : vector<32x4xf32>
    %30 = arith.truncf %29 : vector<32x4xf32> to vector<32x4xbf16>
    %c0_19 = arith.constant 0 : index
    %c0_20 = arith.constant 0 : index
    %c0_21 = arith.constant 0 : index
    %31 = vector.load %arg4[%c0_19, %c0_20, %c0_21] : memref<1x16x4xbf16, #tpu.memory_space<vmem>>, vector<1x16x4xbf16>
    %32 = vector.shape_cast %31 : vector<1x16x4xbf16> to vector<16x4xbf16>
    %cst_22 = arith.constant dense<0.000000e+00> : vector<32x16xf32>
    %33 = tpu.matmul %30, %32, %cst_22 {dimension_numbers = #tpu.dot_dimension_numbers<[1], [1], [0], [0], [0, 0, 1, 0], [], []>} : vector<32x4xbf16>, vector<16x4xbf16>, vector<32x16xf32> -> vector<32x16xf32>
    %34 = arith.truncf %33 : vector<32x16xf32> to vector<32x16xbf16>
    %c0_23 = arith.constant 0 : index
    %c0_24 = arith.constant 0 : index
    %35 = vector.load %arg9[%c0_23, %c0_24] : memref<16x32xbf16, #tpu.memory_space<vmem>>, vector<16x32xbf16>
    %cst_25 = arith.constant dense<0.000000e+00> : vector<32x32xf32>
    %36 = tpu.matmul %34, %35, %cst_25 {dimension_numbers = #tpu.dot_dimension_numbers<[1], [0], [0], [1], [0, 0, 1, 1], [], []>} : vector<32x16xbf16>, vector<16x32xbf16>, vector<32x32xf32> -> vector<32x32xf32>
    %c0_26 = arith.constant 0 : index
    %c0_27 = arith.constant 0 : index
    %37 = vector.load %arg10[%c0_26, %c0_27] : memref<1x32xf32, #tpu.memory_space<vmem>>, vector<1x32xf32>
    %38 = vector.broadcast %37 : vector<1x32xf32> to vector<32x32xf32>
    %39 = arith.addf %36, %38 : vector<32x32xf32>
    %cst_28 = arith.constant 0.000000e+00 : f32
    %40 = vector.broadcast %cst_28 : f32 to vector<32x32xf32>
    %41 = arith.maximumf %39, %40 : vector<32x32xf32>
    %42 = arith.truncf %41 : vector<32x32xf32> to vector<32x32xbf16>
    %c0_29 = arith.constant 0 : index
    %c0_30 = arith.constant 0 : index
    %43 = vector.load %arg11[%c0_29, %c0_30] : memref<32x32xbf16, #tpu.memory_space<vmem>>, vector<32x32xbf16>
    %cst_31 = arith.constant dense<0.000000e+00> : vector<32x32xf32>
    %44 = tpu.matmul %42, %43, %cst_31 {dimension_numbers = #tpu.dot_dimension_numbers<[1], [0], [0], [1], [0, 0, 1, 1], [], []>} : vector<32x32xbf16>, vector<32x32xbf16>, vector<32x32xf32> -> vector<32x32xf32>
    %c0_32 = arith.constant 0 : index
    %c0_33 = arith.constant 0 : index
    %45 = vector.load %arg12[%c0_32, %c0_33] : memref<32x32xbf16, #tpu.memory_space<vmem>>, vector<32x32xbf16>
    %cst_34 = arith.constant dense<0.000000e+00> : vector<32x32xf32>
    %46 = tpu.matmul %1, %45, %cst_34 {dimension_numbers = #tpu.dot_dimension_numbers<[1], [0], [0], [1], [0, 0, 1, 1], [], []>} : vector<32x32xbf16>, vector<32x32xbf16>, vector<32x32xf32> -> vector<32x32xf32>
    %47 = arith.addf %44, %46 : vector<32x32xf32>
    %c0_35 = arith.constant 0 : index
    %c0_36 = arith.constant 0 : index
    %48 = vector.load %arg13[%c0_35, %c0_36] : memref<1x32xf32, #tpu.memory_space<vmem>>, vector<1x32xf32>
    %49 = vector.broadcast %48 : vector<1x32xf32> to vector<32x32xf32>
    %50 = arith.addf %47, %49 : vector<32x32xf32>
    %cst_37 = arith.constant 0.000000e+00 : f32
    %51 = vector.broadcast %cst_37 : f32 to vector<32x32xf32>
    %52 = arith.maximumf %50, %51 : vector<32x32xf32>
    %53 = arith.truncf %52 : vector<32x32xf32> to vector<32x32xbf16>
    %c0_38 = arith.constant 0 : index
    %c0_39 = arith.constant 0 : index
    %54 = vector.load %arg14[%c0_38, %c0_39] : memref<32x128xbf16, #tpu.memory_space<vmem>>, vector<32x128xbf16>
    %cst_40 = arith.constant dense<0.000000e+00> : vector<32x128xf32>
    %55 = tpu.matmul %53, %54, %cst_40 {dimension_numbers = #tpu.dot_dimension_numbers<[1], [0], [0], [1], [0, 0, 1, 1], [], []>} : vector<32x32xbf16>, vector<32x128xbf16>, vector<32x128xf32> -> vector<32x128xf32>
    %c0_41 = arith.constant 0 : index
    %c0_42 = arith.constant 0 : index
    %56 = vector.load %arg15[%c0_41, %c0_42] : memref<1x128xf32, #tpu.memory_space<vmem>>, vector<1x128xf32>
    %57 = vector.broadcast %56 : vector<1x128xf32> to vector<32x128xf32>
    %58 = arith.addf %55, %57 : vector<32x128xf32>
    %c0_43 = arith.constant 0 : index
    %c0_44 = arith.constant 0 : index
    %c0_45 = arith.constant 0 : index
    %59 = vector.load %arg16[%c0_43, %c0_44, %c0_45] : memref<1x32x128xf32, #tpu.memory_space<vmem>>, vector<1x32x128xf32>
    %60 = vector.shape_cast %59 : vector<1x32x128xf32> to vector<32x128xf32>
    %61 = vector.shape_cast %58 : vector<32x128xf32> to vector<1x32x128xf32>
    tpu.vector_store %arg16[%c0_43, %c0_44, %c0_45], %61 {strides = array<i32>} : memref<1x32x128xf32, #tpu.memory_space<vmem>>, vector<1x32x128xf32>,
    return
  }
  func.func @transform_0(%arg0: i32, %arg1: i32) -> (i32, i32, i32) {
    %c0_i32 = arith.constant 0 : i32
    %c0_i32_0 = arith.constant 0 : i32
    return %arg0, %arg1, %c0_i32 : i32, i32, i32
  }
  func.func @transform_1(%arg0: i32, %arg1: i32) -> (i32, i32, i32) {
    %c0_i32 = arith.constant 0 : i32
    %c0_i32_0 = arith.constant 0 : i32
    %c0_i32_1 = arith.constant 0 : i32
    return %arg0, %c0_i32, %c0_i32_0 : i32, i32, i32
  }
  func.func @transform_2(%arg0: i32, %arg1: i32) -> (i32, i32, i32) {
    %c0_i32 = arith.constant 0 : i32
    %c0_i32_0 = arith.constant 0 : i32
    %c0_i32_1 = arith.constant 0 : i32
    return %arg0, %c0_i32, %c0_i32_0 : i32, i32, i32
  }
  func.func @transform_3(%arg0: i32, %arg1: i32) -> (i32, i32) {
    %c0_i32 = arith.constant 0 : i32
    %c0_i32_0 = arith.constant 0 : i32
    %c0_i32_1 = arith.constant 0 : i32
    return %c0_i32, %c0_i32_0 : i32, i32
  }
  func.func @transform_4(%arg0: i32, %arg1: i32) -> (i32, i32) {
    %c0_i32 = arith.constant 0 : i32
    %c0_i32_0 = arith.constant 0 : i32
    %c0_i32_1 = arith.constant 0 : i32
    return %c0_i32, %c0_i32_0 : i32, i32
  }
  func.func @transform_5(%arg0: i32, %arg1: i32) -> (i32, i32) {
    %c0_i32 = arith.constant 0 : i32
    %c0_i32_0 = arith.constant 0 : i32
    %c0_i32_1 = arith.constant 0 : i32
    return %c0_i32, %c0_i32_0 : i32, i32
  }
  func.func @transform_6(%arg0: i32, %arg1: i32) -> (i32, i32) {
    %c0_i32 = arith.constant 0 : i32
    %c0_i32_0 = arith.constant 0 : i32
    %c0_i32_1 = arith.constant 0 : i32
    return %c0_i32, %c0_i32_0 : i32, i32
  }
  func.func @transform_7(%arg0: i32, %arg1: i32) -> (i32, i32) {
    %c0_i32 = arith.constant 0 : i32
    %c0_i32_0 = arith.constant 0 : i32
    %c0_i32_1 = arith.constant 0 : i32
    return %c0_i32, %c0_i32_0 : i32, i32
  }
  func.func @transform_8(%arg0: i32, %arg1: i32) -> (i32, i32) {
    %c0_i32 = arith.constant 0 : i32
    %c0_i32_0 = arith.constant 0 : i32
    %c0_i32_1 = arith.constant 0 : i32
    return %c0_i32, %c0_i32_0 : i32, i32
  }
  func.func @transform_9(%arg0: i32, %arg1: i32) -> (i32, i32) {
    %c0_i32 = arith.constant 0 : i32
    %c0_i32_0 = arith.constant 0 : i32
    %c0_i32_1 = arith.constant 0 : i32
    return %c0_i32, %c0_i32_0 : i32, i32
  }
  func.func @transform_10(%arg0: i32, %arg1: i32) -> (i32, i32) {
    %c0_i32 = arith.constant 0 : i32
    %c0_i32_0 = arith.constant 0 : i32
    %c0_i32_1 = arith.constant 0 : i32
    return %c0_i32, %c0_i32_0 : i32, i32
  }
  func.func @transform_11(%arg0: i32, %arg1: i32) -> (i32, i32) {
    %c0_i32 = arith.constant 0 : i32
    %c0_i32_0 = arith.constant 0 : i32
    %c0_i32_1 = arith.constant 0 : i32
    return %c0_i32, %c0_i32_0 : i32, i32
  }
  func.func @transform_12(%arg0: i32, %arg1: i32) -> (i32, i32) {
    %c0_i32 = arith.constant 0 : i32
    %c0_i32_0 = arith.constant 0 : i32
    %c0_i32_1 = arith.constant 0 : i32
    return %c0_i32, %c0_i32_0 : i32, i32
  }
  func.func @transform_13(%arg0: i32, %arg1: i32) -> (i32, i32) {
    %c0_i32 = arith.constant 0 : i32
    %c0_i32_0 = arith.constant 0 : i32
    %c0_i32_1 = arith.constant 0 : i32
    return %c0_i32, %c0_i32_0 : i32, i32
  }
  func.func @transform_14(%arg0: i32, %arg1: i32) -> (i32, i32, i32) {
    %c0_i32 = arith.constant 0 : i32
    %c0_i32_0 = arith.constant 0 : i32
    return %arg0, %arg1, %c0_i32 : i32, i32, i32
  }
}

</mosaic_0001>

<llo_original>
// kernel: ocrnet_forward.4
$region0: #{ocrnet_forward.4}
  #allocation0 [shape = 'u32[]', space=smem, size = 0x4, offset = 0x4, fixed_abs, tag = 'smem constant byte address 0x4 - core index']
  #allocation1 [shape = 'u32[144,128]{1,0:T(1,128)}', space=vmem, size = 0x12000, scoped, tag = 'internal scratch']
  %s0 = inlined_call_operand.vmem [shape: bf16[2,64,27], index: 0, kind: input, shape index: {}]
  %s1 = inlined_call_operand.vmem [shape: bf16[27,16], index: 1, kind: input, shape index: {}]
  %s2 = inlined_call_operand.vmem [shape: f32[1,16], index: 2, kind: input, shape index: {}]
  %s3 = inlined_call_operand.vmem [shape: bf16[16,16], index: 3, kind: input, shape index: {}]
  %s4 = inlined_call_operand.vmem [shape: f32[1,16], index: 4, kind: input, shape index: {}]
  %s5 = inlined_call_operand.vmem [shape: bf16[16,128], index: 5, kind: input, shape index: {}]
  %s6 = inlined_call_operand.vmem [shape: f32[1,128], index: 6, kind: input, shape index: {}]
  %s7 = inlined_call_operand.vmem [shape: bf16[2,64,16], index: 7, kind: output, shape index: {0}]
  %s8 = inlined_call_operand.vmem [shape: f32[2,64,128], index: 8, kind: output, shape index: {1}]
  %9 = xla_tuple %s7, %s8
  %s10 = sld [smem:[#allocation0]]
  $region69: #{ocrnet_forward.4} parent=0
    _
  %s12 = ssub.s32 1, %s10
  %s13 = scalar_select 0, %s12, %s10
  loop: start=0, step=1, limit=6
  $region2: #{ocrnet_forward.4} parent=0 // loop_pre_header
    _
  $region3: #{ocrnet_forward.4} parent=0 // loop_header
    %s15 = sphi 0, %s19
    %p16 = scmp.ge.s32.totalorder %s15, 6
    %s22 = sphi 0, %s34
    %s23 = sphi 0, %s30
    %s24 = sphi 0, %s22
    %s25 = sphi 0, %s23
    %s26 = sphi 0, %s24
    %s27 = sphi 0, %s25
    %s39 = sphi 0, %s41
    %s42 = sphi 0, %s39
    %s43 = sphi 0, %s42
    %s59 = sphi 0, %s43
    %s63 = sphi 0, %s63
    %s65 = sphi 0, %s63
    %s66 = sphi 0, %s65
    %s80 = sphi 0, %s66
    %s84 = sphi 0, %s84
    %s86 = sphi 0, %s84
    %s87 = sphi 0, %s86
    %s101 = sphi 0, %s87
    %s105 = sphi 0, %s105
    %s107 = sphi 0, %s105
    %s108 = sphi 0, %s107
    %s122 = sphi 0, %s108
    %s126 = sphi 0, %s126
    %s128 = sphi 0, %s126
    %s129 = sphi 0, %s128
    %s143 = sphi 0, %s129
    %s147 = sphi 0, %s147
    %s149 = sphi 0, %s147
    %s150 = sphi 0, %s149
    %s164 = sphi 0, %s150
    %s168 = sphi 0, %s168
    %s170 = sphi 0, %s168
    %s171 = sphi 0, %s170
    %s185 = sphi 0, %s171
    %s193 = sphi 0, %s195
    %s196 = sphi 0, %s193
    %s197 = sphi 0, %s196
    %s213 = sphi 0, %s197
    %s221 = sphi 0, %s223
    %s224 = sphi 0, %s221
    %s225 = sphi 0, %s224
    %s241 = sphi 0, %s225
  $region4: #{ocrnet_forward.4} parent=0 // loop_header_branch
    %18 = sbr.rel (%p16) target = $region8
  $region5: #{ocrnet_forward.4} parent=0 // loop_body
    %s20 = ssub.s32 %s15, 1
    %s21 = ssub.s32 %s15, 2
    %s28 = sadd.s32 1, %s23
    %p29 = scmp.ge.s32.totalorder %s28, 2
    %s30 = scalar_select %p29, 0, %s28
    %s31 = sadd.s32 1, %s22
    %s32 = scalar_select %p29, %s31, %s22
    %p33 = scmp.ge.s32.totalorder %s32, 2
    %s34 = scalar_select %p33, 0, %s32
    %s35 = ssub.s32 %s22, %s34
    %s36 = ssub.s32 %s23, %s30
    %s37 = sor.u32 %s35, %s36
    %p38 = scmp.eq.s32.totalorder %s37, 0
    %s40 = sadd.s32 %s39, 1
    %s41 = scalar_select %p38, %s39, %s40
    %p44 = pneg %p38
    %p45 = scmp.eq.s32.totalorder %s15, 3
    %p46 = por %p44, %p45
    %p47 = scmp.ne.s32.totalorder %s39, %s42
    %p48 = scmp.eq.s32.totalorder %s15, 0
    %p49 = por %p47, %p48
    %p50 = scmp.ne.s32.totalorder %s39, %s42
    %p51 = scmp.eq.s32.totalorder %s20, 3
    %p52 = por %p50, %p51
    %p53 = scmp.ne.s32.totalorder %s42, %s43
    %p54 = scmp.eq.s32.totalorder %s20, 0
    %p55 = por %p53, %p54
    %p56 = scmp.ne.s32.totalorder %s42, %s43
    %p57 = scmp.eq.s32.totalorder %s21, 3
    %p58 = por %p56, %p57
    %p60 = scmp.ne.s32.totalorder %s43, %s59
    %p61 = scmp.eq.s32.totalorder %s21, 0
    %p62 = por %p60, %p61
    %s64 = sadd.s32 %s63, 1
    %p67 = scmp.eq.s32.totalorder %s15, 3
    %p68 = scmp.ne.s32.totalorder %s63, %s65
    %p69 = scmp.eq.s32.totalorder %s15, 0
    %p70 = por %p68, %p69
    %p71 = scmp.ne.s32.totalorder %s63, %s65
    %p72 = scmp.eq.s32.totalorder %s20, 3
    %p73 = por %p71, %p72
    %p74 = scmp.ne.s32.totalorder %s65, %s66
    %p75 = scmp.eq.s32.totalorder %s20, 0
    %p76 = por %p74, %p75
    %p77 = scmp.ne.s32.totalorder %s65, %s66
    %p78 = scmp.eq.s32.totalorder %s21, 3
    %p79 = por %p77, %p78
    %p81 = scmp.ne.s32.totalorder %s66, %s80
    %p82 = scmp.eq.s32.totalorder %s21, 0
    %p83 = por %p81, %p82
    %s85 = sadd.s32 %s84, 1
    %p88 = scmp.eq.s32.totalorder %s15, 3
    %p89 = scmp.ne.s32.totalorder %s84, %s86
    %p90 = scmp.eq.s32.totalorder %s15, 0
    %p91 = por %p89, %p90
    %p92 = scmp.ne.s32.totalorder %s84, %s86
    %p93 = scmp.eq.s32.totalorder %s20, 3
    %p94 = por %p92, %p93
    %p95 = scmp.ne.s32.totalorder %s86, %s87
    %p96 = scmp.eq.s32.totalorder %s20, 0
    %p97 = por %p95, %p96
    %p98 = scmp.ne.s32.totalorder %s86, %s87
    %p99 = scmp.eq.s32.totalorder %s21, 3
    %p100 = por %p98, %p99
    %p102 = scmp.ne.s32.totalorder %s87, %s101
    %p103 = scmp.eq.s32.totalorder %s21, 0
    %p104 = por %p102, %p103
    %s106 = sadd.s32 %s105, 1
    %p109 = scmp.eq.s32.totalorder %s15, 3
    %p110 = scmp.ne.s32.totalorder %s105, %s107
    %p111 = scmp.eq.s32.totalorder %s15, 0
    %p112 = por %p110, %p111
    %p113 = scmp.ne.s32.totalorder %s105, %s107
    %p114 = scmp.eq.s32.totalorder %s20, 3
    %p115 = por %p113, %p114
    %p116 = scmp.ne.s32.totalorder %s107, %s108
    %p117 = scmp.eq.s32.totalorder %s20, 0
    %p118 = por %p116, %p117
    %p119 = scmp.ne.s32.totalorder %s107, %s108
    %p120 = scmp.eq.s32.totalorder %s21, 3
    %p121 = por %p119, %p120
    %p123 = scmp.ne.s32.totalorder %s108, %s122
    %p124 = scmp.eq.s32.totalorder %s21, 0
    %p125 = por %p123, %p124
    %s127 = sadd.s32 %s126, 1
    %p130 = scmp.eq.s32.totalorder %s15, 3
    %p131 = scmp.ne.s32.totalorder %s126, %s128
    %p132 = scmp.eq.s32.totalorder %s15, 0
    %p133 = por %p131, %p132
    %p134 = scmp.ne.s32.totalorder %s126, %s128
    %p135 = scmp.eq.s32.totalorder %s20, 3
    %p136 = por %p134, %p135
    %p137 = scmp.ne.s32.totalorder %s128, %s129
    %p138 = scmp.eq.s32.totalorder %s20, 0
    %p139 = por %p137, %p138
    %p140 = scmp.ne.s32.totalorder %s128, %s129
    %p141 = scmp.eq.s32.totalorder %s21, 3
    %p142 = por %p140, %p141
    %p144 = scmp.ne.s32.totalorder %s129, %s143
    %p145 = scmp.eq.s32.totalorder %s21, 0
    %p146 = por %p144, %p145
    %s148 = sadd.s32 %s147, 1
    %p151 = scmp.eq.s32.totalorder %s15, 3
    %p152 = scmp.ne.s32.totalorder %s147, %s149
    %p153 = scmp.eq.s32.totalorder %s15, 0
    %p154 = por %p152, %p153
    %p155 = scmp.ne.s32.totalorder %s147, %s149
    %p156 = scmp.eq.s32.totalorder %s20, 3
    %p157 = por %p155, %p156
    %p158 = scmp.ne.s32.totalorder %s149, %s150
    %p159 = scmp.eq.s32.totalorder %s20, 0
    %p160 = por %p158, %p159
    %p161 = scmp.ne.s32.totalorder %s149, %s150
    %p162 = scmp.eq.s32.totalorder %s21, 3
    %p163 = por %p161, %p162
    %p165 = scmp.ne.s32.totalorder %s150, %s164
    %p166 = scmp.eq.s32.totalorder %s21, 0
    %p167 = por %p165, %p166
    %s169 = sadd.s32 %s168, 1
    %p172 = scmp.eq.s32.totalorder %s15, 3
    %p173 = scmp.ne.s32.totalorder %s168, %s170
    %p174 = scmp.eq.s32.totalorder %s15, 0
    %p175 = por %p173, %p174
    %p176 = scmp.ne.s32.totalorder %s168, %s170
    %p177 = scmp.eq.s32.totalorder %s20, 3
    %p178 = por %p176, %p177
    %p179 = scmp.ne.s32.totalorder %s170, %s171
    %p180 = scmp.eq.s32.totalorder %s20, 0
    %p181 = por %p179, %p180
    %p182 = scmp.ne.s32.totalorder %s170, %s171
    %p183 = scmp.eq.s32.totalorder %s21, 3
    %p184 = por %p182, %p183
    %p186 = scmp.ne.s32.totalorder %s171, %s185
    %p187 = scmp.eq.s32.totalorder %s21, 0
    %p188 = por %p186, %p187
    %s189 = ssub.s32 %s22, %s34
    %s190 = ssub.s32 %s23, %s30
    %s191 = sor.u32 %s189, %s190
    %p192 = scmp.eq.s32.totalorder %s191, 0
    %s194 = sadd.s32 %s193, 1
    %s195 = scalar_select %p192, %s193, %s194
    %p198 = pneg %p192
    %p199 = scmp.eq.s32.totalorder %s15, 3
    %p200 = por %p198, %p199
    %p201 = scmp.ne.s32.totalorder %s193, %s196
    %p202 = scmp.eq.s32.totalorder %s15, 0
    %p203 = por %p201, %p202
    %p204 = scmp.ne.s32.totalorder %s193, %s196
    %p205 = scmp.eq.s32.totalorder %s20, 3
    %p206 = por %p204, %p205
    %p207 = scmp.ne.s32.totalorder %s196, %s197
    %p208 = scmp.eq.s32.totalorder %s20, 0
    %p209 = por %p207, %p208
    %p210 = scmp.ne.s32.totalorder %s196, %s197
    %p211 = scmp.eq.s32.totalorder %s21, 3
    %p212 = por %p210, %p211
    %p214 = scmp.ne.s32.totalorder %s197, %s213
    %p215 = scmp.eq.s32.totalorder %s21, 0
    %p216 = por %p214, %p215
    %s217 = ssub.s32 %s22, %s34
    %s218 = ssub.s32 %s23, %s30
    %s219 = sor.u32 %s217, %s218
    %p220 = scmp.eq.s32.totalorder %s219, 0
    %s222 = sadd.s32 %s221, 1
    %s223 = scalar_select %p220, %s221, %s222
    %p226 = pneg %p220
    %p227 = scmp.eq.s32.totalorder %s15, 3
    %p228 = por %p226, %p227
    %p229 = scmp.ne.s32.totalorder %s221, %s224
    %p230 = scmp.eq.s32.totalorder %s15, 0
    %p231 = por %p229, %p230
    %p232 = scmp.ne.s32.totalorder %s221, %s224
    %p233 = scmp.eq.s32.totalorder %s20, 3
    %p234 = por %p232, %p233
    %p235 = scmp.ne.s32.totalorder %s224, %s225
    %p236 = scmp.eq.s32.totalorder %s20, 0
    %p237 = por %p235, %p236
    %p238 = scmp.ne.s32.totalorder %s224, %s225
    %p239 = scmp.eq.s32.totalorder %s21, 3
    %p240 = por %p238, %p239
    %p242 = scmp.ne.s32.totalorder %s225, %s241
    %p243 = scmp.eq.s32.totalorder %s21, 0
    %p244 = por %p242, %p243
    %p245 = scmp.le.s32.totalorder 1, %s15
    %p246 = scmp.lt.s32.totalorder %s15, 5
    %p247 = pnand %p245, %p246
    %p248 = pneg %p247
    // Predicated region
    $region9: #{ocrnet_forward.4} parent=5 // pred_check
      _
    $region10: #{ocrnet_forward.4} parent=5 // pred_check_branch
      %250 = sbr.rel (%p247) target = $region12
    $region11: #{ocrnet_forward.4} parent=5 // pred_region
      %s251 = ssub.s32 %s15, 1
      // Predicated region
      $region13: #{ocrnet_forward.4} parent=11 // pred_check
        %p252 = pneg %p76
      $region14: #{ocrnet_forward.4} parent=11 // pred_check_branch
        %254 = sbr.rel (%p252) target = $region16
      $region15: #{ocrnet_forward.4} parent=11 // pred_region
        _
      $region16: #{ocrnet_forward.4} parent=11 // pred_fallthru
        _
      // Predicated region
      $region17: #{ocrnet_forward.4} parent=11 // pred_check
        %p255 = pneg %p97
      $region18: #{ocrnet_forward.4} parent=11 // pred_check_branch
        %257 = sbr.rel (%p255) target = $region20
      $region19: #{ocrnet_forward.4} parent=11 // pred_region
        _
      $region20: #{ocrnet_forward.4} parent=11 // pred_fallthru
        _
      // Predicated region
      $region21: #{ocrnet_forward.4} parent=11 // pred_check
        %p258 = pneg %p118
      $region22: #{ocrnet_forward.4} parent=11 // pred_check_branch
        %260 = sbr.rel (%p258) target = $region24
      $region23: #{ocrnet_forward.4} parent=11 // pred_region
        _
      $region24: #{ocrnet_forward.4} parent=11 // pred_fallthru
        _
      // Predicated region
      $region25: #{ocrnet_forward.4} parent=11 // pred_check
        %p261 = pneg %p139
      $region26: #{ocrnet_forward.4} parent=11 // pred_check_branch
        %263 = sbr.rel (%p261) target = $region28
      $region27: #{ocrnet_forward.4} parent=11 // pred_region
        _
      $region28: #{ocrnet_forward.4} parent=11 // pred_fallthru
        _
      // Predicated region
      $region29: #{ocrnet_forward.4} parent=11 // pred_check
        %p264 = pneg %p160
      $region30: #{ocrnet_forward.4} parent=11 // pred_check_branch
        %266 = sbr.rel (%p264) target = $region32
      $region31: #{ocrnet_forward.4} parent=11 // pred_region
        _
      $region32: #{ocrnet_forward.4} parent=11 // pred_fallthru
        _
      // Predicated region
      $region33: #{ocrnet_forward.4} parent=11 // pred_check
        %p267 = pneg %p181
      $region34: #{ocrnet_forward.4} parent=11 // pred_check_branch
        %269 = sbr.rel (%p267) target = $region36
      $region35: #{ocrnet_forward.4} parent=11 // pred_region
        _
      $region36: #{ocrnet_forward.4} parent=11 // pred_fallthru
        _
    $region12: #{ocrnet_forward.4} parent=5 // pred_fallthru
      _
    %p270 = scmp.lt.s32.totalorder %s15, 4
    // Predicated region
    $region37: #{ocrnet_forward.4} parent=5 // pred_check
      %p271 = pneg %p270
    $region38: #{ocrnet_forward.4} parent=5 // pred_check_branch
      %273 = sbr.rel (%p271) target = $region40
    $region39: #{ocrnet_forward.4} parent=5 // pred_region
      // Predicated region
      $region41: #{ocrnet_forward.4} parent=39 // pred_check
        %p274 = pneg %p49
      $region42: #{ocrnet_forward.4} parent=39 // pred_check_branch
        %276 = sbr.rel (%p274) target = $region44
      $region43: #{ocrnet_forward.4} parent=39 // pred_region
        %s277 = smul.u32 4, %s23
        %p278 = scmp.lt.s32.totalorder %s22, 1
        %s279 = scalar_select %p278, %s22, 1
        %p280 = scmp.lt.s32.totalorder %s277, 7
        %s281 = scalar_select %p280, %s277, 7
        %s282 = smul.addr %s279, 8
        %s283 = sadd.s32 %s281, %s282
        %s284 = smul.addr %s283, 4
        %s285 = scalar_lea.vmem %s0, %s284
        %s286 = smul.u32 4, %s23
      $region44: #{ocrnet_forward.4} parent=39 // pred_fallthru
        _
    $region40: #{ocrnet_forward.4} parent=5 // pred_fallthru
      _
    %p287 = scmp.le.s32.totalorder 1, %s15
    %p288 = scmp.lt.s32.totalorder %s15, 5
    %p289 = pnand %p287, %p288
    %p290 = pneg %p289
    // Predicated region
    $region45: #{ocrnet_forward.4} parent=5 // pred_check
      _
    $region46: #{ocrnet_forward.4} parent=5 // pred_check_branch
      %292 = sbr.rel (%p289) target = $region48
    $region47: #{ocrnet_forward.4} parent=5 // pred_region
      %s293 = ssub.s32 %s15, 1
      %s294 = smul.u32 4, %s25
      %p295 = scmp.lt.s32.totalorder %s24, 1
      %s296 = scalar_select %p295, %s24, 1
      %p297 = scmp.lt.s32.totalorder %s294, 7
      %s298 = scalar_select %p297, %s294, 7
      %s299 = smul.addr %s296, 8
      %s300 = sadd.s32 %s298, %s299
      %s301 = smul.addr %s300, 4
      %s302 = scalar_lea.vmem %s0, %s301
      %p303 = pneg %p55
      %p304 = pneg %p52
      %p305 = pneg %p76
      %p306 = pneg %p73
      %p307 = pneg %p97
      %p308 = pneg %p94
      %p309 = pneg %p118
      %p310 = pneg %p115
      %p311 = pneg %p139
      %p312 = pneg %p136
      %p313 = pneg %p160
      %p314 = pneg %p157
      %p315 = pneg %p181
      %p316 = pneg %p178
      %p317 = pneg %p209
      %p318 = pneg %p206
      %s319 = smul.u32 4, %s25
      %p320 = scmp.lt.s32.totalorder %s24, 1
      %s321 = scalar_select %p320, %s24, 1
      %p322 = scmp.lt.s32.totalorder %s319, 7
      %s323 = scalar_select %p322, %s319, 7
      %s324 = smul.addr %s321, 8
      %s325 = sadd.s32 %s323, %s324
      %s326 = smul.addr %s325, 4
      %s327 = scalar_lea.vmem %s7, %s326
      %p328 = pneg %p237
      %p329 = pneg %p234
      %s330 = smul.u32 4, %s25
      %p331 = scmp.lt.s32.totalorder %s24, 1
      %s332 = scalar_select %p331, %s24, 1
      %p333 = scmp.lt.s32.totalorder %s330, 7
      %s334 = scalar_select %p333, %s330, 7
      %s335 = smul.addr %s332, 8
      %s336 = sadd.s32 %s334, %s335
      %s337 = smul.addr %s336, 8
      %s338 = scalar_lea.vmem %s8, %s337
      %s339 = smul.u32 4, %s25
      %p340 = scmp.lt.s32.totalorder %s24, 1
      %s341 = scalar_select %p340, %s24, 1
      %p342 = scmp.lt.s32.totalorder %s339, 7
      %s343 = scalar_select %p342, %s339, 7
      %s344 = smul.addr %s341, 8
      %s345 = sadd.s32 %s343, %s344
      %s346 = smul.addr %s345, 4
      %s347 = scalar_lea.vmem %s0, %s346
      %s348 = smul.u32 4, %s25
      %s349 = smul.u32 4, %s25
      %p350 = scmp.lt.s32.totalorder %s24, 1
      %s351 = scalar_select %p350, %s24, 1
      %p352 = scmp.lt.s32.totalorder %s349, 7
      %s353 = scalar_select %p352, %s349, 7
      %s354 = smul.addr %s351, 8
      %s355 = sadd.s32 %s353, %s354
      %s356 = smul.addr %s355, 4
      %s357 = scalar_lea.vmem %s7, %s356
      %s358 = smul.u32 4, %s25
      %s359 = smul.u32 4, %s25
      %p360 = scmp.lt.s32.totalorder %s24, 1
      %s361 = scalar_select %p360, %s24, 1
      %p362 = scmp.lt.s32.totalorder %s359, 7
      %s363 = scalar_select %p362, %s359, 7
      %s364 = smul.addr %s361, 8
      %s365 = sadd.s32 %s363, %s364
      %s366 = smul.addr %s365, 8
      %s367 = scalar_lea.vmem %s8, %s366
      %s368 = smul.u32 4, %s25
      %v370 = vld [vmem:[%s347] sm:$0xf]
      %v371 = vld [vmem:[%s347 + $0x4] sm:$0xf]
      %v372 = vld [vmem:[%s347 + $0x8] sm:$0xf]
      %v373 = vld [vmem:[%s347 + $0xc] sm:$0xf]
      %v374 = vld [vmem:[%s1] sm:$0xf]
      %v375 = vld [vmem:[%s1 + $0x4] sm:$0xf]
      %v376 = vld [vmem:[%s1 + $0x8] sm:$0xf]
      %v377 = vld [vmem:[%s1 + $0xc] sm:$0x3]
      %v378 = vld [vmem:[%s2] sm:$0x1]
      %v380 = vlaneseq
      %v381 = vshrl.u32 %v380, 7
      %v382 = vsub.s32 0, %v381
      %v383 = vrot.slane %v378, %v382
      %v389 = vunpack.c.l.b16 %v370
      %v390 = vunpack.c.l.b16 %v371
      %v391 = vunpack.c.l.b16 %v372
      %v392 = vunpack.c.l.b16 %v373
      %v393 = vpack.c.b16 %v390, %v389
      %v394 = vpack.c.b16 %v392, %v391
      %v399 = vunpack.c.l.b16 %v374
      %v400 = vunpack.c.l.b16 %v375
      %v401 = vunpack.c.l.b16 %v376
      %v402 = vunpack.c.l.b16 %v377
      %v403 = vpack.c.b16 %v400, %v399
      %v404 = vpack.c.b16 %v402, %v401
      %vm406 = vcmask 220160
      %v408 = vsel %vm406, %v393, 0
      %v411 = vsel %vm406, %v394, 0
      %vm413 = vcmask 1044480
      %vm414 = vcmask 1045504
      %v415 = vsel %vm413, 4294967295, 65535
      %v416 = vsel %vm414, %v415, 0
      %v418 = vand.u32 %v404, %v416
      %420 = vmatprep.subr.bf16.mxu0 0
      %421 = vmatpush1.bf16.msra.mxu0 0
      %422 = vmatprep.subr.bf16.mxu0 0
      %423 = vmatpush1.bf16.msra.mxu0 0
      %424 = vmatprep.subr.bf16.mxu0 0
      %425 = vmatpush1.bf16.msra.mxu0 0
      %426 = vmatprep.subr.bf16.mxu0 0
      %427 = vmatpush1.bf16.msra.mxu0 0
      %428 = vmatprep.subr.bf16.mxu0 0
      %429 = vmatpush1.bf16.msra.mxu0 0
      %430 = vmatprep.subr.bf16.mxu0 0
      %431 = vmatpush1.bf16.msra.mxu0 0
      %432 = vmatprep.subr.bf16.mxu0 0
      %433 = vmatpush1.bf16.msra.mxu0 %v418
      %434 = vmatprep.subr.bf16.mxu0 0
      %435 = vmatpush1.bf16.msra.mxu0 %v403
      %436 = vmatprep.subr.bf16.mxu0 0
      %437 = vmatpush2.bf16.msra.mxu0 0
      %438 = vmatprep.subr.bf16.mxu0 0
      %439 = vmatpush2.bf16.msra.mxu0 0
      %440 = vmatprep.subr.bf16.mxu0 0
      %441 = vmatpush2.bf16.msra.mxu0 0
      %442 = vmatprep.subr.bf16.mxu0 0
      %443 = vmatpush2.bf16.msra.mxu0 0
      %444 = vmatprep.subr.bf16.mxu0 0
      %445 = vmatpush2.bf16.msra.mxu0 0
      %446 = vmatprep.subr.bf16.mxu0 0
      %447 = vmatpush2.bf16.msra.mxu0 0
      %448 = vmatprep.subr.bf16.mxu0 0
      %449 = vmatpush2.bf16.msra.mxu0 0
      %450 = vmatprep.subr.bf16.mxu0 0
      %451 = vmatpush2.bf16.msra.mxu0 0
      %452 = vmatprep.mubr.bf16.mxu0 0
      %453 = vmatmul.mubr.bf16.gmra.mxu0 %v408
      %v454 = vpop.f32.mrf.mxu0
      %v455 = vadd.f32 %v383, %v454
      %v456 = vpop.f32.mrf.mxu0
      %v457 = vpop.f32.mrf.mxu0
      %v458 = vadd.f32 %v383, %v457
      %v459 = vpop.f32.mrf.mxu0
      %460 = vmatprep.mubr.bf16.mxu0 0
      %461 = vmatmul.mubr.bf16.gmra.mxu0 %v411
      %v462 = vpop.f32.mrf.mxu0
      %v463 = vadd.f32 %v383, %v462
      %v464 = vpop.f32.mrf.mxu0
      %v465 = vpop.f32.mrf.mxu0
      %v466 = vadd.f32 %v383, %v465
      %v467 = vpop.f32.mrf.mxu0
      %468 = vdwg.mxu0
      %v469 = vmax.f32 %v455, 0.0
      %v470 = vmax.f32 %v458, 0.0
      %v471 = vmax.f32 %v463, 0.0
      %v472 = vmax.f32 %v466, 0.0
      %v473 = vpack.c.bf16 %v470, %v469
      %v474 = vpack.c.bf16 %v472, %v471
      %v477 = vunpack.c.l.b16 %v473
      %v478 = vunpack.c.h.b16 %v473
      %v479 = vunpack.c.l.b16 %v474
      %v480 = vunpack.c.h.b16 %v474
      %v481 = vpack.c.b16 %v477, %v477
      %v482 = vpack.c.b16 %v478, %v478
      %v483 = vpack.c.b16 %v479, %v479
      %v484 = vpack.c.b16 %v480, %v480
      %vm489 = vcmask 125952
      %490 = vst.msk [vmem:[%s357] sm:$0xf] %vm489, %v481
      %491 = vst.msk [vmem:[%s357 + $0x4] sm:$0xf] %vm489, %v482
      %492 = vst.msk [vmem:[%s357 + $0x8] sm:$0xf] %vm489, %v483
      %493 = vst.msk [vmem:[%s357 + $0xc] sm:$0xf] %vm489, %v484
      %v494 = vld [vmem:[%s3] sm:$0xf]
      %v495 = vld [vmem:[%s3 + $0x4] sm:$0xf]
      %v496 = vld [vmem:[%s4] sm:$0x1]
      %v498 = vlaneseq
      %v499 = vshrl.u32 %v498, 7
      %v500 = vsub.s32 0, %v499
      %v501 = vrot.slane %v496, %v500
      %v505 = vunpack.c.l.b16 %v494
      %v506 = vunpack.c.l.b16 %v495
      %v507 = vpack.c.b16 %v506, %v505
      %vm509 = vcmask 130048
      %v511 = vsel %vm509, %v473, 0
      %v514 = vsel %vm509, %v474, 0
      %516 = vmatprep.subr.bf16.mxu0 0
      %517 = vmatpush1.bf16.msra.mxu0 0
      %518 = vmatprep.subr.bf16.mxu0 0
      %519 = vmatpush1.bf16.msra.mxu0 0
      %520 = vmatprep.subr.bf16.mxu0 0
      %521 = vmatpush1.bf16.msra.mxu0 0
      %522 = vmatprep.subr.bf16.mxu0 0
      %523 = vmatpush1.bf16.msra.mxu0 0
      %524 = vmatprep.subr.bf16.mxu0 0
      %525 = vmatpush1.bf16.msra.mxu0 0
      %526 = vmatprep.subr.bf16.mxu0 0
      %527 = vmatpush1.bf16.msra.mxu0 0
      %528 = vmatprep.subr.bf16.mxu0 0
      %529 = vmatpush1.bf16.msra.mxu0 0
      %530 = vmatprep.subr.bf16.mxu0 0
      %531 = vmatpush1.bf16.msra.mxu0 %v507
      %532 = vmatprep.subr.bf16.mxu0 0
      %533 = vmatpush2.bf16.msra.mxu0 0
      %534 = vmatprep.subr.bf16.mxu0 0
      %535 = vmatpush2.bf16.msra.mxu0 0
      %536 = vmatprep.subr.bf16.mxu0 0
      %537 = vmatpush2.bf16.msra.mxu0 0
      %538 = vmatprep.subr.bf16.mxu0 0
      %539 = vmatpush2.bf16.msra.mxu0 0
      %540 = vmatprep.subr.bf16.mxu0 0
      %541 = vmatpush2.bf16.msra.mxu0 0
      %542 = vmatprep.subr.bf16.mxu0 0
      %543 = vmatpush2.bf16.msra.mxu0 0
      %544 = vmatprep.subr.bf16.mxu0 0
      %545 = vmatpush2.bf16.msra.mxu0 0
      %546 = vmatprep.subr.bf16.mxu0 0
      %547 = vmatpush2.bf16.msra.mxu0 0
      %548 = vmatprep.mubr.bf16.mxu0 0
      %549 = vmatmul.mubr.bf16.gmra.mxu0 %v511
      %v550 = vpop.f32.mrf.mxu0
      %v551 = vadd.f32 %v501, %v550
      %v552 = vpop.f32.mrf.mxu0
      %v553 = vpop.f32.mrf.mxu0
      %v554 = vadd.f32 %v501, %v553
      %v555 = vpop.f32.mrf.mxu0
      %556 = vmatprep.mubr.bf16.mxu0 0
      %557 = vmatmul.mubr.bf16.gmra.mxu0 %v514
      %v558 = vpop.f32.mrf.mxu0
      %v559 = vadd.f32 %v501, %v558
      %v560 = vpop.f32.mrf.mxu0
      %v561 = vpop.f32.mrf.mxu0
      %v562 = vadd.f32 %v501, %v561
      %v563 = vpop.f32.mrf.mxu0
      %564 = vdwg.mxu0
      %v565 = vmax.f32 %v551, 0.0
      %v566 = vmax.f32 %v554, 0.0
      %v567 = vmax.f32 %v559, 0.0
      %v568 = vmax.f32 %v562, 0.0
      %v569 = vpack.c.bf16 %v566, %v565
      %v570 = vpack.c.bf16 %v568, %v567
      %v571 = vld [vmem:[%s5] sm:$0xf]
      %v572 = vld [vmem:[%s5 + $0x4] sm:$0xf]
      %v573 = vld [vmem:[%s6] sm:$0x1]
      %v575 = vlaneseq
      %v576 = vshrl.u32 %v575, 7
      %v577 = vsub.s32 0, %v576
      %v578 = vrot.slane %v573, %v577
      %v582 = vunpack.c.l.b16 %v571
      %v583 = vunpack.c.l.b16 %v572
      %v584 = vpack.c.b16 %v583, %v582
      %v587 = vsel %vm509, %v569, 0
      %v590 = vsel %vm509, %v570, 0
      %592 = vmatprep.subr.bf16.mxu0 0
      %593 = vmatpush1.bf16.msra.mxu0 0
      %594 = vmatprep.subr.bf16.mxu0 0
      %595 = vmatpush1.bf16.msra.mxu0 0
      %596 = vmatprep.subr.bf16.mxu0 0
      %597 = vmatpush1.bf16.msra.mxu0 0
      %598 = vmatprep.subr.bf16.mxu0 0
      %599 = vmatpush1.bf16.msra.mxu0 0
      %600 = vmatprep.subr.bf16.mxu0 0
      %601 = vmatpush1.bf16.msra.mxu0 0
      %602 = vmatprep.subr.bf16.mxu0 0
      %603 = vmatpush1.bf16.msra.mxu0 0
      %604 = vmatprep.subr.bf16.mxu0 0
      %605 = vmatpush1.bf16.msra.mxu0 0
      %606 = vmatprep.subr.bf16.mxu0 0
      %607 = vmatpush1.bf16.msra.mxu0 %v584
      %608 = vmatprep.subr.bf16.mxu0 0
      %609 = vmatpush2.bf16.msra.mxu0 0
      %610 = vmatprep.subr.bf16.mxu0 0
      %611 = vmatpush2.bf16.msra.mxu0 0
      %612 = vmatprep.subr.bf16.mxu0 0
      %613 = vmatpush2.bf16.msra.mxu0 0
      %614 = vmatprep.subr.bf16.mxu0 0
      %615 = vmatpush2.bf16.msra.mxu0 0
      %616 = vmatprep.subr.bf16.mxu0 0
      %617 = vmatpush2.bf16.msra.mxu0 0
      %618 = vmatprep.subr.bf16.mxu0 0
      %619 = vmatpush2.bf16.msra.mxu0 0
      %620 = vmatprep.subr.bf16.mxu0 0
      %621 = vmatpush2.bf16.msra.mxu0 0
      %622 = vmatprep.subr.bf16.mxu0 0
      %623 = vmatpush2.bf16.msra.mxu0 0
      %624 = vmatprep.mubr.bf16.mxu0 0
      %625 = vmatmul.mubr.bf16.gmra.mxu0 %v587
      %v626 = vpop.f32.mrf.mxu0
      %v627 = vadd.f32 %v578, %v626
      %v628 = vpop.f32.mrf.mxu0
      %v629 = vpop.f32.mrf.mxu0
      %v630 = vadd.f32 %v578, %v629
      %v631 = vpop.f32.mrf.mxu0
      %632 = vmatprep.mubr.bf16.mxu0 0
      %633 = vmatmul.mubr.bf16.gmra.mxu0 %v590
      %v634 = vpop.f32.mrf.mxu0
      %v635 = vadd.f32 %v578, %v634
      %v636 = vpop.f32.mrf.mxu0
      %v637 = vpop.f32.mrf.mxu0
      %v638 = vadd.f32 %v578, %v637
      %v639 = vpop.f32.mrf.mxu0
      %640 = vdwg.mxu0
      %641 = vst [vmem:[%s367] sm:$0xff] %v627
      %642 = vst [vmem:[%s367 + $0x8] sm:$0xff] %v630
      %643 = vst [vmem:[%s367 + $0x10] sm:$0xff] %v635
      %644 = vst [vmem:[%s367 + $0x18] sm:$0xff] %v638
      %s645 = smul.u32 4, %s25
      %p646 = scmp.lt.s32.totalorder %s24, 1
      %s647 = scalar_select %p646, %s24, 1
      %p648 = scmp.lt.s32.totalorder %s645, 7
      %s649 = scalar_select %p648, %s645, 7
      %s650 = smul.addr %s647, 8
      %s651 = sadd.s32 %s649, %s650
      %s652 = smul.addr %s651, 4
      %s653 = scalar_lea.vmem %s7, %s652
      %s654 = smul.u32 4, %s25
      %p655 = scmp.lt.s32.totalorder %s24, 1
      %s656 = scalar_select %p655, %s24, 1
      %p657 = scmp.lt.s32.totalorder %s654, 7
      %s658 = scalar_select %p657, %s654, 7
      %s659 = smul.addr %s656, 8
      %s660 = sadd.s32 %s658, %s659
      %s661 = smul.addr %s660, 8
      %s662 = scalar_lea.vmem %s8, %s661
      // Predicated region
      $region49: #{ocrnet_forward.4} parent=47 // pred_check
        %p663 = pneg %p206
      $region50: #{ocrnet_forward.4} parent=47 // pred_check_branch
        %665 = sbr.rel (%p663) target = $region52
      $region51: #{ocrnet_forward.4} parent=47 // pred_region
        %s666 = smul.u32 4, %s25
      $region52: #{ocrnet_forward.4} parent=47 // pred_fallthru
        _
      // Predicated region
      $region53: #{ocrnet_forward.4} parent=47 // pred_check
        %p667 = pneg %p234
      $region54: #{ocrnet_forward.4} parent=47 // pred_check_branch
        %669 = sbr.rel (%p667) target = $region56
      $region55: #{ocrnet_forward.4} parent=47 // pred_region
        %s670 = smul.u32 4, %s25
      $region56: #{ocrnet_forward.4} parent=47 // pred_fallthru
        _
    $region48: #{ocrnet_forward.4} parent=5 // pred_fallthru
      _
    %p671 = scmp.le.s32.totalorder 2, %s15
    // Predicated region
    $region57: #{ocrnet_forward.4} parent=5 // pred_check
      %p672 = pneg %p671
    $region58: #{ocrnet_forward.4} parent=5 // pred_check_branch
      %674 = sbr.rel (%p672) target = $region60
    $region59: #{ocrnet_forward.4} parent=5 // pred_region
      %s675 = ssub.s32 %s15, 2
      // Predicated region
      $region61: #{ocrnet_forward.4} parent=59 // pred_check
        %p676 = pneg %p212
      $region62: #{ocrnet_forward.4} parent=59 // pred_check_branch
        %678 = sbr.rel (%p676) target = $region64
      $region63: #{ocrnet_forward.4} parent=59 // pred_region
        %s679 = smul.u32 4, %s27
        %p680 = scmp.lt.s32.totalorder %s26, 1
        %s681 = scalar_select %p680, %s26, 1
        %p682 = scmp.lt.s32.totalorder %s679, 7
        %s683 = scalar_select %p682, %s679, 7
        %s684 = smul.addr %s681, 8
        %s685 = sadd.s32 %s683, %s684
        %s686 = smul.addr %s685, 4
        %s687 = scalar_lea.vmem %s7, %s686
      $region64: #{ocrnet_forward.4} parent=59 // pred_fallthru
        _
      // Predicated region
      $region65: #{ocrnet_forward.4} parent=59 // pred_check
        %p688 = pneg %p240
      $region66: #{ocrnet_forward.4} parent=59 // pred_check_branch
        %690 = sbr.rel (%p688) target = $region68
      $region67: #{ocrnet_forward.4} parent=59 // pred_region
        %s691 = smul.u32 4, %s27
        %p692 = scmp.lt.s32.totalorder %s26, 1
        %s693 = scalar_select %p692, %s26, 1
        %p694 = scmp.lt.s32.totalorder %s691, 7
        %s695 = scalar_select %p694, %s691, 7
        %s696 = smul.addr %s693, 8
        %s697 = sadd.s32 %s695, %s696
        %s698 = smul.addr %s697, 8
        %s699 = scalar_lea.vmem %s8, %s698
      $region68: #{ocrnet_forward.4} parent=59 // pred_fallthru
        _
    $region60: #{ocrnet_forward.4} parent=5 // pred_fallthru
      _
  $region6: #{ocrnet_forward.4} parent=0 // loop_footer
    %s19 = sadd.s32 1, %s15
  $region7: #{ocrnet_forward.4} parent=0 // loop_footer_branch
    %14 = sbr.rel target = $region3
  $region8: #{ocrnet_forward.4} parent=0 // loop_exit
    _

// kernel: ocrnet_forward.5
$region0: #{ocrnet_forward.5}
  #allocation0 [shape = 'u32[]', space=smem, size = 0x4, offset = 0x4, fixed_abs, tag = 'smem constant byte address 0x4 - core index']
  #allocation1 [shape = 'u32[144,128]{1,0:T(1,128)}', space=vmem, size = 0x12000, scoped, tag = 'internal scratch']
  %s0 = inlined_call_operand.vmem [shape: bf16[2,16,10,16], index: 0, kind: input, shape index: {}, may-alias: {0,1}]
  %s1 = inlined_call_operand.vmem [shape: bf16[2,16,10,16], index: 1, kind: input, shape index: {}, may-alias: {0,1}]
  %s2 = inlined_call_operand.vmem [shape: bf16[3,3,16,32], index: 2, kind: input, shape index: {}]
  %s3 = inlined_call_operand.vmem [shape: f32[1,32], index: 3, kind: input, shape index: {}]
  %s4 = inlined_call_operand.vmem [shape: bf16[2,64,32], index: 4, kind: output, shape index: {}]
  %s5 = sld [smem:[#allocation0]]
  $region49: #{ocrnet_forward.5} parent=0
    _
  %s7 = ssub.s32 1, %s5
  %s8 = scalar_select 0, %s7, %s5
  loop: start=0, step=1, limit=4
  $region2: #{ocrnet_forward.5} parent=0 // loop_pre_header
    _
  $region3: #{ocrnet_forward.5} parent=0 // loop_header
    %s10 = sphi 0, %s14
    %p11 = scmp.ge.s32.totalorder %s10, 4
    %s17 = sphi 0, %s29
    %s18 = sphi 0, %s25
    %s19 = sphi 0, %s17
    %s20 = sphi 0, %s18
    %s21 = sphi 0, %s19
    %s22 = sphi 0, %s20
    %s34 = sphi 0, %s36
    %s37 = sphi 0, %s34
    %s38 = sphi 0, %s37
    %s54 = sphi 0, %s38
    %s64 = sphi 0, %s66
    %s67 = sphi 0, %s64
    %s68 = sphi 0, %s67
    %s84 = sphi 0, %s68
    %s88 = sphi 0, %s88
    %s90 = sphi 0, %s88
    %s91 = sphi 0, %s90
    %s105 = sphi 0, %s91
    %s109 = sphi 0, %s109
    %s111 = sphi 0, %s109
    %s112 = sphi 0, %s111
    %s126 = sphi 0, %s112
    %s134 = sphi 0, %s136
    %s137 = sphi 0, %s134
    %s138 = sphi 0, %s137
    %s154 = sphi 0, %s138
  $region4: #{ocrnet_forward.5} parent=0 // loop_header_branch
    %13 = sbr.rel (%p11) target = $region8
  $region5: #{ocrnet_forward.5} parent=0 // loop_body
    %s15 = ssub.s32 %s10, 1
    %s16 = ssub.s32 %s10, 2
    %s23 = sadd.s32 1, %s18
    %p24 = scmp.ge.s32.totalorder %s23, 1
    %s25 = scalar_select %p24, 0, %s23
    %s26 = sadd.s32 1, %s17
    %s27 = scalar_select %p24, %s26, %s17
    %p28 = scmp.ge.s32.totalorder %s27, 2
    %s29 = scalar_select %p28, 0, %s27
    %s30 = ssub.s32 %s17, %s29
    %s31 = ssub.s32 %s18, %s25
    %s32 = sor.u32 %s30, %s31
    %p33 = scmp.eq.s32.totalorder %s32, 0
    %s35 = sadd.s32 %s34, 1
    %s36 = scalar_select %p33, %s34, %s35
    %p39 = pneg %p33
    %p40 = scmp.eq.s32.totalorder %s10, 1
    %p41 = por %p39, %p40
    %p42 = scmp.ne.s32.totalorder %s34, %s37
    %p43 = scmp.eq.s32.totalorder %s10, 0
    %p44 = por %p42, %p43
    %p45 = scmp.ne.s32.totalorder %s34, %s37
    %p46 = scmp.eq.s32.totalorder %s15, 1
    %p47 = por %p45, %p46
    %p48 = scmp.ne.s32.totalorder %s37, %s38
    %p49 = scmp.eq.s32.totalorder %s15, 0
    %p50 = por %p48, %p49
    %p51 = scmp.ne.s32.totalorder %s37, %s38
    %p52 = scmp.eq.s32.totalorder %s16, 1
    %p53 = por %p51, %p52
    %p55 = scmp.ne.s32.totalorder %s38, %s54
    %p56 = scmp.eq.s32.totalorder %s16, 0
    %p57 = por %p55, %p56
    %s58 = sadd.s32 %s18, 1
    %s59 = sadd.s32 %s25, 1
    %s60 = ssub.s32 %s17, %s29
    %s61 = ssub.s32 %s58, %s59
    %s62 = sor.u32 %s60, %s61
    %p63 = scmp.eq.s32.totalorder %s62, 0
    %s65 = sadd.s32 %s64, 1
    %s66 = scalar_select %p63, %s64, %s65
    %p69 = pneg %p63
    %p70 = scmp.eq.s32.totalorder %s10, 1
    %p71 = por %p69, %p70
    %p72 = scmp.ne.s32.totalorder %s64, %s67
    %p73 = scmp.eq.s32.totalorder %s10, 0
    %p74 = por %p72, %p73
    %p75 = scmp.ne.s32.totalorder %s64, %s67
    %p76 = scmp.eq.s32.totalorder %s15, 1
    %p77 = por %p75, %p76
    %p78 = scmp.ne.s32.totalorder %s67, %s68
    %p79 = scmp.eq.s32.totalorder %s15, 0
    %p80 = por %p78, %p79
    %p81 = scmp.ne.s32.totalorder %s67, %s68
    %p82 = scmp.eq.s32.totalorder %s16, 1
    %p83 = por %p81, %p82
    %p85 = scmp.ne.s32.totalorder %s68, %s84
    %p86 = scmp.eq.s32.totalorder %s16, 0
    %p87 = por %p85, %p86
    %s89 = sadd.s32 %s88, 1
    %p92 = scmp.eq.s32.totalorder %s10, 1
    %p93 = scmp.ne.s32.totalorder %s88, %s90
    %p94 = scmp.eq.s32.totalorder %s10, 0
    %p95 = por %p93, %p94
    %p96 = scmp.ne.s32.totalorder %s88, %s90
    %p97 = scmp.eq.s32.totalorder %s15, 1
    %p98 = por %p96, %p97
    %p99 = scmp.ne.s32.totalorder %s90, %s91
    %p100 = scmp.eq.s32.totalorder %s15, 0
    %p101 = por %p99, %p100
    %p102 = scmp.ne.s32.totalorder %s90, %s91
    %p103 = scmp.eq.s32.totalorder %s16, 1
    %p104 = por %p102, %p103
    %p106 = scmp.ne.s32.totalorder %s91, %s105
    %p107 = scmp.eq.s32.totalorder %s16, 0
    %p108 = por %p106, %p107
    %s110 = sadd.s32 %s109, 1
    %p113 = scmp.eq.s32.totalorder %s10, 1
    %p114 = scmp.ne.s32.totalorder %s109, %s111
    %p115 = scmp.eq.s32.totalorder %s10, 0
    %p116 = por %p114, %p115
    %p117 = scmp.ne.s32.totalorder %s109, %s111
    %p118 = scmp.eq.s32.totalorder %s15, 1
    %p119 = por %p117, %p118
    %p120 = scmp.ne.s32.totalorder %s111, %s112
    %p121 = scmp.eq.s32.totalorder %s15, 0
    %p122 = por %p120, %p121
    %p123 = scmp.ne.s32.totalorder %s111, %s112
    %p124 = scmp.eq.s32.totalorder %s16, 1
    %p125 = por %p123, %p124
    %p127 = scmp.ne.s32.totalorder %s112, %s126
    %p128 = scmp.eq.s32.totalorder %s16, 0
    %p129 = por %p127, %p128
    %s130 = ssub.s32 %s17, %s29
    %s131 = ssub.s32 %s18, %s25
    %s132 = sor.u32 %s130, %s131
    %p133 = scmp.eq.s32.totalorder %s132, 0
    %s135 = sadd.s32 %s134, 1
    %s136 = scalar_select %p133, %s134, %s135
    %p139 = pneg %p133
    %p140 = scmp.eq.s32.totalorder %s10, 1
    %p141 = por %p139, %p140
    %p142 = scmp.ne.s32.totalorder %s134, %s137
    %p143 = scmp.eq.s32.totalorder %s10, 0
    %p144 = por %p142, %p143
    %p145 = scmp.ne.s32.totalorder %s134, %s137
    %p146 = scmp.eq.s32.totalorder %s15, 1
    %p147 = por %p145, %p146
    %p148 = scmp.ne.s32.totalorder %s137, %s138
    %p149 = scmp.eq.s32.totalorder %s15, 0
    %p150 = por %p148, %p149
    %p151 = scmp.ne.s32.totalorder %s137, %s138
    %p152 = scmp.eq.s32.totalorder %s16, 1
    %p153 = por %p151, %p152
    %p155 = scmp.ne.s32.totalorder %s138, %s154
    %p156 = scmp.eq.s32.totalorder %s16, 0
    %p157 = por %p155, %p156
    %p158 = scmp.le.s32.totalorder 1, %s10
    %p159 = scmp.lt.s32.totalorder %s10, 3
    %p160 = pnand %p158, %p159
    %p161 = pneg %p160
    // Predicated region
    $region9: #{ocrnet_forward.5} parent=5 // pred_check
      _
    $region10: #{ocrnet_forward.5} parent=5 // pred_check_branch
      %163 = sbr.rel (%p160) target = $region12
    $region11: #{ocrnet_forward.5} parent=5 // pred_region
      %s164 = ssub.s32 %s10, 1
      // Predicated region
      $region13: #{ocrnet_forward.5} parent=11 // pred_check
        %p165 = pneg %p101
      $region14: #{ocrnet_forward.5} parent=11 // pred_check_branch
        %167 = sbr.rel (%p165) target = $region16
      $region15: #{ocrnet_forward.5} parent=11 // pred_region
        _
      $region16: #{ocrnet_forward.5} parent=11 // pred_fallthru
        _
      // Predicated region
      $region17: #{ocrnet_forward.5} parent=11 // pred_check
        %p168 = pneg %p122
      $region18: #{ocrnet_forward.5} parent=11 // pred_check_branch
        %170 = sbr.rel (%p168) target = $region20
      $region19: #{ocrnet_forward.5} parent=11 // pred_region
        _
      $region20: #{ocrnet_forward.5} parent=11 // pred_fallthru
        _
    $region12: #{ocrnet_forward.5} parent=5 // pred_fallthru
      _
    %p171 = scmp.lt.s32.totalorder %s10, 2
    // Predicated region
    $region21: #{ocrnet_forward.5} parent=5 // pred_check
      %p172 = pneg %p171
    $region22: #{ocrnet_forward.5} parent=5 // pred_check_branch
      %174 = sbr.rel (%p172) target = $region24
    $region23: #{ocrnet_forward.5} parent=5 // pred_region
      // Predicated region
      $region25: #{ocrnet_forward.5} parent=23 // pred_check
        %p175 = pneg %p44
      $region26: #{ocrnet_forward.5} parent=23 // pred_check_branch
        %177 = sbr.rel (%p175) target = $region28
      $region27: #{ocrnet_forward.5} parent=23 // pred_region
        %s178 = smul.u32 8, %s18
        %p179 = scmp.lt.s32.totalorder %s17, 1
        %s180 = scalar_select %p179, %s17, 1
        %p181 = scmp.lt.s32.totalorder %s178, 15
        %s182 = scalar_select %p181, %s178, 15
        %s183 = smul.addr %s182, 2
        %s184 = smul.addr %s180, 32
        %s185 = sadd.s32 %s183, %s184
        %s186 = smul.addr %s185, 4
        %s187 = scalar_lea.vmem %s0, %s186
        %s188 = smul.u32 8, %s18
      $region28: #{ocrnet_forward.5} parent=23 // pred_fallthru
        _
      // Predicated region
      $region29: #{ocrnet_forward.5} parent=23 // pred_check
        %p189 = pneg %p74
      $region30: #{ocrnet_forward.5} parent=23 // pred_check_branch
        %191 = sbr.rel (%p189) target = $region32
      $region31: #{ocrnet_forward.5} parent=23 // pred_region
        %s192 = sadd.s32 %s18, 1
        %s193 = smul.u32 8, %s192
        %p194 = scmp.lt.s32.totalorder %s17, 1
        %s195 = scalar_select %p194, %s17, 1
        %p196 = scmp.lt.s32.totalorder %s193, 15
        %s197 = scalar_select %p196, %s193, 15
        %s198 = smul.addr %s197, 2
        %s199 = smul.addr %s195, 32
        %s200 = sadd.s32 %s198, %s199
        %s201 = smul.addr %s200, 4
        %s202 = scalar_lea.vmem %s1, %s201
        %s203 = sadd.s32 %s18, 1
        %s204 = smul.u32 8, %s203
      $region32: #{ocrnet_forward.5} parent=23 // pred_fallthru
        _
    $region24: #{ocrnet_forward.5} parent=5 // pred_fallthru
      _
    %p205 = scmp.le.s32.totalorder 1, %s10
    %p206 = scmp.lt.s32.totalorder %s10, 3
    %p207 = pnand %p205, %p206
    %p208 = pneg %p207
    // Predicated region
    $region33: #{ocrnet_forward.5} parent=5 // pred_check
      _
    $region34: #{ocrnet_forward.5} parent=5 // pred_check_branch
      %210 = sbr.rel (%p207) target = $region36
    $region35: #{ocrnet_forward.5} parent=5 // pred_region
      %s211 = ssub.s32 %s10, 1
      %s212 = smul.u32 8, %s20
      %p213 = scmp.lt.s32.totalorder %s19, 1
      %s214 = scalar_select %p213, %s19, 1
      %p215 = scmp.lt.s32.totalorder %s212, 15
      %s216 = scalar_select %p215, %s212, 15
      %s217 = smul.addr %s216, 2
      %s218 = smul.addr %s214, 32
      %s219 = sadd.s32 %s217, %s218
      %s220 = smul.addr %s219, 4
      %s221 = scalar_lea.vmem %s0, %s220
      %p222 = pneg %p50
      %p223 = pneg %p47
      %s224 = sadd.s32 %s20, 1
      %s225 = smul.u32 8, %s224
      %p226 = scmp.lt.s32.totalorder %s19, 1
      %s227 = scalar_select %p226, %s19, 1
      %p228 = scmp.lt.s32.totalorder %s225, 15
      %s229 = scalar_select %p228, %s225, 15
      %s230 = smul.addr %s229, 2
      %s231 = smul.addr %s227, 32
      %s232 = sadd.s32 %s230, %s231
      %s233 = smul.addr %s232, 4
      %s234 = scalar_lea.vmem %s1, %s233
      %p235 = pneg %p80
      %p236 = pneg %p77
      %p237 = pneg %p101
      %p238 = pneg %p98
      %p239 = pneg %p122
      %p240 = pneg %p119
      %p241 = pneg %p150
      %p242 = pneg %p147
      %s243 = smul.u32 8, %s20
      %p244 = scmp.lt.s32.totalorder %s19, 1
      %s245 = scalar_select %p244, %s19, 1
      %p246 = scmp.lt.s32.totalorder %s243, 7
      %s247 = scalar_select %p246, %s243, 7
      %s248 = smul.addr %s245, 8
      %s249 = sadd.s32 %s247, %s248
      %s250 = smul.addr %s249, 4
      %s251 = scalar_lea.vmem %s4, %s250
      %s252 = smul.u32 8, %s20
      %p253 = scmp.lt.s32.totalorder %s19, 1
      %s254 = scalar_select %p253, %s19, 1
      %p255 = scmp.lt.s32.totalorder %s252, 15
      %s256 = scalar_select %p255, %s252, 15
      %s257 = smul.addr %s256, 2
      %s258 = smul.addr %s254, 32
      %s259 = sadd.s32 %s257, %s258
      %s260 = smul.addr %s259, 4
      %s261 = scalar_lea.vmem %s0, %s260
      %s262 = smul.u32 8, %s20
      %s263 = sadd.s32 %s20, 1
      %s264 = smul.u32 8, %s263
      %p265 = scmp.lt.s32.totalorder %s19, 1
      %s266 = scalar_select %p265, %s19, 1
      %p267 = scmp.lt.s32.totalorder %s264, 15
      %s268 = scalar_select %p267, %s264, 15
      %s269 = smul.addr %s268, 2
      %s270 = smul.addr %s266, 32
      %s271 = sadd.s32 %s269, %s270
      %s272 = smul.addr %s271, 4
      %s273 = scalar_lea.vmem %s1, %s272
      %s274 = sadd.s32 %s20, 1
      %s275 = smul.u32 8, %s274
      %s276 = smul.u32 8, %s20
      %p277 = scmp.lt.s32.totalorder %s19, 1
      %s278 = scalar_select %p277, %s19, 1
      %p279 = scmp.lt.s32.totalorder %s276, 7
      %s280 = scalar_select %p279, %s276, 7
      %s281 = smul.addr %s278, 8
      %s282 = sadd.s32 %s280, %s281
      %s283 = smul.addr %s282, 4
      %s284 = scalar_lea.vmem %s4, %s283
      %s285 = smul.u32 8, %s20
      %v287 = vld [vmem:[%s261] sm:$0xf]
      %v288 = vld [vmem:[%s261 + $0x4] sm:$0x1]
      %v289 = vld [vmem:[%s261 + $0x8] sm:$0xf]
      %v290 = vld [vmem:[%s261 + $0xc] sm:$0x1]
      %v291 = vld [vmem:[%s261 + $0x10] sm:$0xf]
      %v292 = vld [vmem:[%s261 + $0x14] sm:$0x1]
      %v293 = vld [vmem:[%s261 + $0x18] sm:$0xf]
      %v294 = vld [vmem:[%s261 + $0x1c] sm:$0x1]
      %v295 = vld [vmem:[%s261 + $0x20] sm:$0xf]
      %v296 = vld [vmem:[%s261 + $0x24] sm:$0x1]
      %v297 = vld [vmem:[%s261 + $0x28] sm:$0xf]
      %v298 = vld [vmem:[%s261 + $0x2c] sm:$0x1]
      %v299 = vld [vmem:[%s261 + $0x30] sm:$0xf]
      %v300 = vld [vmem:[%s261 + $0x34] sm:$0x1]
      %v301 = vld [vmem:[%s261 + $0x38] sm:$0xf]
      %v302 = vld [vmem:[%s261 + $0x3c] sm:$0x1]
      %v303 = vld [vmem:[%s273] sm:$0xf]
      %v304 = vld [vmem:[%s273 + $0x4] sm:$0x1]
      %v305 = vld [vmem:[%s273 + $0x8] sm:$0xf]
      %v306 = vld [vmem:[%s273 + $0xc] sm:$0x1]
      %v307 = vld [vmem:[%s2] sm:$0xf]
      %v308 = vld [vmem:[%s2 + $0x4] sm:$0xf]
      %vm309 = vsmask.f32 3328
      %vm310 = vsmask.f32 7440
      %vm311 = vmor %vm309, %vm310
      %v313 = vshrl.u32 %v287, 16
      %v315 = vrot.slane %v313, 4
      %v316 = vshll.u32 %v287, 16
      %v318 = vrot.slane %v316, 5
      %v319 = vor.u32 %v315, %v318
      %v320 = vrot.slane %v319, 4
      %v322 = vshll.u32 %v288, 16
      %v324 = vrot.slane %v322, 5
      %v325 = vsel %vm311, %v320, %v324
      %v327 = vshrl.u32 %v289, 16
      %v329 = vrot.slane %v327, 4
      %v330 = vshll.u32 %v289, 16
      %v332 = vrot.slane %v330, 5
      %v333 = vor.u32 %v329, %v332
      %v334 = vrot.slane %v333, 4
      %v336 = vshll.u32 %v290, 16
      %v338 = vrot.slane %v336, 5
      %v339 = vsel %vm311, %v334, %v338
      %v341 = vshrl.u32 %v291, 16
      %v343 = vrot.slane %v341, 4
      %v344 = vshll.u32 %v291, 16
      %v346 = vrot.slane %v344, 5
      %v347 = vor.u32 %v343, %v346
      %v348 = vrot.slane %v347, 4
      %v350 = vshll.u32 %v292, 16
      %v352 = vrot.slane %v350, 5
      %v353 = vsel %vm311, %v348, %v352
      %v355 = vshrl.u32 %v293, 16
      %v357 = vrot.slane %v355, 4
      %v358 = vshll.u32 %v293, 16
      %v360 = vrot.slane %v358, 5
      %v361 = vor.u32 %v357, %v360
      %v362 = vrot.slane %v361, 4
      %v364 = vshll.u32 %v294, 16
      %v366 = vrot.slane %v364, 5
      %v367 = vsel %vm311, %v362, %v366
      %v369 = vshrl.u32 %v295, 16
      %v371 = vrot.slane %v369, 4
      %v372 = vshll.u32 %v295, 16
      %v374 = vrot.slane %v372, 5
      %v375 = vor.u32 %v371, %v374
      %v376 = vrot.slane %v375, 4
      %v378 = vshll.u32 %v296, 16
      %v380 = vrot.slane %v378, 5
      %v381 = vsel %vm311, %v376, %v380
      %v383 = vshrl.u32 %v297, 16
      %v385 = vrot.slane %v383, 4
      %v386 = vshll.u32 %v297, 16
      %v388 = vrot.slane %v386, 5
      %v389 = vor.u32 %v385, %v388
      %v390 = vrot.slane %v389, 4
      %v392 = vshll.u32 %v298, 16
      %v394 = vrot.slane %v392, 5
      %v395 = vsel %vm311, %v390, %v394
      %v397 = vshrl.u32 %v299, 16
      %v399 = vrot.slane %v397, 4
      %v400 = vshll.u32 %v299, 16
      %v402 = vrot.slane %v400, 5
      %v403 = vor.u32 %v399, %v402
      %v404 = vrot.slane %v403, 4
      %v406 = vshll.u32 %v300, 16
      %v408 = vrot.slane %v406, 5
      %v409 = vsel %vm311, %v404, %v408
      %v411 = vshrl.u32 %v301, 16
      %v413 = vrot.slane %v411, 4
      %v414 = vshll.u32 %v301, 16
      %v416 = vrot.slane %v414, 5
      %v417 = vor.u32 %v413, %v416
      %v418 = vrot.slane %v417, 4
      %v420 = vshll.u32 %v302, 16
      %v422 = vrot.slane %v420, 5
      %v423 = vsel %vm311, %v418, %v422
      %s424 = scalar_lea.vmem %s2, 8
      %v425 = vld [vmem:[%s424] sm:$0xf]
      %v426 = vld [vmem:[%s424 + $0x4] sm:$0xf]
      %v427 = vunpack.c.l.b16 %v325
      %v428 = vunpack.c.l.b16 %v339
      %v429 = vunpack.c.l.b16 %v353
      %v430 = vunpack.c.l.b16 %v367
      %v431 = vunpack.c.l.b16 %v381
      %v432 = vunpack.c.l.b16 %v395
      %v433 = vunpack.c.l.b16 %v409
      %v434 = vunpack.c.l.b16 %v423
      %v435 = vpack.c.b16 %v428, %v427
      %v436 = vpack.c.b16 %v430, %v429
      %v437 = vpack.c.b16 %v432, %v431
      %v438 = vpack.c.b16 %v434, %v433
      %v441 = vunpack.c.l.b16 %v425
      %v442 = vunpack.c.l.b16 %v426
      %v443 = vpack.c.b16 %v442, %v441
      %vm445 = vcmask 130048
      %v447 = vsel %vm445, %v435, 0
      %v450 = vsel %vm445, %v436, 0
      %v453 = vsel %vm445, %v437, 0
      %v456 = vsel %vm445, %v438, 0
      %458 = vmatprep.subr.bf16.mxu0 0
      %459 = vmatpush1.bf16.msra.mxu0 0
      %460 = vmatprep.subr.bf16.mxu0 0
      %461 = vmatpush1.bf16.msra.mxu0 0
      %462 = vmatprep.subr.bf16.mxu0 0
      %463 = vmatpush1.bf16.msra.mxu0 0
      %464 = vmatprep.subr.bf16.mxu0 0
      %465 = vmatpush1.bf16.msra.mxu0 0
      %466 = vmatprep.subr.bf16.mxu0 0
      %467 = vmatpush1.bf16.msra.mxu0 0
      %468 = vmatprep.subr.bf16.mxu0 0
      %469 = vmatpush1.bf16.msra.mxu0 0
      %470 = vmatprep.subr.bf16.mxu0 0
      %471 = vmatpush1.bf16.msra.mxu0 0
      %472 = vmatprep.subr.bf16.mxu0 0
      %473 = vmatpush1.bf16.msra.mxu0 %v443
      %474 = vmatprep.subr.bf16.mxu0 0
      %475 = vmatpush2.bf16.msra.mxu0 0
      %476 = vmatprep.subr.bf16.mxu0 0
      %477 = vmatpush2.bf16.msra.mxu0 0
      %478 = vmatprep.subr.bf16.mxu0 0
      %479 = vmatpush2.bf16.msra.mxu0 0
      %480 = vmatprep.subr.bf16.mxu0 0
      %481 = vmatpush2.bf16.msra.mxu0 0
      %482 = vmatprep.subr.bf16.mxu0 0
      %483 = vmatpush2.bf16.msra.mxu0 0
      %484 = vmatprep.subr.bf16.mxu0 0
      %485 = vmatpush2.bf16.msra.mxu0 0
      %486 = vmatprep.subr.bf16.mxu0 0
      %487 = vmatpush2.bf16.msra.mxu0 0
      %488 = vmatprep.subr.bf16.mxu0 0
      %489 = vmatpush2.bf16.msra.mxu0 0
      %490 = vmatprep.mubr.bf16.mxu0 0
      %491 = vmatmul.mubr.bf16.gmra.mxu0 %v447
      %v492 = vpop.f32.mrf.mxu0
      %v493 = vadd.f32 0.0, %v492
      %v494 = vpop.f32.mrf.mxu0
      %v495 = vpop.f32.mrf.mxu0
      %v496 = vadd.f32 0.0, %v495
      %v497 = vpop.f32.mrf.mxu0
      %498 = vmatprep.mubr.bf16.mxu0 0
      %499 = vmatmul.mubr.bf16.gmra.mxu0 %v450
      %v500 = vpop.f32.mrf.mxu0
      %v501 = vadd.f32 0.0, %v500
      %v502 = vpop.f32.mrf.mxu0
      %v503 = vpop.f32.mrf.mxu0
      %v504 = vadd.f32 0.0, %v503
      %v505 = vpop.f32.mrf.mxu0
      %506 = vmatprep.mubr.bf16.mxu0 0
      %507 = vmatmul.mubr.bf16.gmra.mxu0 %v453
      %v508 = vpop.f32.mrf.mxu0
      %v509 = vadd.f32 0.0, %v508
      %v510 = vpop.f32.mrf.mxu0
      %v511 = vpop.f32.mrf.mxu0
      %v512 = vadd.f32 0.0, %v511
      %v513 = vpop.f32.mrf.mxu0
      %514 = vmatprep.mubr.bf16.mxu0 0
      %515 = vmatmul.mubr.bf16.gmra.mxu0 %v456
      %v516 = vpop.f32.mrf.mxu0
      %v517 = vadd.f32 0.0, %v516
      %v518 = vpop.f32.mrf.mxu0
      %v519 = vpop.f32.mrf.mxu0
      %v520 = vadd.f32 0.0, %v519
      %v521 = vpop.f32.mrf.mxu0
      %522 = vdwg.mxu0
      %v531 = vunpack.c.l.b16 %v287
      %v532 = vunpack.c.l.b16 %v289
      %v533 = vunpack.c.l.b16 %v291
      %v534 = vunpack.c.l.b16 %v293
      %v535 = vunpack.c.l.b16 %v295
      %v536 = vunpack.c.l.b16 %v297
      %v537 = vunpack.c.l.b16 %v299
      %v538 = vunpack.c.l.b16 %v301
      %v539 = vpack.c.b16 %v532, %v531
      %v540 = vpack.c.b16 %v534, %v533
      %v541 = vpack.c.b16 %v536, %v535
      %v542 = vpack.c.b16 %v538, %v537
      %v545 = vunpack.c.l.b16 %v307
      %v546 = vunpack.c.l.b16 %v308
      %v547 = vpack.c.b16 %v546, %v545
      %v550 = vsel %vm445, %v539, 0
      %v553 = vsel %vm445, %v540, 0
      %v556 = vsel %vm445, %v541, 0
      %v559 = vsel %vm445, %v542, 0
      %561 = vmatprep.subr.bf16.mxu0 0
      %562 = vmatpush1.bf16.msra.mxu0 0
      %563 = vmatprep.subr.bf16.mxu0 0
      %564 = vmatpush1.bf16.msra.mxu0 0
      %565 = vmatprep.subr.bf16.mxu0 0
      %566 = vmatpush1.bf16.msra.mxu0 0
      %567 = vmatprep.subr.bf16.mxu0 0
      %568 = vmatpush1.bf16.msra.mxu0 0
      %569 = vmatprep.subr.bf16.mxu0 0
      %570 = vmatpush1.bf16.msra.mxu0 0
      %571 = vmatprep.subr.bf16.mxu0 0
      %572 = vmatpush1.bf16.msra.mxu0 0
      %573 = vmatprep.subr.bf16.mxu0 0
      %574 = vmatpush1.bf16.msra.mxu0 0
      %575 = vmatprep.subr.bf16.mxu0 0
      %576 = vmatpush1.bf16.msra.mxu0 %v547
      %577 = vmatprep.subr.bf16.mxu0 0
      %578 = vmatpush2.bf16.msra.mxu0 0
      %579 = vmatprep.subr.bf16.mxu0 0
      %580 = vmatpush2.bf16.msra.mxu0 0
      %581 = vmatprep.subr.bf16.mxu0 0
      %582 = vmatpush2.bf16.msra.mxu0 0
      %583 = vmatprep.subr.bf16.mxu0 0
      %584 = vmatpush2.bf16.msra.mxu0 0
      %585 = vmatprep.subr.bf16.mxu0 0
      %586 = vmatpush2.bf16.msra.mxu0 0
      %587 = vmatprep.subr.bf16.mxu0 0
      %588 = vmatpush2.bf16.msra.mxu0 0
      %589 = vmatprep.subr.bf16.mxu0 0
      %590 = vmatpush2.bf16.msra.mxu0 0
      %591 = vmatprep.subr.bf16.mxu0 0
      %592 = vmatpush2.bf16.msra.mxu0 0
      %593 = vmatprep.mubr.bf16.mxu0 0
      %594 = vmatmul.mubr.bf16.gmra.mxu0 %v550
      %v595 = vpop.f32.mrf.mxu0
      %v596 = vadd.f32 %v493, %v595
      %v597 = vpop.f32.mrf.mxu0
      %v598 = vpop.f32.mrf.mxu0
      %v599 = vadd.f32 %v496, %v598
      %v600 = vpop.f32.mrf.mxu0
      %601 = vmatprep.mubr.bf16.mxu0 0
      %602 = vmatmul.mubr.bf16.gmra.mxu0 %v553
      %v603 = vpop.f32.mrf.mxu0
      %v604 = vadd.f32 %v501, %v603
      %v605 = vpop.f32.mrf.mxu0
      %v606 = vpop.f32.mrf.mxu0
      %v607 = vadd.f32 %v504, %v606
      %v608 = vpop.f32.mrf.mxu0
      %609 = vmatprep.mubr.bf16.mxu0 0
      %610 = vmatmul.mubr.bf16.gmra.mxu0 %v556
      %v611 = vpop.f32.mrf.mxu0
      %v612 = vadd.f32 %v509, %v611
      %v613 = vpop.f32.mrf.mxu0
      %v614 = vpop.f32.mrf.mxu0
      %v615 = vadd.f32 %v512, %v614
      %v616 = vpop.f32.mrf.mxu0
      %617 = vmatprep.mubr.bf16.mxu0 0
      %618 = vmatmul.mubr.bf16.gmra.mxu0 %v559
      %v619 = vpop.f32.mrf.mxu0
      %v620 = vadd.f32 %v517, %v619
      %v621 = vpop.f32.mrf.mxu0
      %v622 = vpop.f32.mrf.mxu0
      %v623 = vadd.f32 %v520, %v622
      %v624 = vpop.f32.mrf.mxu0
      %625 = vdwg.mxu0
      %vm634 = vcmask 1042432
      %vm635 = vcmask 1046532
      %vm636 = vmor %vm634, %vm635
      %v637 = vrot.slane %v287, 5
      %v638 = vrot.slane %v637, 4
      %v639 = vrot.slane %v288, 5
      %v640 = vsel %vm636, %v638, %v639
      %v641 = vrot.slane %v289, 5
      %v642 = vrot.slane %v641, 4
      %v643 = vrot.slane %v290, 5
      %v644 = vsel %vm636, %v642, %v643
      %v645 = vrot.slane %v291, 5
      %v646 = vrot.slane %v645, 4
      %v647 = vrot.slane %v292, 5
      %v648 = vsel %vm636, %v646, %v647
      %v649 = vrot.slane %v293, 5
      %v650 = vrot.slane %v649, 4
      %v651 = vrot.slane %v294, 5
      %v652 = vsel %vm636, %v650, %v651
      %v653 = vrot.slane %v295, 5
      %v654 = vrot.slane %v653, 4
      %v655 = vrot.slane %v296, 5
      %v656 = vsel %vm636, %v654, %v655
      %v657 = vrot.slane %v297, 5
      %v658 = vrot.slane %v657, 4
      %v659 = vrot.slane %v298, 5
      %v660 = vsel %vm636, %v658, %v659
      %v661 = vrot.slane %v299, 5
      %v662 = vrot.slane %v661, 4
      %v663 = vrot.slane %v300, 5
      %v664 = vsel %vm636, %v662, %v663
      %v665 = vrot.slane %v301, 5
      %v666 = vrot.slane %v665, 4
      %v667 = vrot.slane %v302, 5
      %v668 = vsel %vm636, %v666, %v667
      %s669 = scalar_lea.vmem %s2, 16
      %v670 = vld [vmem:[%s669] sm:$0xf]
      %v671 = vld [vmem:[%s669 + $0x4] sm:$0xf]
      %v672 = vunpack.c.l.b16 %v640
      %v673 = vunpack.c.l.b16 %v644
      %v674 = vunpack.c.l.b16 %v648
      %v675 = vunpack.c.l.b16 %v652
      %v676 = vunpack.c.l.b16 %v656
      %v677 = vunpack.c.l.b16 %v660
      %v678 = vunpack.c.l.b16 %v664
      %v679 = vunpack.c.l.b16 %v668
      %v680 = vpack.c.b16 %v673, %v672
      %v681 = vpack.c.b16 %v675, %v674
      %v682 = vpack.c.b16 %v677, %v676
      %v683 = vpack.c.b16 %v679, %v678
      %v686 = vunpack.c.l.b16 %v670
      %v687 = vunpack.c.l.b16 %v671
      %v688 = vpack.c.b16 %v687, %v686
      %v691 = vsel %vm445, %v680, 0
      %v694 = vsel %vm445, %v681, 0
      %v697 = vsel %vm445, %v682, 0
      %v700 = vsel %vm445, %v683, 0
      %702 = vmatprep.subr.bf16.mxu0 0
      %703 = vmatpush1.bf16.msra.mxu0 0
      %704 = vmatprep.subr.bf16.mxu0 0
      %705 = vmatpush1.bf16.msra.mxu0 0
      %706 = vmatprep.subr.bf16.mxu0 0
      %707 = vmatpush1.bf16.msra.mxu0 0
      %708 = vmatprep.subr.bf16.mxu0 0
      %709 = vmatpush1.bf16.msra.mxu0 0
      %710 = vmatprep.subr.bf16.mxu0 0
      %711 = vmatpush1.bf16.msra.mxu0 0
      %712 = vmatprep.subr.bf16.mxu0 0
      %713 = vmatpush1.bf16.msra.mxu0 0
      %714 = vmatprep.subr.bf16.mxu0 0
      %715 = vmatpush1.bf16.msra.mxu0 0
      %716 = vmatprep.subr.bf16.mxu0 0
      %717 = vmatpush1.bf16.msra.mxu0 %v688
      %718 = vmatprep.subr.bf16.mxu0 0
      %719 = vmatpush2.bf16.msra.mxu0 0
      %720 = vmatprep.subr.bf16.mxu0 0
      %721 = vmatpush2.bf16.msra.mxu0 0
      %722 = vmatprep.subr.bf16.mxu0 0
      %723 = vmatpush2.bf16.msra.mxu0 0
      %724 = vmatprep.subr.bf16.mxu0 0
      %725 = vmatpush2.bf16.msra.mxu0 0
      %726 = vmatprep.subr.bf16.mxu0 0
      %727 = vmatpush2.bf16.msra.mxu0 0
      %728 = vmatprep.subr.bf16.mxu0 0
      %729 = vmatpush2.bf16.msra.mxu0 0
      %730 = vmatprep.subr.bf16.mxu0 0
      %731 = vmatpush2.bf16.msra.mxu0 0
      %732 = vmatprep.subr.bf16.mxu0 0
      %733 = vmatpush2.bf16.msra.mxu0 0
      %734 = vmatprep.mubr.bf16.mxu0 0
      %735 = vmatmul.mubr.bf16.gmra.mxu0 %v691
      %v736 = vpop.f32.mrf.mxu0
      %v737 = vadd.f32 0.0, %v736
      %v738 = vpop.f32.mrf.mxu0
      %v739 = vpop.f32.mrf.mxu0
      %v740 = vadd.f32 0.0, %v739
      %v741 = vpop.f32.mrf.mxu0
      %742 = vmatprep.mubr.bf16.mxu0 0
      %743 = vmatmul.mubr.bf16.gmra.mxu0 %v694
      %v744 = vpop.f32.mrf.mxu0
      %v745 = vadd.f32 0.0, %v744
      %v746 = vpop.f32.mrf.mxu0
      %v747 = vpop.f32.mrf.mxu0
      %v748 = vadd.f32 0.0, %v747
      %v749 = vpop.f32.mrf.mxu0
      %750 = vmatprep.mubr.bf16.mxu0 0
      %751 = vmatmul.mubr.bf16.gmra.mxu0 %v697
      %v752 = vpop.f32.mrf.mxu0
      %v753 = vadd.f32 0.0, %v752
      %v754 = vpop.f32.mrf.mxu0
      %v755 = vpop.f32.mrf.mxu0
      %v756 = vadd.f32 0.0, %v755
      %v757 = vpop.f32.mrf.mxu0
      %758 = vmatprep.mubr.bf16.mxu0 0
      %759 = vmatmul.mubr.bf16.gmra.mxu0 %v700
      %v760 = vpop.f32.mrf.mxu0
      %v761 = vadd.f32 0.0, %v760
      %v762 = vpop.f32.mrf.mxu0
      %v763 = vpop.f32.mrf.mxu0
      %v764 = vadd.f32 0.0, %v763
      %v765 = vpop.f32.mrf.mxu0
      %766 = vdwg.mxu0
      %v767 = vadd.f32 %v596, %v737
      %v768 = vadd.f32 %v599, %v740
      %v769 = vadd.f32 %v604, %v745
      %v770 = vadd.f32 %v607, %v748
      %v771 = vadd.f32 %v612, %v753
      %v772 = vadd.f32 %v615, %v756
      %v773 = vadd.f32 %v620, %v761
      %v774 = vadd.f32 %v623, %v764
      %s775 = scalar_lea.vmem %s2, 24
      %v776 = vld [vmem:[%s775] sm:$0xf]
      %v777 = vld [vmem:[%s775 + $0x4] sm:$0xf]
      %v779 = vunpack.c.l.b16 %v303
      %v780 = vpack.c.b16 %v533, %v532
      %v781 = vpack.c.b16 %v535, %v534
      %v782 = vpack.c.b16 %v537, %v536
      %v783 = vpack.c.b16 %v779, %v538
      %v786 = vunpack.c.l.b16 %v776
      %v787 = vunpack.c.l.b16 %v777
      %v788 = vpack.c.b16 %v787, %v786
      %v791 = vsel %vm445, %v780, 0
      %v794 = vsel %vm445, %v781, 0
      %v797 = vsel %vm445, %v782, 0
      %v800 = vsel %vm445, %v783, 0
      %802 = vmatprep.subr.bf16.mxu0 0
      %803 = vmatpush1.bf16.msra.mxu0 0
      %804 = vmatprep.subr.bf16.mxu0 0
      %805 = vmatpush1.bf16.msra.mxu0 0
      %806 = vmatprep.subr.bf16.mxu0 0
      %807 = vmatpush1.bf16.msra.mxu0 0
      %808 = vmatprep.subr.bf16.mxu0 0
      %809 = vmatpush1.bf16.msra.mxu0 0
      %810 = vmatprep.subr.bf16.mxu0 0
      %811 = vmatpush1.bf16.msra.mxu0 0
      %812 = vmatprep.subr.bf16.mxu0 0
      %813 = vmatpush1.bf16.msra.mxu0 0
      %814 = vmatprep.subr.bf16.mxu0 0
      %815 = vmatpush1.bf16.msra.mxu0 0
      %816 = vmatprep.subr.bf16.mxu0 0
      %817 = vmatpush1.bf16.msra.mxu0 %v788
      %818 = vmatprep.subr.bf16.mxu0 0
      %819 = vmatpush2.bf16.msra.mxu0 0
      %820 = vmatprep.subr.bf16.mxu0 0
      %821 = vmatpush2.bf16.msra.mxu0 0
      %822 = vmatprep.subr.bf16.mxu0 0
      %823 = vmatpush2.bf16.msra.mxu0 0
      %824 = vmatprep.subr.bf16.mxu0 0
      %825 = vmatpush2.bf16.msra.mxu0 0
      %826 = vmatprep.subr.bf16.mxu0 0
      %827 = vmatpush2.bf16.msra.mxu0 0
      %828 = vmatprep.subr.bf16.mxu0 0
      %829 = vmatpush2.bf16.msra.mxu0 0
      %830 = vmatprep.subr.bf16.mxu0 0
      %831 = vmatpush2.bf16.msra.mxu0 0
      %832 = vmatprep.subr.bf16.mxu0 0
      %833 = vmatpush2.bf16.msra.mxu0 0
      %834 = vmatprep.mubr.bf16.mxu0 0
      %835 = vmatmul.mubr.bf16.gmra.mxu0 %v791
      %v836 = vpop.f32.mrf.mxu0
      %v837 = vadd.f32 0.0, %v836
      %v838 = vpop.f32.mrf.mxu0
      %v839 = vpop.f32.mrf.mxu0
      %v840 = vadd.f32 0.0, %v839
      %v841 = vpop.f32.mrf.mxu0
      %842 = vmatprep.mubr.bf16.mxu0 0
      %843 = vmatmul.mubr.bf16.gmra.mxu0 %v794
      %v844 = vpop.f32.mrf.mxu0
      %v845 = vadd.f32 0.0, %v844
      %v846 = vpop.f32.mrf.mxu0
      %v847 = vpop.f32.mrf.mxu0
      %v848 = vadd.f32 0.0, %v847
      %v849 = vpop.f32.mrf.mxu0
      %850 = vmatprep.mubr.bf16.mxu0 0
      %851 = vmatmul.mubr.bf16.gmra.mxu0 %v797
      %v852 = vpop.f32.mrf.mxu0
      %v853 = vadd.f32 0.0, %v852
      %v854 = vpop.f32.mrf.mxu0
      %v855 = vpop.f32.mrf.mxu0
      %v856 = vadd.f32 0.0, %v855
      %v857 = vpop.f32.mrf.mxu0
      %858 = vmatprep.mubr.bf16.mxu0 0
      %859 = vmatmul.mubr.bf16.gmra.mxu0 %v800
      %v860 = vpop.f32.mrf.mxu0
      %v861 = vadd.f32 0.0, %v860
      %v862 = vpop.f32.mrf.mxu0
      %v863 = vpop.f32.mrf.mxu0
      %v864 = vadd.f32 0.0, %v863
      %v865 = vpop.f32.mrf.mxu0
      %866 = vdwg.mxu0
      %v867 = vadd.f32 %v767, %v837
      %v868 = vadd.f32 %v768, %v840
      %v869 = vadd.f32 %v769, %v845
      %v870 = vadd.f32 %v770, %v848
      %v871 = vadd.f32 %v771, %v853
      %v872 = vadd.f32 %v772, %v856
      %v873 = vadd.f32 %v773, %v861
      %v874 = vadd.f32 %v774, %v864
      %v876 = vshrl.u32 %v303, 16
      %v878 = vrot.slane %v876, 4
      %v879 = vshll.u32 %v303, 16
      %v881 = vrot.slane %v879, 5
      %v882 = vor.u32 %v878, %v881
      %v883 = vrot.slane %v882, 4
      %v885 = vshll.u32 %v304, 16
      %v887 = vrot.slane %v885, 5
      %v888 = vsel %vm311, %v883, %v887
      %s889 = scalar_lea.vmem %s2, 32
      %v890 = vld [vmem:[%s889] sm:$0xf]
      %v891 = vld [vmem:[%s889 + $0x4] sm:$0xf]
      %v892 = vunpack.c.l.b16 %v888
      %v893 = vpack.c.b16 %v429, %v428
      %v894 = vpack.c.b16 %v431, %v430
      %v895 = vpack.c.b16 %v433, %v432
      %v896 = vpack.c.b16 %v892, %v434
      %v899 = vunpack.c.l.b16 %v890
      %v900 = vunpack.c.l.b16 %v891
      %v901 = vpack.c.b16 %v900, %v899
      %v904 = vsel %vm445, %v893, 0
      %v907 = vsel %vm445, %v894, 0
      %v910 = vsel %vm445, %v895, 0
      %v913 = vsel %vm445, %v896, 0
      %915 = vmatprep.subr.bf16.mxu0 0
      %916 = vmatpush1.bf16.msra.mxu0 0
      %917 = vmatprep.subr.bf16.mxu0 0
      %918 = vmatpush1.bf16.msra.mxu0 0
      %919 = vmatprep.subr.bf16.mxu0 0
      %920 = vmatpush1.bf16.msra.mxu0 0
      %921 = vmatprep.subr.bf16.mxu0 0
      %922 = vmatpush1.bf16.msra.mxu0 0
      %923 = vmatprep.subr.bf16.mxu0 0
      %924 = vmatpush1.bf16.msra.mxu0 0
      %925 = vmatprep.subr.bf16.mxu0 0
      %926 = vmatpush1.bf16.msra.mxu0 0
      %927 = vmatprep.subr.bf16.mxu0 0
      %928 = vmatpush1.bf16.msra.mxu0 0
      %929 = vmatprep.subr.bf16.mxu0 0
      %930 = vmatpush1.bf16.msra.mxu0 %v901
      %931 = vmatprep.subr.bf16.mxu0 0
      %932 = vmatpush2.bf16.msra.mxu0 0
      %933 = vmatprep.subr.bf16.mxu0 0
      %934 = vmatpush2.bf16.msra.mxu0 0
      %935 = vmatprep.subr.bf16.mxu0 0
      %936 = vmatpush2.bf16.msra.mxu0 0
      %937 = vmatprep.subr.bf16.mxu0 0
      %938 = vmatpush2.bf16.msra.mxu0 0
      %939 = vmatprep.subr.bf16.mxu0 0
      %940 = vmatpush2.bf16.msra.mxu0 0
      %941 = vmatprep.subr.bf16.mxu0 0
      %942 = vmatpush2.bf16.msra.mxu0 0
      %943 = vmatprep.subr.bf16.mxu0 0
      %944 = vmatpush2.bf16.msra.mxu0 0
      %945 = vmatprep.subr.bf16.mxu0 0
      %946 = vmatpush2.bf16.msra.mxu0 0
      %947 = vmatprep.mubr.bf16.mxu0 0
      %948 = vmatmul.mubr.bf16.gmra.mxu0 %v904
      %v949 = vpop.f32.mrf.mxu0
      %v950 = vadd.f32 0.0, %v949
      %v951 = vpop.f32.mrf.mxu0
      %v952 = vpop.f32.mrf.mxu0
      %v953 = vadd.f32 0.0, %v952
      %v954 = vpop.f32.mrf.mxu0
      %955 = vmatprep.mubr.bf16.mxu0 0
      %956 = vmatmul.mubr.bf16.gmra.mxu0 %v907
      %v957 = vpop.f32.mrf.mxu0
      %v958 = vadd.f32 0.0, %v957
      %v959 = vpop.f32.mrf.mxu0
      %v960 = vpop.f32.mrf.mxu0
      %v961 = vadd.f32 0.0, %v960
      %v962 = vpop.f32.mrf.mxu0
      %963 = vmatprep.mubr.bf16.mxu0 0
      %964 = vmatmul.mubr.bf16.gmra.mxu0 %v910
      %v965 = vpop.f32.mrf.mxu0
      %v966 = vadd.f32 0.0, %v965
      %v967 = vpop.f32.mrf.mxu0
      %v968 = vpop.f32.mrf.mxu0
      %v969 = vadd.f32 0.0, %v968
      %v970 = vpop.f32.mrf.mxu0
      %971 = vmatprep.mubr.bf16.mxu0 0
      %972 = vmatmul.mubr.bf16.gmra.mxu0 %v913
      %v973 = vpop.f32.mrf.mxu0
      %v974 = vadd.f32 0.0, %v973
      %v975 = vpop.f32.mrf.mxu0
      %v976 = vpop.f32.mrf.mxu0
      %v977 = vadd.f32 0.0, %v976
      %v978 = vpop.f32.mrf.mxu0
      %979 = vdwg.mxu0
      %v980 = vadd.f32 %v867, %v950
      %v981 = vadd.f32 %v868, %v953
      %v982 = vadd.f32 %v869, %v958
      %v983 = vadd.f32 %v870, %v961
      %v984 = vadd.f32 %v871, %v966
      %v985 = vadd.f32 %v872, %v969
      %v986 = vadd.f32 %v873, %v974
      %v987 = vadd.f32 %v874, %v977
      %v989 = vrot.slane %v303, 5
      %v990 = vrot.slane %v989, 4
      %v991 = vrot.slane %v304, 5
      %v992 = vsel %vm636, %v990, %v991
      %s993 = scalar_lea.vmem %s2, 40
      %v994 = vld [vmem:[%s993] sm:$0xf]
      %v995 = vld [vmem:[%s993 + $0x4] sm:$0xf]
      %v996 = vunpack.c.l.b16 %v992
      %v997 = vpack.c.b16 %v674, %v673
      %v998 = vpack.c.b16 %v676, %v675
      %v999 = vpack.c.b16 %v678, %v677
      %v1000 = vpack.c.b16 %v996, %v679
      %v1003 = vunpack.c.l.b16 %v994
      %v1004 = vunpack.c.l.b16 %v995
      %v1005 = vpack.c.b16 %v1004, %v1003
      %v1008 = vsel %vm445, %v997, 0
      %v1011 = vsel %vm445, %v998, 0
      %v1014 = vsel %vm445, %v999, 0
      %v1017 = vsel %vm445, %v1000, 0
      %1019 = vmatprep.subr.bf16.mxu0 0
      %1020 = vmatpush1.bf16.msra.mxu0 0
      %1021 = vmatprep.subr.bf16.mxu0 0
      %1022 = vmatpush1.bf16.msra.mxu0 0
      %1023 = vmatprep.subr.bf16.mxu0 0
      %1024 = vmatpush1.bf16.msra.mxu0 0
      %1025 = vmatprep.subr.bf16.mxu0 0
      %1026 = vmatpush1.bf16.msra.mxu0 0
      %1027 = vmatprep.subr.bf16.mxu0 0
      %1028 = vmatpush1.bf16.msra.mxu0 0
      %1029 = vmatprep.subr.bf16.mxu0 0
      %1030 = vmatpush1.bf16.msra.mxu0 0
      %1031 = vmatprep.subr.bf16.mxu0 0
      %1032 = vmatpush1.bf16.msra.mxu0 0
      %1033 = vmatprep.subr.bf16.mxu0 0
      %1034 = vmatpush1.bf16.msra.mxu0 %v1005
      %1035 = vmatprep.subr.bf16.mxu0 0
      %1036 = vmatpush2.bf16.msra.mxu0 0
      %1037 = vmatprep.subr.bf16.mxu0 0
      %1038 = vmatpush2.bf16.msra.mxu0 0
      %1039 = vmatprep.subr.bf16.mxu0 0
      %1040 = vmatpush2.bf16.msra.mxu0 0
      %1041 = vmatprep.subr.bf16.mxu0 0
      %1042 = vmatpush2.bf16.msra.mxu0 0
      %1043 = vmatprep.subr.bf16.mxu0 0
      %1044 = vmatpush2.bf16.msra.mxu0 0
      %1045 = vmatprep.subr.bf16.mxu0 0
      %1046 = vmatpush2.bf16.msra.mxu0 0
      %1047 = vmatprep.subr.bf16.mxu0 0
      %1048 = vmatpush2.bf16.msra.mxu0 0
      %1049 = vmatprep.subr.bf16.mxu0 0
      %1050 = vmatpush2.bf16.msra.mxu0 0
      %1051 = vmatprep.mubr.bf16.mxu0 0
      %1052 = vmatmul.mubr.bf16.gmra.mxu0 %v1008
      %v1053 = vpop.f32.mrf.mxu0
      %v1054 = vadd.f32 0.0, %v1053
      %v1055 = vpop.f32.mrf.mxu0
      %v1056 = vpop.f32.mrf.mxu0
      %v1057 = vadd.f32 0.0, %v1056
      %v1058 = vpop.f32.mrf.mxu0
      %1059 = vmatprep.mubr.bf16.mxu0 0
      %1060 = vmatmul.mubr.bf16.gmra.mxu0 %v1011
      %v1061 = vpop.f32.mrf.mxu0
      %v1062 = vadd.f32 0.0, %v1061
      %v1063 = vpop.f32.mrf.mxu0
      %v1064 = vpop.f32.mrf.mxu0
      %v1065 = vadd.f32 0.0, %v1064
      %v1066 = vpop.f32.mrf.mxu0
      %1067 = vmatprep.mubr.bf16.mxu0 0
      %1068 = vmatmul.mubr.bf16.gmra.mxu0 %v1014
      %v1069 = vpop.f32.mrf.mxu0
      %v1070 = vadd.f32 0.0, %v1069
      %v1071 = vpop.f32.mrf.mxu0
      %v1072 = vpop.f32.mrf.mxu0
      %v1073 = vadd.f32 0.0, %v1072
      %v1074 = vpop.f32.mrf.mxu0
      %1075 = vmatprep.mubr.bf16.mxu0 0
      %1076 = vmatmul.mubr.bf16.gmra.mxu0 %v1017
      %v1077 = vpop.f32.mrf.mxu0
      %v1078 = vadd.f32 0.0, %v1077
      %v1079 = vpop.f32.mrf.mxu0
      %v1080 = vpop.f32.mrf.mxu0
      %v1081 = vadd.f32 0.0, %v1080
      %v1082 = vpop.f32.mrf.mxu0
      %1083 = vdwg.mxu0
      %v1084 = vadd.f32 %v980, %v1054
      %v1085 = vadd.f32 %v981, %v1057
      %v1086 = vadd.f32 %v982, %v1062
      %v1087 = vadd.f32 %v983, %v1065
      %v1088 = vadd.f32 %v984, %v1070
      %v1089 = vadd.f32 %v985, %v1073
      %v1090 = vadd.f32 %v986, %v1078
      %v1091 = vadd.f32 %v987, %v1081
      %s1092 = scalar_lea.vmem %s2, 48
      %v1093 = vld [vmem:[%s1092] sm:$0xf]
      %v1094 = vld [vmem:[%s1092 + $0x4] sm:$0xf]
      %v1096 = vunpack.c.l.b16 %v305
      %v1097 = vpack.c.b16 %v1096, %v779
      %v1100 = vunpack.c.l.b16 %v1093
      %v1101 = vunpack.c.l.b16 %v1094
      %v1102 = vpack.c.b16 %v1101, %v1100
      %v1105 = vsel %vm445, %v1097, 0
      %1107 = vmatprep.subr.bf16.mxu0 0
      %1108 = vmatpush1.bf16.msra.mxu0 0
      %1109 = vmatprep.subr.bf16.mxu0 0
      %1110 = vmatpush1.bf16.msra.mxu0 0
      %1111 = vmatprep.subr.bf16.mxu0 0
      %1112 = vmatpush1.bf16.msra.mxu0 0
      %1113 = vmatprep.subr.bf16.mxu0 0
      %1114 = vmatpush1.bf16.msra.mxu0 0
      %1115 = vmatprep.subr.bf16.mxu0 0
      %1116 = vmatpush1.bf16.msra.mxu0 0
      %1117 = vmatprep.subr.bf16.mxu0 0
      %1118 = vmatpush1.bf16.msra.mxu0 0
      %1119 = vmatprep.subr.bf16.mxu0 0
      %1120 = vmatpush1.bf16.msra.mxu0 0
      %1121 = vmatprep.subr.bf16.mxu0 0
      %1122 = vmatpush1.bf16.msra.mxu0 %v1102
      %1123 = vmatprep.subr.bf16.mxu0 0
      %1124 = vmatpush2.bf16.msra.mxu0 0
      %1125 = vmatprep.subr.bf16.mxu0 0
      %1126 = vmatpush2.bf16.msra.mxu0 0
      %1127 = vmatprep.subr.bf16.mxu0 0
      %1128 = vmatpush2.bf16.msra.mxu0 0
      %1129 = vmatprep.subr.bf16.mxu0 0
      %1130 = vmatpush2.bf16.msra.mxu0 0
      %1131 = vmatprep.subr.bf16.mxu0 0
      %1132 = vmatpush2.bf16.msra.mxu0 0
      %1133 = vmatprep.subr.bf16.mxu0 0
      %1134 = vmatpush2.bf16.msra.mxu0 0
      %1135 = vmatprep.subr.bf16.mxu0 0
      %1136 = vmatpush2.bf16.msra.mxu0 0
      %1137 = vmatprep.subr.bf16.mxu0 0
      %1138 = vmatpush2.bf16.msra.mxu0 0
      %1139 = vmatprep.mubr.bf16.mxu0 0
      %1140 = vmatmul.mubr.bf16.gmra.mxu0 %v553
      %v1141 = vpop.f32.mrf.mxu0
      %v1142 = vadd.f32 0.0, %v1141
      %v1143 = vpop.f32.mrf.mxu0
      %v1144 = vpop.f32.mrf.mxu0
      %v1145 = vadd.f32 0.0, %v1144
      %v1146 = vpop.f32.mrf.mxu0
      %1147 = vmatprep.mubr.bf16.mxu0 0
      %1148 = vmatmul.mubr.bf16.gmra.mxu0 %v556
      %v1149 = vpop.f32.mrf.mxu0
      %v1150 = vadd.f32 0.0, %v1149
      %v1151 = vpop.f32.mrf.mxu0
      %v1152 = vpop.f32.mrf.mxu0
      %v1153 = vadd.f32 0.0, %v1152
      %v1154 = vpop.f32.mrf.mxu0
      %1155 = vmatprep.mubr.bf16.mxu0 0
      %1156 = vmatmul.mubr.bf16.gmra.mxu0 %v559
      %v1157 = vpop.f32.mrf.mxu0
      %v1158 = vadd.f32 0.0, %v1157
      %v1159 = vpop.f32.mrf.mxu0
      %v1160 = vpop.f32.mrf.mxu0
      %v1161 = vadd.f32 0.0, %v1160
      %v1162 = vpop.f32.mrf.mxu0
      %1163 = vmatprep.mubr.bf16.mxu0 0
      %1164 = vmatmul.mubr.bf16.gmra.mxu0 %v1105
      %v1165 = vpop.f32.mrf.mxu0
      %v1166 = vadd.f32 0.0, %v1165
      %v1167 = vpop.f32.mrf.mxu0
      %v1168 = vpop.f32.mrf.mxu0
      %v1169 = vadd.f32 0.0, %v1168
      %v1170 = vpop.f32.mrf.mxu0
      %1171 = vdwg.mxu0
      %v1172 = vadd.f32 %v1084, %v1142
      %v1173 = vadd.f32 %v1085, %v1145
      %v1174 = vadd.f32 %v1086, %v1150
      %v1175 = vadd.f32 %v1087, %v1153
      %v1176 = vadd.f32 %v1088, %v1158
      %v1177 = vadd.f32 %v1089, %v1161
      %v1178 = vadd.f32 %v1090, %v1166
      %v1179 = vadd.f32 %v1091, %v1169
      %v1181 = vshrl.u32 %v305, 16
      %v1183 = vrot.slane %v1181, 4
      %v1184 = vshll.u32 %v305, 16
      %v1186 = vrot.slane %v1184, 5
      %v1187 = vor.u32 %v1183, %v1186
      %v1188 = vrot.slane %v1187, 4
      %v1190 = vshll.u32 %v306, 16
      %v1192 = vrot.slane %v1190, 5
      %v1193 = vsel %vm311, %v1188, %v1192
      %s1194 = scalar_lea.vmem %s2, 56
      %v1195 = vld [vmem:[%s1194] sm:$0xf]
      %v1196 = vld [vmem:[%s1194 + $0x4] sm:$0xf]
      %v1197 = vunpack.c.l.b16 %v1193
      %v1198 = vpack.c.b16 %v1197, %v892
      %v1201 = vunpack.c.l.b16 %v1195
      %v1202 = vunpack.c.l.b16 %v1196
      %v1203 = vpack.c.b16 %v1202, %v1201
      %v1206 = vsel %vm445, %v1198, 0
      %1208 = vmatprep.subr.bf16.mxu0 0
      %1209 = vmatpush1.bf16.msra.mxu0 0
      %1210 = vmatprep.subr.bf16.mxu0 0
      %1211 = vmatpush1.bf16.msra.mxu0 0
      %1212 = vmatprep.subr.bf16.mxu0 0
      %1213 = vmatpush1.bf16.msra.mxu0 0
      %1214 = vmatprep.subr.bf16.mxu0 0
      %1215 = vmatpush1.bf16.msra.mxu0 0
      %1216 = vmatprep.subr.bf16.mxu0 0
      %1217 = vmatpush1.bf16.msra.mxu0 0
      %1218 = vmatprep.subr.bf16.mxu0 0
      %1219 = vmatpush1.bf16.msra.mxu0 0
      %1220 = vmatprep.subr.bf16.mxu0 0
      %1221 = vmatpush1.bf16.msra.mxu0 0
      %1222 = vmatprep.subr.bf16.mxu0 0
      %1223 = vmatpush1.bf16.msra.mxu0 %v1203
      %1224 = vmatprep.subr.bf16.mxu0 0
      %1225 = vmatpush2.bf16.msra.mxu0 0
      %1226 = vmatprep.subr.bf16.mxu0 0
      %1227 = vmatpush2.bf16.msra.mxu0 0
      %1228 = vmatprep.subr.bf16.mxu0 0
      %1229 = vmatpush2.bf16.msra.mxu0 0
      %1230 = vmatprep.subr.bf16.mxu0 0
      %1231 = vmatpush2.bf16.msra.mxu0 0
      %1232 = vmatprep.subr.bf16.mxu0 0
      %1233 = vmatpush2.bf16.msra.mxu0 0
      %1234 = vmatprep.subr.bf16.mxu0 0
      %1235 = vmatpush2.bf16.msra.mxu0 0
      %1236 = vmatprep.subr.bf16.mxu0 0
      %1237 = vmatpush2.bf16.msra.mxu0 0
      %1238 = vmatprep.subr.bf16.mxu0 0
      %1239 = vmatpush2.bf16.msra.mxu0 0
      %1240 = vmatprep.mubr.bf16.mxu0 0
      %1241 = vmatmul.mubr.bf16.gmra.mxu0 %v450
      %v1242 = vpop.f32.mrf.mxu0
      %v1243 = vadd.f32 0.0, %v1242
      %v1244 = vpop.f32.mrf.mxu0
      %v1245 = vpop.f32.mrf.mxu0
      %v1246 = vadd.f32 0.0, %v1245
      %v1247 = vpop.f32.mrf.mxu0
      %1248 = vmatprep.mubr.bf16.mxu0 0
      %1249 = vmatmul.mubr.bf16.gmra.mxu0 %v453
      %v1250 = vpop.f32.mrf.mxu0
      %v1251 = vadd.f32 0.0, %v1250
      %v1252 = vpop.f32.mrf.mxu0
      %v1253 = vpop.f32.mrf.mxu0
      %v1254 = vadd.f32 0.0, %v1253
      %v1255 = vpop.f32.mrf.mxu0
      %1256 = vmatprep.mubr.bf16.mxu0 0
      %1257 = vmatmul.mubr.bf16.gmra.mxu0 %v456
      %v1258 = vpop.f32.mrf.mxu0
      %v1259 = vadd.f32 0.0, %v1258
      %v1260 = vpop.f32.mrf.mxu0
      %v1261 = vpop.f32.mrf.mxu0
      %v1262 = vadd.f32 0.0, %v1261
      %v1263 = vpop.f32.mrf.mxu0
      %1264 = vmatprep.mubr.bf16.mxu0 0
      %1265 = vmatmul.mubr.bf16.gmra.mxu0 %v1206
      %v1266 = vpop.f32.mrf.mxu0
      %v1267 = vadd.f32 0.0, %v1266
      %v1268 = vpop.f32.mrf.mxu0
      %v1269 = vpop.f32.mrf.mxu0
      %v1270 = vadd.f32 0.0, %v1269
      %v1271 = vpop.f32.mrf.mxu0
      %1272 = vdwg.mxu0
      %v1273 = vadd.f32 %v1172, %v1243
      %v1274 = vadd.f32 %v1173, %v1246
      %v1275 = vadd.f32 %v1174, %v1251
      %v1276 = vadd.f32 %v1175, %v1254
      %v1277 = vadd.f32 %v1176, %v1259
      %v1278 = vadd.f32 %v1177, %v1262
      %v1279 = vadd.f32 %v1178, %v1267
      %v1280 = vadd.f32 %v1179, %v1270
      %v1282 = vrot.slane %v305, 5
      %v1283 = vrot.slane %v1282, 4
      %v1284 = vrot.slane %v306, 5
      %v1285 = vsel %vm636, %v1283, %v1284
      %s1286 = scalar_lea.vmem %s2, 64
      %v1287 = vld [vmem:[%s1286] sm:$0xf]
      %v1288 = vld [vmem:[%s1286 + $0x4] sm:$0xf]
      %v1289 = vunpack.c.l.b16 %v1285
      %v1290 = vpack.c.b16 %v1289, %v996
      %v1293 = vunpack.c.l.b16 %v1287
      %v1294 = vunpack.c.l.b16 %v1288
      %v1295 = vpack.c.b16 %v1294, %v1293
      %v1298 = vsel %vm445, %v1290, 0
      %1300 = vmatprep.subr.bf16.mxu0 0
      %1301 = vmatpush1.bf16.msra.mxu0 0
      %1302 = vmatprep.subr.bf16.mxu0 0
      %1303 = vmatpush1.bf16.msra.mxu0 0
      %1304 = vmatprep.subr.bf16.mxu0 0
      %1305 = vmatpush1.bf16.msra.mxu0 0
      %1306 = vmatprep.subr.bf16.mxu0 0
      %1307 = vmatpush1.bf16.msra.mxu0 0
      %1308 = vmatprep.subr.bf16.mxu0 0
      %1309 = vmatpush1.bf16.msra.mxu0 0
      %1310 = vmatprep.subr.bf16.mxu0 0
      %1311 = vmatpush1.bf16.msra.mxu0 0
      %1312 = vmatprep.subr.bf16.mxu0 0
      %1313 = vmatpush1.bf16.msra.mxu0 0
      %1314 = vmatprep.subr.bf16.mxu0 0
      %1315 = vmatpush1.bf16.msra.mxu0 %v1295
      %1316 = vmatprep.subr.bf16.mxu0 0
      %1317 = vmatpush2.bf16.msra.mxu0 0
      %1318 = vmatprep.subr.bf16.mxu0 0
      %1319 = vmatpush2.bf16.msra.mxu0 0
      %1320 = vmatprep.subr.bf16.mxu0 0
      %1321 = vmatpush2.bf16.msra.mxu0 0
      %1322 = vmatprep.subr.bf16.mxu0 0
      %1323 = vmatpush2.bf16.msra.mxu0 0
      %1324 = vmatprep.subr.bf16.mxu0 0
      %1325 = vmatpush2.bf16.msra.mxu0 0
      %1326 = vmatprep.subr.bf16.mxu0 0
      %1327 = vmatpush2.bf16.msra.mxu0 0
      %1328 = vmatprep.subr.bf16.mxu0 0
      %1329 = vmatpush2.bf16.msra.mxu0 0
      %1330 = vmatprep.subr.bf16.mxu0 0
      %1331 = vmatpush2.bf16.msra.mxu0 0
      %1332 = vmatprep.mubr.bf16.mxu0 0
      %1333 = vmatmul.mubr.bf16.gmra.mxu0 %v694
      %v1334 = vpop.f32.mrf.mxu0
      %v1335 = vadd.f32 0.0, %v1334
      %v1336 = vpop.f32.mrf.mxu0
      %v1337 = vpop.f32.mrf.mxu0
      %v1338 = vadd.f32 0.0, %v1337
      %v1339 = vpop.f32.mrf.mxu0
      %1340 = vmatprep.mubr.bf16.mxu0 0
      %1341 = vmatmul.mubr.bf16.gmra.mxu0 %v697
      %v1342 = vpop.f32.mrf.mxu0
      %v1343 = vadd.f32 0.0, %v1342
      %v1344 = vpop.f32.mrf.mxu0
      %v1345 = vpop.f32.mrf.mxu0
      %v1346 = vadd.f32 0.0, %v1345
      %v1347 = vpop.f32.mrf.mxu0
      %1348 = vmatprep.mubr.bf16.mxu0 0
      %1349 = vmatmul.mubr.bf16.gmra.mxu0 %v700
      %v1350 = vpop.f32.mrf.mxu0
      %v1351 = vadd.f32 0.0, %v1350
      %v1352 = vpop.f32.mrf.mxu0
      %v1353 = vpop.f32.mrf.mxu0
      %v1354 = vadd.f32 0.0, %v1353
      %v1355 = vpop.f32.mrf.mxu0
      %1356 = vmatprep.mubr.bf16.mxu0 0
      %1357 = vmatmul.mubr.bf16.gmra.mxu0 %v1298
      %v1358 = vpop.f32.mrf.mxu0
      %v1359 = vadd.f32 0.0, %v1358
      %v1360 = vpop.f32.mrf.mxu0
      %v1361 = vpop.f32.mrf.mxu0
      %v1362 = vadd.f32 0.0, %v1361
      %v1363 = vpop.f32.mrf.mxu0
      %1364 = vdwg.mxu0
      %v1365 = vadd.f32 %v1273, %v1335
      %v1366 = vadd.f32 %v1274, %v1338
      %v1367 = vadd.f32 %v1275, %v1343
      %v1368 = vadd.f32 %v1276, %v1346
      %v1369 = vadd.f32 %v1277, %v1351
      %v1370 = vadd.f32 %v1278, %v1354
      %v1371 = vadd.f32 %v1279, %v1359
      %v1372 = vadd.f32 %v1280, %v1362
      %v1373 = vld [vmem:[%s3] sm:$0x1]
      %v1375 = vlaneseq
      %v1376 = vshrl.u32 %v1375, 7
      %v1377 = vsub.s32 0, %v1376
      %v1378 = vrot.slane %v1373, %v1377
      %v1380 = vadd.f32 %v1365, %v1378
      %v1381 = vadd.f32 %v1366, %v1378
      %v1382 = vadd.f32 %v1367, %v1378
      %v1383 = vadd.f32 %v1368, %v1378
      %v1384 = vadd.f32 %v1369, %v1378
      %v1385 = vadd.f32 %v1370, %v1378
      %v1386 = vadd.f32 %v1371, %v1378
      %v1387 = vadd.f32 %v1372, %v1378
      %v1388 = vmax.f32 %v1380, 0.0
      %v1389 = vmax.f32 %v1381, 0.0
      %v1390 = vmax.f32 %v1382, 0.0
      %v1391 = vmax.f32 %v1383, 0.0
      %v1392 = vmax.f32 %v1384, 0.0
      %v1393 = vmax.f32 %v1385, 0.0
      %v1394 = vmax.f32 %v1386, 0.0
      %v1395 = vmax.f32 %v1387, 0.0
      %v1396 = vpack.c.bf16 %v1389, %v1388
      %v1397 = vpack.c.bf16 %v1391, %v1390
      %v1398 = vpack.c.bf16 %v1393, %v1392
      %v1399 = vpack.c.bf16 %v1395, %v1394
      %v1404 = vunpack.c.l.b16 %v1396
      %v1405 = vunpack.c.h.b16 %v1396
      %v1406 = vunpack.c.l.b16 %v1397
      %v1407 = vunpack.c.h.b16 %v1397
      %v1408 = vunpack.c.l.b16 %v1398
      %v1409 = vunpack.c.h.b16 %v1398
      %v1410 = vunpack.c.l.b16 %v1399
      %v1411 = vunpack.c.h.b16 %v1399
      %v1412 = vpack.c.b16 %v1404, %v1404
      %v1413 = vpack.c.b16 %v1405, %v1405
      %v1414 = vpack.c.b16 %v1406, %v1406
      %v1415 = vpack.c.b16 %v1407, %v1407
      %v1416 = vpack.c.b16 %v1408, %v1408
      %v1417 = vpack.c.b16 %v1409, %v1409
      %v1418 = vpack.c.b16 %v1410, %v1410
      %v1419 = vpack.c.b16 %v1411, %v1411
      %vm1428 = vcmask 257024
      %1429 = vst.msk [vmem:[%s284] sm:$0xf] %vm1428, %v1412
      %1430 = vst.msk [vmem:[%s284 + $0x4] sm:$0xf] %vm1428, %v1413
      %1431 = vst.msk [vmem:[%s284 + $0x8] sm:$0xf] %vm1428, %v1414
      %1432 = vst.msk [vmem:[%s284 + $0xc] sm:$0xf] %vm1428, %v1415
      %1433 = vst.msk [vmem:[%s284 + $0x10] sm:$0xf] %vm1428, %v1416
      %1434 = vst.msk [vmem:[%s284 + $0x14] sm:$0xf] %vm1428, %v1417
      %1435 = vst.msk [vmem:[%s284 + $0x18] sm:$0xf] %vm1428, %v1418
      %1436 = vst.msk [vmem:[%s284 + $0x1c] sm:$0xf] %vm1428, %v1419
      %s1437 = smul.u32 8, %s20
      %p1438 = scmp.lt.s32.totalorder %s19, 1
      %s1439 = scalar_select %p1438, %s19, 1
      %p1440 = scmp.lt.s32.totalorder %s1437, 7
      %s1441 = scalar_select %p1440, %s1437, 7
      %s1442 = smul.addr %s1439, 8
      %s1443 = sadd.s32 %s1441, %s1442
      %s1444 = smul.addr %s1443, 4
      %s1445 = scalar_lea.vmem %s4, %s1444
      // Predicated region
      $region37: #{ocrnet_forward.5} parent=35 // pred_check
        %p1446 = pneg %p147
      $region38: #{ocrnet_forward.5} parent=35 // pred_check_branch
        %1448 = sbr.rel (%p1446) target = $region40
      $region39: #{ocrnet_forward.5} parent=35 // pred_region
        %s1449 = smul.u32 8, %s20
      $region40: #{ocrnet_forward.5} parent=35 // pred_fallthru
        _
    $region36: #{ocrnet_forward.5} parent=5 // pred_fallthru
      _
    %p1450 = scmp.le.s32.totalorder 2, %s10
    // Predicated region
    $region41: #{ocrnet_forward.5} parent=5 // pred_check
      %p1451 = pneg %p1450
    $region42: #{ocrnet_forward.5} parent=5 // pred_check_branch
      %1453 = sbr.rel (%p1451) target = $region44
    $region43: #{ocrnet_forward.5} parent=5 // pred_region
      %s1454 = ssub.s32 %s10, 2
      // Predicated region
      $region45: #{ocrnet_forward.5} parent=43 // pred_check
        %p1455 = pneg %p153
      $region46: #{ocrnet_forward.5} parent=43 // pred_check_branch
        %1457 = sbr.rel (%p1455) target = $region48
      $region47: #{ocrnet_forward.5} parent=43 // pred_region
        %s1458 = smul.u32 8, %s22
        %p1459 = scmp.lt.s32.totalorder %s21, 1
        %s1460 = scalar_select %p1459, %s21, 1
        %p1461 = scmp.lt.s32.totalorder %s1458, 7
        %s1462 = scalar_select %p1461, %s1458, 7
        %s1463 = smul.addr %s1460, 8
        %s1464 = sadd.s32 %s1462, %s1463
        %s1465 = smul.addr %s1464, 4
        %s1466 = scalar_lea.vmem %s4, %s1465
      $region48: #{ocrnet_forward.5} parent=43 // pred_fallthru
        _
    $region44: #{ocrnet_forward.5} parent=5 // pred_fallthru
      _
  $region6: #{ocrnet_forward.5} parent=0 // loop_footer
    %s14 = sadd.s32 1, %s10
  $region7: #{ocrnet_forward.5} parent=0 // loop_footer_branch
    %9 = sbr.rel target = $region3
  $region8: #{ocrnet_forward.5} parent=0 // loop_exit
    _

// kernel: ocrnet_forward.6
$region0: #{ocrnet_forward.6}
  #allocation0 [shape = 'u32[]', space=smem, size = 0x4, offset = 0x4, fixed_abs, tag = 'smem constant byte address 0x4 - core index']
  #allocation1 [shape = 'u32[144,128]{1,0:T(1,128)}', space=vmem, size = 0x12000, scoped, tag = 'internal scratch']
  #allocation2 [shape = 'f32[1,4]{1,0:T(1,128)}', space=vmem, size = 0x200, scoped, tag = 'scratch operand']
  #allocation3 [shape = 'f32[1,4]{1,0:T(1,128)}', space=vmem, size = 0x200, scoped, tag = 'scratch operand']
  #allocation4 [shape = 'f32[32,4]{1,0:T(8,128)}', space=vmem, size = 0x4000, scoped, tag = 'scratch operand']
  %s0 = inlined_call_operand.vmem [shape: f32[2,64,128], index: 0, kind: input, shape index: {}]
  %s1 = inlined_call_operand.vmem [shape: bf16[2,64,32], index: 1, kind: input, shape index: {}]
  %s2 = inlined_call_operand.vmem [shape: bf16[32,16], index: 2, kind: input, shape index: {}]
  %s3 = inlined_call_operand.vmem [shape: f32[16,1], index: 3, kind: input, shape index: {}]
  %s4 = inlined_call_operand.vmem [shape: bf16[16,16], index: 4, kind: input, shape index: {}]
  %s5 = inlined_call_operand.vmem [shape: f32[16,1], index: 5, kind: input, shape index: {}]
  %s6 = inlined_call_operand.vmem [shape: bf16[32,16], index: 6, kind: input, shape index: {}]
  %s7 = inlined_call_operand.vmem [shape: f32[16,1], index: 7, kind: input, shape index: {}]
  %s8 = inlined_call_operand.vmem [shape: bf16[2,16,4], index: 8, kind: output, shape index: {0}]
  %s9 = inlined_call_operand.vmem [shape: bf16[2,16,4], index: 9, kind: output, shape index: {1}]
  %10 = xla_tuple %s8, %s9
  %s11 = sld [smem:[#allocation0]]
  $region81: #{ocrnet_forward.6} parent=0
    _
  %s13 = ssub.s32 1, %s11
  %s14 = scalar_select 0, %s13, %s11
  loop: start=0, step=1, limit=6
  $region2: #{ocrnet_forward.6} parent=0 // loop_pre_header
    _
  $region3: #{ocrnet_forward.6} parent=0 // loop_header
    %s16 = sphi 0, %s20
    %p17 = scmp.ge.s32.totalorder %s16, 6
    %s23 = sphi 0, %s35
    %s24 = sphi 0, %s31
    %s25 = sphi 0, %s23
    %s26 = sphi 0, %s24
    %s27 = sphi 0, %s25
    %s28 = sphi 0, %s26
    %s40 = sphi 0, %s42
    %s43 = sphi 0, %s40
    %s44 = sphi 0, %s43
    %s60 = sphi 0, %s44
    %s68 = sphi 0, %s70
    %s71 = sphi 0, %s68
    %s72 = sphi 0, %s71
    %s88 = sphi 0, %s72
    %s92 = sphi 0, %s92
    %s94 = sphi 0, %s92
    %s95 = sphi 0, %s94
    %s109 = sphi 0, %s95
    %s113 = sphi 0, %s113
    %s115 = sphi 0, %s113
    %s116 = sphi 0, %s115
    %s130 = sphi 0, %s116
    %s134 = sphi 0, %s134
    %s136 = sphi 0, %s134
    %s137 = sphi 0, %s136
    %s151 = sphi 0, %s137
    %s155 = sphi 0, %s155
    %s157 = sphi 0, %s155
    %s158 = sphi 0, %s157
    %s172 = sphi 0, %s158
    %s176 = sphi 0, %s176
    %s178 = sphi 0, %s176
    %s179 = sphi 0, %s178
    %s193 = sphi 0, %s179
    %s197 = sphi 0, %s197
    %s199 = sphi 0, %s197
    %s200 = sphi 0, %s199
    %s214 = sphi 0, %s200
    %s220 = sphi 0, %s222
    %s223 = sphi 0, %s220
    %s224 = sphi 0, %s223
    %s240 = sphi 0, %s224
    %s246 = sphi 0, %s248
    %s249 = sphi 0, %s246
    %s250 = sphi 0, %s249
    %s266 = sphi 0, %s250
  $region4: #{ocrnet_forward.6} parent=0 // loop_header_branch
    %19 = sbr.rel (%p17) target = $region8
  $region5: #{ocrnet_forward.6} parent=0 // loop_body
    %s21 = ssub.s32 %s16, 1
    %s22 = ssub.s32 %s16, 2
    %s29 = sadd.s32 1, %s24
    %p30 = scmp.ge.s32.totalorder %s29, 2
    %s31 = scalar_select %p30, 0, %s29
    %s32 = sadd.s32 1, %s23
    %s33 = scalar_select %p30, %s32, %s23
    %p34 = scmp.ge.s32.totalorder %s33, 2
    %s35 = scalar_select %p34, 0, %s33
    %s36 = ssub.s32 %s23, %s35
    %s37 = ssub.s32 %s24, %s31
    %s38 = sor.u32 %s36, %s37
    %p39 = scmp.eq.s32.totalorder %s38, 0
    %s41 = sadd.s32 %s40, 1
    %s42 = scalar_select %p39, %s40, %s41
    %p45 = pneg %p39
    %p46 = scmp.eq.s32.totalorder %s16, 3
    %p47 = por %p45, %p46
    %p48 = scmp.ne.s32.totalorder %s40, %s43
    %p49 = scmp.eq.s32.totalorder %s16, 0
    %p50 = por %p48, %p49
    %p51 = scmp.ne.s32.totalorder %s40, %s43
    %p52 = scmp.eq.s32.totalorder %s21, 3
    %p53 = por %p51, %p52
    %p54 = scmp.ne.s32.totalorder %s43, %s44
    %p55 = scmp.eq.s32.totalorder %s21, 0
    %p56 = por %p54, %p55
    %p57 = scmp.ne.s32.totalorder %s43, %s44
    %p58 = scmp.eq.s32.totalorder %s22, 3
    %p59 = por %p57, %p58
    %p61 = scmp.ne.s32.totalorder %s44, %s60
    %p62 = scmp.eq.s32.totalorder %s22, 0
    %p63 = por %p61, %p62
    %s64 = ssub.s32 %s23, %s35
    %s65 = ssub.s32 %s24, %s31
    %s66 = sor.u32 %s64, %s65
    %p67 = scmp.eq.s32.totalorder %s66, 0
    %s69 = sadd.s32 %s68, 1
    %s70 = scalar_select %p67, %s68, %s69
    %p73 = pneg %p67
    %p74 = scmp.eq.s32.totalorder %s16, 3
    %p75 = por %p73, %p74
    %p76 = scmp.ne.s32.totalorder %s68, %s71
    %p77 = scmp.eq.s32.totalorder %s16, 0
    %p78 = por %p76, %p77
    %p79 = scmp.ne.s32.totalorder %s68, %s71
    %p80 = scmp.eq.s32.totalorder %s21, 3
    %p81 = por %p79, %p80
    %p82 = scmp.ne.s32.totalorder %s71, %s72
    %p83 = scmp.eq.s32.totalorder %s21, 0
    %p84 = por %p82, %p83
    %p85 = scmp.ne.s32.totalorder %s71, %s72
    %p86 = scmp.eq.s32.totalorder %s22, 3
    %p87 = por %p85, %p86
    %p89 = scmp.ne.s32.totalorder %s72, %s88
    %p90 = scmp.eq.s32.totalorder %s22, 0
    %p91 = por %p89, %p90
    %s93 = sadd.s32 %s92, 1
    %p96 = scmp.eq.s32.totalorder %s16, 3
    %p97 = scmp.ne.s32.totalorder %s92, %s94
    %p98 = scmp.eq.s32.totalorder %s16, 0
    %p99 = por %p97, %p98
    %p100 = scmp.ne.s32.totalorder %s92, %s94
    %p101 = scmp.eq.s32.totalorder %s21, 3
    %p102 = por %p100, %p101
    %p103 = scmp.ne.s32.totalorder %s94, %s95
    %p104 = scmp.eq.s32.totalorder %s21, 0
    %p105 = por %p103, %p104
    %p106 = scmp.ne.s32.totalorder %s94, %s95
    %p107 = scmp.eq.s32.totalorder %s22, 3
    %p108 = por %p106, %p107
    %p110 = scmp.ne.s32.totalorder %s95, %s109
    %p111 = scmp.eq.s32.totalorder %s22, 0
    %p112 = por %p110, %p111
    %s114 = sadd.s32 %s113, 1
    %p117 = scmp.eq.s32.totalorder %s16, 3
    %p118 = scmp.ne.s32.totalorder %s113, %s115
    %p119 = scmp.eq.s32.totalorder %s16, 0
    %p120 = por %p118, %p119
    %p121 = scmp.ne.s32.totalorder %s113, %s115
    %p122 = scmp.eq.s32.totalorder %s21, 3
    %p123 = por %p121, %p122
    %p124 = scmp.ne.s32.totalorder %s115, %s116
    %p125 = scmp.eq.s32.totalorder %s21, 0
    %p126 = por %p124, %p125
    %p127 = scmp.ne.s32.totalorder %s115, %s116
    %p128 = scmp.eq.s32.totalorder %s22, 3
    %p129 = por %p127, %p128
    %p131 = scmp.ne.s32.totalorder %s116, %s130
    %p132 = scmp.eq.s32.totalorder %s22, 0
    %p133 = por %p131, %p132
    %s135 = sadd.s32 %s134, 1
    %p138 = scmp.eq.s32.totalorder %s16, 3
    %p139 = scmp.ne.s32.totalorder %s134, %s136
    %p140 = scmp.eq.s32.totalorder %s16, 0
    %p141 = por %p139, %p140
    %p142 = scmp.ne.s32.totalorder %s134, %s136
    %p143 = scmp.eq.s32.totalorder %s21, 3
    %p144 = por %p142, %p143
    %p145 = scmp.ne.s32.totalorder %s136, %s137
    %p146 = scmp.eq.s32.totalorder %s21, 0
    %p147 = por %p145, %p146
    %p148 = scmp.ne.s32.totalorder %s136, %s137
    %p149 = scmp.eq.s32.totalorder %s22, 3
    %p150 = por %p148, %p149
    %p152 = scmp.ne.s32.totalorder %s137, %s151
    %p153 = scmp.eq.s32.totalorder %s22, 0
    %p154 = por %p152, %p153
    %s156 = sadd.s32 %s155, 1
    %p159 = scmp.eq.s32.totalorder %s16, 3
    %p160 = scmp.ne.s32.totalorder %s155, %s157
    %p161 = scmp.eq.s32.totalorder %s16, 0
    %p162 = por %p160, %p161
    %p163 = scmp.ne.s32.totalorder %s155, %s157
    %p164 = scmp.eq.s32.totalorder %s21, 3
    %p165 = por %p163, %p164
    %p166 = scmp.ne.s32.totalorder %s157, %s158
    %p167 = scmp.eq.s32.totalorder %s21, 0
    %p168 = por %p166, %p167
    %p169 = scmp.ne.s32.totalorder %s157, %s158
    %p170 = scmp.eq.s32.totalorder %s22, 3
    %p171 = por %p169, %p170
    %p173 = scmp.ne.s32.totalorder %s158, %s172
    %p174 = scmp.eq.s32.totalorder %s22, 0
    %p175 = por %p173, %p174
    %s177 = sadd.s32 %s176, 1
    %p180 = scmp.eq.s32.totalorder %s16, 3
    %p181 = scmp.ne.s32.totalorder %s176, %s178
    %p182 = scmp.eq.s32.totalorder %s16, 0
    %p183 = por %p181, %p182
    %p184 = scmp.ne.s32.totalorder %s176, %s178
    %p185 = scmp.eq.s32.totalorder %s21, 3
    %p186 = por %p184, %p185
    %p187 = scmp.ne.s32.totalorder %s178, %s179
    %p188 = scmp.eq.s32.totalorder %s21, 0
    %p189 = por %p187, %p188
    %p190 = scmp.ne.s32.totalorder %s178, %s179
    %p191 = scmp.eq.s32.totalorder %s22, 3
    %p192 = por %p190, %p191
    %p194 = scmp.ne.s32.totalorder %s179, %s193
    %p195 = scmp.eq.s32.totalorder %s22, 0
    %p196 = por %p194, %p195
    %s198 = sadd.s32 %s197, 1
    %p201 = scmp.eq.s32.totalorder %s16, 3
    %p202 = scmp.ne.s32.totalorder %s197, %s199
    %p203 = scmp.eq.s32.totalorder %s16, 0
    %p204 = por %p202, %p203
    %p205 = scmp.ne.s32.totalorder %s197, %s199
    %p206 = scmp.eq.s32.totalorder %s21, 3
    %p207 = por %p205, %p206
    %p208 = scmp.ne.s32.totalorder %s199, %s200
    %p209 = scmp.eq.s32.totalorder %s21, 0
    %p210 = por %p208, %p209
    %p211 = scmp.ne.s32.totalorder %s199, %s200
    %p212 = scmp.eq.s32.totalorder %s22, 3
    %p213 = por %p211, %p212
    %p215 = scmp.ne.s32.totalorder %s200, %s214
    %p216 = scmp.eq.s32.totalorder %s22, 0
    %p217 = por %p215, %p216
    %s218 = ssub.s32 %s23, %s35
    %p219 = scmp.eq.s32.totalorder %s218, 0
    %s221 = sadd.s32 %s220, 1
    %s222 = scalar_select %p219, %s220, %s221
    %p225 = pneg %p219
    %p226 = scmp.eq.s32.totalorder %s16, 3
    %p227 = por %p225, %p226
    %p228 = scmp.ne.s32.totalorder %s220, %s223
    %p229 = scmp.eq.s32.totalorder %s16, 0
    %p230 = por %p228, %p229
    %p231 = scmp.ne.s32.totalorder %s220, %s223
    %p232 = scmp.eq.s32.totalorder %s21, 3
    %p233 = por %p231, %p232
    %p234 = scmp.ne.s32.totalorder %s223, %s224
    %p235 = scmp.eq.s32.totalorder %s21, 0
    %p236 = por %p234, %p235
    %p237 = scmp.ne.s32.totalorder %s223, %s224
    %p238 = scmp.eq.s32.totalorder %s22, 3
    %p239 = por %p237, %p238
    %p241 = scmp.ne.s32.totalorder %s224, %s240
    %p242 = scmp.eq.s32.totalorder %s22, 0
    %p243 = por %p241, %p242
    %s244 = ssub.s32 %s23, %s35
    %p245 = scmp.eq.s32.totalorder %s244, 0
    %s247 = sadd.s32 %s246, 1
    %s248 = scalar_select %p245, %s246, %s247
    %p251 = pneg %p245
    %p252 = scmp.eq.s32.totalorder %s16, 3
    %p253 = por %p251, %p252
    %p254 = scmp.ne.s32.totalorder %s246, %s249
    %p255 = scmp.eq.s32.totalorder %s16, 0
    %p256 = por %p254, %p255
    %p257 = scmp.ne.s32.totalorder %s246, %s249
    %p258 = scmp.eq.s32.totalorder %s21, 3
    %p259 = por %p257, %p258
    %p260 = scmp.ne.s32.totalorder %s249, %s250
    %p261 = scmp.eq.s32.totalorder %s21, 0
    %p262 = por %p260, %p261
    %p263 = scmp.ne.s32.totalorder %s249, %s250
    %p264 = scmp.eq.s32.totalorder %s22, 3
    %p265 = por %p263, %p264
    %p267 = scmp.ne.s32.totalorder %s250, %s266
    %p268 = scmp.eq.s32.totalorder %s22, 0
    %p269 = por %p267, %p268
    %p270 = scmp.le.s32.totalorder 1, %s16
    %p271 = scmp.lt.s32.totalorder %s16, 5
    %p272 = pnand %p270, %p271
    %p273 = pneg %p272
    // Predicated region
    $region9: #{ocrnet_forward.6} parent=5 // pred_check
      _
    $region10: #{ocrnet_forward.6} parent=5 // pred_check_branch
      %275 = sbr.rel (%p272) target = $region12
    $region11: #{ocrnet_forward.6} parent=5 // pred_region
      %s276 = ssub.s32 %s16, 1
      // Predicated region
      $region13: #{ocrnet_forward.6} parent=11 // pred_check
        %p277 = pneg %p105
      $region14: #{ocrnet_forward.6} parent=11 // pred_check_branch
        %279 = sbr.rel (%p277) target = $region16
      $region15: #{ocrnet_forward.6} parent=11 // pred_region
        _
      $region16: #{ocrnet_forward.6} parent=11 // pred_fallthru
        _
      // Predicated region
      $region17: #{ocrnet_forward.6} parent=11 // pred_check
        %p280 = pneg %p126
      $region18: #{ocrnet_forward.6} parent=11 // pred_check_branch
        %282 = sbr.rel (%p280) target = $region20
      $region19: #{ocrnet_forward.6} parent=11 // pred_region
        _
      $region20: #{ocrnet_forward.6} parent=11 // pred_fallthru
        _
      // Predicated region
      $region21: #{ocrnet_forward.6} parent=11 // pred_check
        %p283 = pneg %p147
      $region22: #{ocrnet_forward.6} parent=11 // pred_check_branch
        %285 = sbr.rel (%p283) target = $region24
      $region23: #{ocrnet_forward.6} parent=11 // pred_region
        _
      $region24: #{ocrnet_forward.6} parent=11 // pred_fallthru
        _
      // Predicated region
      $region25: #{ocrnet_forward.6} parent=11 // pred_check
        %p286 = pneg %p168
      $region26: #{ocrnet_forward.6} parent=11 // pred_check_branch
        %288 = sbr.rel (%p286) target = $region28
      $region27: #{ocrnet_forward.6} parent=11 // pred_region
        _
      $region28: #{ocrnet_forward.6} parent=11 // pred_fallthru
        _
      // Predicated region
      $region29: #{ocrnet_forward.6} parent=11 // pred_check
        %p289 = pneg %p189
      $region30: #{ocrnet_forward.6} parent=11 // pred_check_branch
        %291 = sbr.rel (%p289) target = $region32
      $region31: #{ocrnet_forward.6} parent=11 // pred_region
        _
      $region32: #{ocrnet_forward.6} parent=11 // pred_fallthru
        _
      // Predicated region
      $region33: #{ocrnet_forward.6} parent=11 // pred_check
        %p292 = pneg %p210
      $region34: #{ocrnet_forward.6} parent=11 // pred_check_branch
        %294 = sbr.rel (%p292) target = $region36
      $region35: #{ocrnet_forward.6} parent=11 // pred_region
        _
      $region36: #{ocrnet_forward.6} parent=11 // pred_fallthru
        _
    $region12: #{ocrnet_forward.6} parent=5 // pred_fallthru
      _
    %p295 = scmp.lt.s32.totalorder %s16, 4
    // Predicated region
    $region37: #{ocrnet_forward.6} parent=5 // pred_check
      %p296 = pneg %p295
    $region38: #{ocrnet_forward.6} parent=5 // pred_check_branch
      %298 = sbr.rel (%p296) target = $region40
    $region39: #{ocrnet_forward.6} parent=5 // pred_region
      // Predicated region
      $region41: #{ocrnet_forward.6} parent=39 // pred_check
        %p299 = pneg %p50
      $region42: #{ocrnet_forward.6} parent=39 // pred_check_branch
        %301 = sbr.rel (%p299) target = $region44
      $region43: #{ocrnet_forward.6} parent=39 // pred_region
        %s302 = smul.u32 4, %s24
        %p303 = scmp.lt.s32.totalorder %s23, 1
        %s304 = scalar_select %p303, %s23, 1
        %p305 = scmp.lt.s32.totalorder %s302, 7
        %s306 = scalar_select %p305, %s302, 7
        %s307 = smul.addr %s304, 8
        %s308 = sadd.s32 %s306, %s307
        %s309 = smul.addr %s308, 8
        %s310 = scalar_lea.vmem %s0, %s309
        %s311 = smul.u32 4, %s24
      $region44: #{ocrnet_forward.6} parent=39 // pred_fallthru
        _
      // Predicated region
      $region45: #{ocrnet_forward.6} parent=39 // pred_check
        %p312 = pneg %p78
      $region46: #{ocrnet_forward.6} parent=39 // pred_check_branch
        %314 = sbr.rel (%p312) target = $region48
      $region47: #{ocrnet_forward.6} parent=39 // pred_region
        %s315 = smul.u32 4, %s24
        %p316 = scmp.lt.s32.totalorder %s23, 1
        %s317 = scalar_select %p316, %s23, 1
        %p318 = scmp.lt.s32.totalorder %s315, 7
        %s319 = scalar_select %p318, %s315, 7
        %s320 = smul.addr %s317, 8
        %s321 = sadd.s32 %s319, %s320
        %s322 = smul.addr %s321, 4
        %s323 = scalar_lea.vmem %s1, %s322
        %s324 = smul.u32 4, %s24
      $region48: #{ocrnet_forward.6} parent=39 // pred_fallthru
        _
    $region40: #{ocrnet_forward.6} parent=5 // pred_fallthru
      _
    %p325 = scmp.le.s32.totalorder 1, %s16
    %p326 = scmp.lt.s32.totalorder %s16, 5
    %p327 = pnand %p325, %p326
    %p328 = pneg %p327
    // Predicated region
    $region49: #{ocrnet_forward.6} parent=5 // pred_check
      _
    $region50: #{ocrnet_forward.6} parent=5 // pred_check_branch
      %330 = sbr.rel (%p327) target = $region52
    $region51: #{ocrnet_forward.6} parent=5 // pred_region
      %s331 = ssub.s32 %s16, 1
      %s332 = smul.u32 4, %s26
      %p333 = scmp.lt.s32.totalorder %s25, 1
      %s334 = scalar_select %p333, %s25, 1
      %p335 = scmp.lt.s32.totalorder %s332, 7
      %s336 = scalar_select %p335, %s332, 7
      %s337 = smul.addr %s334, 8
      %s338 = sadd.s32 %s336, %s337
      %s339 = smul.addr %s338, 8
      %s340 = scalar_lea.vmem %s0, %s339
      %p341 = pneg %p56
      %p342 = pneg %p53
      %s343 = smul.u32 4, %s26
      %p344 = scmp.lt.s32.totalorder %s25, 1
      %s345 = scalar_select %p344, %s25, 1
      %p346 = scmp.lt.s32.totalorder %s343, 7
      %s347 = scalar_select %p346, %s343, 7
      %s348 = smul.addr %s345, 8
      %s349 = sadd.s32 %s347, %s348
      %s350 = smul.addr %s349, 4
      %s351 = scalar_lea.vmem %s1, %s350
      %p352 = pneg %p84
      %p353 = pneg %p81
      %p354 = pneg %p105
      %p355 = pneg %p102
      %p356 = pneg %p126
      %p357 = pneg %p123
      %p358 = pneg %p147
      %p359 = pneg %p144
      %p360 = pneg %p168
      %p361 = pneg %p165
      %p362 = pneg %p189
      %p363 = pneg %p186
      %p364 = pneg %p210
      %p365 = pneg %p207
      %p366 = pneg %p236
      %p367 = pneg %p233
      %p368 = scmp.lt.s32.totalorder %s25, 1
      %s369 = scalar_select %p368, %s25, 1
      %s370 = smul.addr %s369, 2
      %s371 = smul.addr %s370, 4
      %s372 = scalar_lea.vmem %s8, %s371
      %p373 = pneg %p262
      %p374 = pneg %p259
      %p375 = scmp.lt.s32.totalorder %s25, 1
      %s376 = scalar_select %p375, %s25, 1
      %s377 = smul.addr %s376, 2
      %s378 = smul.addr %s377, 4
      %s379 = scalar_lea.vmem %s9, %s378
      %s380 = smul.u32 4, %s26
      %p381 = scmp.lt.s32.totalorder %s25, 1
      %s382 = scalar_select %p381, %s25, 1
      %p383 = scmp.lt.s32.totalorder %s380, 7
      %s384 = scalar_select %p383, %s380, 7
      %s385 = smul.addr %s382, 8
      %s386 = sadd.s32 %s384, %s385
      %s387 = smul.addr %s386, 8
      %s388 = scalar_lea.vmem %s0, %s387
      %s389 = smul.u32 4, %s26
      %s390 = smul.u32 4, %s26
      %p391 = scmp.lt.s32.totalorder %s25, 1
      %s392 = scalar_select %p391, %s25, 1
      %p393 = scmp.lt.s32.totalorder %s390, 7
      %s394 = scalar_select %p393, %s390, 7
      %s395 = smul.addr %s392, 8
      %s396 = sadd.s32 %s394, %s395
      %s397 = smul.addr %s396, 4
      %s398 = scalar_lea.vmem %s1, %s397
      %s399 = smul.u32 4, %s26
      %p400 = scmp.lt.s32.totalorder %s25, 1
      %s401 = scalar_select %p400, %s25, 1
      %s402 = smul.addr %s401, 2
      %s403 = smul.addr %s402, 4
      %s404 = scalar_lea.vmem %s8, %s403
      %p405 = scmp.lt.s32.totalorder %s25, 1
      %s406 = scalar_select %p405, %s25, 1
      %s407 = smul.addr %s406, 2
      %s408 = smul.addr %s407, 4
      %s409 = scalar_lea.vmem %s9, %s408
      %p411 = scmp.eq.s32.totalorder %s26, 0
      // Predicated region
      $region53: #{ocrnet_forward.6} parent=51 // pred_check
        %p412 = pneg %p411
      $region54: #{ocrnet_forward.6} parent=51 // pred_check_branch
        %414 = sbr.rel (%p412) target = $region56
      $region55: #{ocrnet_forward.6} parent=51 // pred_region
        %vm415 = vcmask 24576
        %416 = vst.msk [vmem:[#allocation2] sm:$0x1] %vm415, -inf
        %417 = vst.msk [vmem:[#allocation3] sm:$0x1] %vm415, 0.0
        %vm418 = vcmask 31744
        %419 = vst.msk [vmem:[#allocation4] sm:$0xff] %vm418, 0.0
        %420 = vst.msk [vmem:[#allocation4 + $0x8] sm:$0xff] %vm418, 0.0
        %421 = vst.msk [vmem:[#allocation4 + $0x10] sm:$0xff] %vm418, 0.0
        %422 = vst.msk [vmem:[#allocation4 + $0x18] sm:$0xff] %vm418, 0.0
      $region56: #{ocrnet_forward.6} parent=51 // pred_fallthru
        _
      %v423 = vld [vmem:[%s388] sm:$0xff]
      %v424 = vld [vmem:[%s388 + $0x8] sm:$0xff]
      %v425 = vld [vmem:[%s388 + $0x10] sm:$0xff]
      %v426 = vld [vmem:[%s388 + $0x18] sm:$0xff]
      %s427 = smul.u32 %s26, 32
      %v428 = vlaneseq
      %v429 = vshrl.u32 %v428, 7
      %v430 = vadd.s32 %v429, 8
      %v431 = vadd.s32 %v429, 16
      %v432 = vadd.s32 %v429, 24
      %v433 = vstv %s427
      %v434 = vadd.s32 %v433, %v429
      %v435 = vadd.s32 %v433, %v430
      %v436 = vadd.s32 %v433, %v431
      %v437 = vadd.s32 %v433, %v432
      %vm438 = vcmp.lt.s32.totalorder %v434, 64
      %vm439 = vcmp.lt.s32.totalorder %v435, 64
      %vm440 = vcmp.lt.s32.totalorder %v436, 64
      %vm441 = vcmp.lt.s32.totalorder %v437, 64
      %v442 = vsel %vm438, 1, 0
      %v443 = vsel %vm439, 1, 0
      %v444 = vsel %vm440, 1, 0
      %v445 = vsel %vm441, 1, 0
      %vm446 = vcmp.eq.s32.totalorder %v442, 1
      %vm447 = vcmp.eq.s32.totalorder %v443, 1
      %vm448 = vcmp.eq.s32.totalorder %v444, 1
      %vm449 = vcmp.eq.s32.totalorder %v445, 1
      %v450 = vsel %vm446, %v423, -inf
      %v451 = vsel %vm447, %v424, -inf
      %v452 = vsel %vm448, %v425, -inf
      %v453 = vsel %vm449, %v426, -inf
      %v454 = vld [vmem:[#allocation2] sm:$0x1]
      %vm455 = vcmask 31744
      %v456 = vsel %vm455, %v450, -inf
      %v457 = vsel %vm455, %v451, -inf
      %v458 = vsel %vm455, %v452, -inf
      %v459 = vsel %vm455, %v453, -inf
      %v460 = vmax.f32 %v456, %v457
      %v461 = vmax.f32 %v458, %v459
      %v462 = vmax.f32 %v460, %v461
      %v463 = vrot.slane %v462, 4
      %v464 = vmax.f32 %v462, %v463
      %v465 = vrot.slane %v464, 2
      %v466 = vmax.f32 %v464, %v465
      %v467 = vrot.slane %v466, 1
      %v468 = vmax.f32 %v466, %v467
      %v469 = vmax.f32 %v454, %v468
      %v470 = vsub.f32 %v454, %v469
      %v471 = vmul.f32 %v470, 1.442695
      %v472 = vpow.pop %v471
      %v474 = vlaneseq
      %v475 = vshrl.u32 %v474, 7
      %v476 = vsub.s32 0, %v475
      %v477 = vrot.slane %v469, %v476
      %v479 = vsub.f32 %v450, %v477
      %v480 = vsub.f32 %v451, %v477
      %v481 = vsub.f32 %v452, %v477
      %v482 = vsub.f32 %v453, %v477
      %v483 = vmul.f32 %v479, 1.442695
      %v484 = vpow.pop %v483
      %v485 = vmul.f32 %v480, 1.442695
      %v486 = vpow.pop %v485
      %v487 = vmul.f32 %v481, 1.442695
      %v488 = vpow.pop %v487
      %v489 = vmul.f32 %v482, 1.442695
      %v490 = vpow.pop %v489
      %v491 = vld [vmem:[#allocation3] sm:$0x1]
      %v492 = vmul.f32 %v472, %v491
      %v493 = vsel %vm455, %v484, 0.0
      %v494 = vsel %vm455, %v486, 0.0
      %v495 = vadd.f32 %v493, %v494
      %v496 = vsel %vm455, %v488, 0.0
      %v497 = vadd.f32 %v495, %v496
      %v498 = vsel %vm455, %v490, 0.0
      %v499 = vadd.f32 %v497, %v498
      %v500 = vrot.slane %v499, 4
      %v501 = vadd.f32 %v499, %v500
      %v502 = vrot.slane %v501, 2
      %v503 = vadd.f32 %v501, %v502
      %v504 = vrot.slane %v503, 1
      %v505 = vadd.f32 %v503, %v504
      %v506 = vadd.f32 %v492, %v505
      %vm507 = vcmask 24576
      %508 = vst.msk [vmem:[#allocation3] sm:$0x1] %vm507, %v506
      %v509 = vld [vmem:[#allocation4] sm:$0xff]
      %v510 = vld [vmem:[#allocation4 + $0x8] sm:$0xff]
      %v511 = vld [vmem:[#allocation4 + $0x10] sm:$0xff]
      %v512 = vld [vmem:[#allocation4 + $0x18] sm:$0xff]
      %v514 = vlaneseq
      %v515 = vshrl.u32 %v514, 7
      %v516 = vsub.s32 0, %v515
      %v517 = vrot.slane %v472, %v516
      %v519 = vmul.f32 %v517, %v509
      %v520 = vmul.f32 %v517, %v510
      %v521 = vmul.f32 %v517, %v511
      %v522 = vmul.f32 %v517, %v512
      %v523 = vld [vmem:[%s398] sm:$0xf]
      %v524 = vld [vmem:[%s398 + $0x4] sm:$0xf]
      %v525 = vld [vmem:[%s398 + $0x8] sm:$0xf]
      %v526 = vld [vmem:[%s398 + $0xc] sm:$0xf]
      %v527 = vpack.c.bf16 %v486, %v484
      %v528 = vpack.c.bf16 %v490, %v488
      %v533 = vunpack.c.l.b16 %v523
      %v534 = vunpack.c.l.b16 %v524
      %v535 = vunpack.c.l.b16 %v525
      %v536 = vunpack.c.l.b16 %v526
      %v537 = vpack.c.b16 %v534, %v533
      %v538 = vpack.c.b16 %v536, %v535
      %541 = vxpose.xlu0.c.b16.start [1/8] %v537, 128
      %542 = vxpose.xlu0.c.b16.cont [2/8] %v538, 128
      %543 = vxpose.xlu0.c.b16.cont [3/8] 0, 128
      %544 = vxpose.xlu0.c.b16.cont [4/8] 0, 128
      %545 = vxpose.xlu0.c.b16.cont [5/8] 0, 128
      %546 = vxpose.xlu0.c.b16.cont [6/8] 0, 128
      %547 = vxpose.xlu0.c.b16.cont [7/8] 0, 128
      %548 = vxpose.xlu0.c.b16.end [8/8] 0, 128
      %v549 = vpop.trf.xlu0
      %v550 = vpop.trf.xlu0
      %v551 = vpop.trf.xlu0
      %v552 = vpop.trf.xlu0
      %v553 = vpop.trf.xlu0
      %v554 = vpop.trf.xlu0
      %v555 = vpop.trf.xlu0
      %v556 = vpop.trf.xlu0
      %vm557 = vcmask 261120
      %v559 = vsel %vm557, %v549, 0
      %v562 = vsel %vm557, %v550, 0
      %564 = vmatprep.subr.bf16.mxu0 0
      %565 = vmatpush1.bf16.msra.mxu0 0
      %566 = vmatprep.subr.bf16.mxu0 0
      %567 = vmatpush1.bf16.msra.mxu0 0
      %568 = vmatprep.subr.bf16.mxu0 0
      %569 = vmatpush1.bf16.msra.mxu0 0
      %570 = vmatprep.subr.bf16.mxu0 0
      %571 = vmatpush1.bf16.msra.mxu0 0
      %572 = vmatprep.subr.bf16.mxu0 0
      %573 = vmatpush1.bf16.msra.mxu0 0
      %574 = vmatprep.subr.bf16.mxu0 0
      %575 = vmatpush1.bf16.msra.mxu0 0
      %576 = vmatprep.subr.bf16.mxu0 0
      %577 = vmatpush1.bf16.msra.mxu0 %v528
      %578 = vmatprep.subr.bf16.mxu0 0
      %579 = vmatpush1.bf16.msra.mxu0 %v527
      %580 = vmatprep.subr.bf16.mxu0 0
      %581 = vmatpush2.bf16.msra.mxu0 0
      %582 = vmatprep.subr.bf16.mxu0 0
      %583 = vmatpush2.bf16.msra.mxu0 0
      %584 = vmatprep.subr.bf16.mxu0 0
      %585 = vmatpush2.bf16.msra.mxu0 0
      %586 = vmatprep.subr.bf16.mxu0 0
      %587 = vmatpush2.bf16.msra.mxu0 0
      %588 = vmatprep.subr.bf16.mxu0 0
      %589 = vmatpush2.bf16.msra.mxu0 0
      %590 = vmatprep.subr.bf16.mxu0 0
      %591 = vmatpush2.bf16.msra.mxu0 0
      %592 = vmatprep.subr.bf16.mxu0 0
      %593 = vmatpush2.bf16.msra.mxu0 0
      %594 = vmatprep.subr.bf16.mxu0 0
      %595 = vmatpush2.bf16.msra.mxu0 0
      %596 = vmatprep.mubr.bf16.mxu0 0
      %597 = vmatmul.mubr.bf16.gmra.mxu0 %v559
      %v598 = vpop.f32.mrf.mxu0
      %v599 = vadd.f32 0.0, %v598
      %v600 = vpop.f32.mrf.mxu0
      %v601 = vpop.f32.mrf.mxu0
      %v602 = vadd.f32 0.0, %v601
      %v603 = vpop.f32.mrf.mxu0
      %604 = vmatprep.mubr.bf16.mxu0 0
      %605 = vmatmul.mubr.bf16.gmra.mxu0 %v562
      %v606 = vpop.f32.mrf.mxu0
      %v607 = vadd.f32 0.0, %v606
      %v608 = vpop.f32.mrf.mxu0
      %v609 = vpop.f32.mrf.mxu0
      %v610 = vadd.f32 0.0, %v609
      %v611 = vpop.f32.mrf.mxu0
      %612 = vdwg.mxu0
      %v613 = vadd.f32 %v519, %v599
      %v614 = vadd.f32 %v520, %v602
      %v615 = vadd.f32 %v521, %v607
      %v616 = vadd.f32 %v522, %v610
      %617 = vst.msk [vmem:[#allocation4] sm:$0xff] %vm455, %v613
      %618 = vst.msk [vmem:[#allocation4 + $0x8] sm:$0xff] %vm455, %v614
      %619 = vst.msk [vmem:[#allocation4 + $0x10] sm:$0xff] %vm455, %v615
      %620 = vst.msk [vmem:[#allocation4 + $0x18] sm:$0xff] %vm455, %v616
      %621 = vst.msk [vmem:[#allocation2] sm:$0x1] %vm507, %v469
      %p622 = scmp.eq.s32.totalorder %s26, 1
      // Predicated region
      $region57: #{ocrnet_forward.6} parent=51 // pred_check
        %p623 = pneg %p622
      $region58: #{ocrnet_forward.6} parent=51 // pred_check_branch
        %625 = sbr.rel (%p623) target = $region60
      $region59: #{ocrnet_forward.6} parent=51 // pred_region
        %v626 = vld [vmem:[#allocation4] sm:$0xff]
        %v627 = vld [vmem:[#allocation4 + $0x8] sm:$0xff]
        %v628 = vld [vmem:[#allocation4 + $0x10] sm:$0xff]
        %v629 = vld [vmem:[#allocation4 + $0x18] sm:$0xff]
        %v630 = vld [vmem:[#allocation3] sm:$0x1]
        %v631 = vrcp.pop %v630
        %v633 = vlaneseq
        %v634 = vshrl.u32 %v633, 7
        %v635 = vsub.s32 0, %v634
        %v636 = vrot.slane %v631, %v635
        %v638 = vmul.f32 %v626, %v636
        %v639 = vmul.f32 %v627, %v636
        %v640 = vmul.f32 %v628, %v636
        %v641 = vmul.f32 %v629, %v636
        %v642 = vpack.c.bf16 %v639, %v638
        %v643 = vpack.c.bf16 %v641, %v640
        %v644 = vld [vmem:[%s2] sm:$0xf]
        %v645 = vld [vmem:[%s2 + $0x4] sm:$0xf]
        %v646 = vld [vmem:[%s2 + $0x8] sm:$0xf]
        %v647 = vld [vmem:[%s2 + $0xc] sm:$0xf]
        %v648 = vld [vmem:[%s3] sm:$0xff]
        %v649 = vld [vmem:[%s3 + $0x8] sm:$0xff]
        %651 = vset.pattern.permute.xlu0 0
        %652 = vperm.xlu0 %651, %v648
        %v653 = vpop.permute.xlu0 %652
        %656 = vset.pattern.permute.xlu0 0
        %657 = vperm.xlu0 %656, %v649
        %v658 = vpop.permute.xlu0 %657
        %v664 = vunpack.c.l.b16 %v644
        %v665 = vunpack.c.l.b16 %v645
        %v666 = vunpack.c.l.b16 %v646
        %v667 = vunpack.c.l.b16 %v647
        %v668 = vpack.c.b16 %v665, %v664
        %v669 = vpack.c.b16 %v667, %v666
        %672 = vxpose.xlu0.c.b16.start [1/8] %v668, 128
        %673 = vxpose.xlu0.c.b16.cont [2/8] %v669, 128
        %674 = vxpose.xlu0.c.b16.cont [3/8] 0, 128
        %675 = vxpose.xlu0.c.b16.cont [4/8] 0, 128
        %676 = vxpose.xlu0.c.b16.cont [5/8] 0, 128
        %677 = vxpose.xlu0.c.b16.cont [6/8] 0, 128
        %678 = vxpose.xlu0.c.b16.cont [7/8] 0, 128
        %679 = vxpose.xlu0.c.b16.end [8/8] 0, 128
        %v680 = vpop.trf.xlu0
        %v681 = vpop.trf.xlu0
        %v682 = vpop.trf.xlu0
        %v683 = vpop.trf.xlu0
        %v684 = vpop.trf.xlu0
        %v685 = vpop.trf.xlu0
        %v686 = vpop.trf.xlu0
        %v687 = vpop.trf.xlu0
        %v689 = vsel %vm557, %v680, 0
        %691 = vmatprep.subr.bf16.mxu0 0
        %692 = vmatpush1.bf16.msra.mxu0 0
        %693 = vmatprep.subr.bf16.mxu0 0
        %694 = vmatpush1.bf16.msra.mxu0 0
        %695 = vmatprep.subr.bf16.mxu0 0
        %696 = vmatpush1.bf16.msra.mxu0 0
        %697 = vmatprep.subr.bf16.mxu0 0
        %698 = vmatpush1.bf16.msra.mxu0 0
        %699 = vmatprep.subr.bf16.mxu0 0
        %700 = vmatpush1.bf16.msra.mxu0 0
        %701 = vmatprep.subr.bf16.mxu0 0
        %702 = vmatpush1.bf16.msra.mxu0 0
        %703 = vmatprep.subr.bf16.mxu0 0
        %704 = vmatpush1.bf16.msra.mxu0 %v643
        %705 = vmatprep.subr.bf16.mxu0 0
        %706 = vmatpush1.bf16.msra.mxu0 %v642
        %707 = vmatprep.subr.bf16.mxu0 0
        %708 = vmatpush2.bf16.msra.mxu0 0
        %709 = vmatprep.subr.bf16.mxu0 0
        %710 = vmatpush2.bf16.msra.mxu0 0
        %711 = vmatprep.subr.bf16.mxu0 0
        %712 = vmatpush2.bf16.msra.mxu0 0
        %713 = vmatprep.subr.bf16.mxu0 0
        %714 = vmatpush2.bf16.msra.mxu0 0
        %715 = vmatprep.subr.bf16.mxu0 0
        %716 = vmatpush2.bf16.msra.mxu0 0
        %717 = vmatprep.subr.bf16.mxu0 0
        %718 = vmatpush2.bf16.msra.mxu0 0
        %719 = vmatprep.subr.bf16.mxu0 0
        %720 = vmatpush2.bf16.msra.mxu0 0
        %721 = vmatprep.subr.bf16.mxu0 0
        %722 = vmatpush2.bf16.msra.mxu0 0
        %723 = vmatprep.mubr.bf16.mxu0 0
        %724 = vmatmul.mubr.bf16.gmra.mxu0 %v689
        %v725 = vpop.f32.mrf.mxu0
        %v726 = vadd.f32 %v653, %v725
        %v727 = vpop.f32.mrf.mxu0
        %v728 = vpop.f32.mrf.mxu0
        %v729 = vadd.f32 %v658, %v728
        %v730 = vpop.f32.mrf.mxu0
        %731 = vdwg.mxu0
        %v732 = vmax.f32 %v726, 0.0
        %v733 = vmax.f32 %v729, 0.0
        %v734 = vld [vmem:[%s4] sm:$0xf]
        %v735 = vld [vmem:[%s4 + $0x4] sm:$0xf]
        %v736 = vpack.c.bf16 %v733, %v732
        %v737 = vld [vmem:[%s5] sm:$0xff]
        %v738 = vld [vmem:[%s5 + $0x8] sm:$0xff]
        %740 = vset.pattern.permute.xlu0 0
        %741 = vperm.xlu0 %740, %v737
        %v742 = vpop.permute.xlu0 %741
        %745 = vset.pattern.permute.xlu0 0
        %746 = vperm.xlu0 %745, %v738
        %v747 = vpop.permute.xlu0 %746
        %v751 = vunpack.c.l.b16 %v734
        %v752 = vunpack.c.l.b16 %v735
        %v753 = vpack.c.b16 %v752, %v751
        %755 = vxpose.xlu0.c.b16.start [1/8] %v753, 128
        %756 = vxpose.xlu0.c.b16.cont [2/8] 0, 128
        %757 = vxpose.xlu0.c.b16.cont [3/8] 0, 128
        %758 = vxpose.xlu0.c.b16.cont [4/8] 0, 128
        %759 = vxpose.xlu0.c.b16.cont [5/8] 0, 128
        %760 = vxpose.xlu0.c.b16.cont [6/8] 0, 128
        %761 = vxpose.xlu0.c.b16.cont [7/8] 0, 128
        %762 = vxpose.xlu0.c.b16.end [8/8] 0, 128
        %v763 = vpop.trf.xlu0
        %v764 = vpop.trf.xlu0
        %v765 = vpop.trf.xlu0
        %v766 = vpop.trf.xlu0
        %v767 = vpop.trf.xlu0
        %v768 = vpop.trf.xlu0
        %v769 = vpop.trf.xlu0
        %v770 = vpop.trf.xlu0
        %vm771 = vcmask 130048
        %v773 = vsel %vm771, %v763, 0
        %775 = vmatprep.subr.bf16.mxu0 0
        %776 = vmatpush1.bf16.msra.mxu0 0
        %777 = vmatprep.subr.bf16.mxu0 0
        %778 = vmatpush1.bf16.msra.mxu0 0
        %779 = vmatprep.subr.bf16.mxu0 0
        %780 = vmatpush1.bf16.msra.mxu0 0
        %781 = vmatprep.subr.bf16.mxu0 0
        %782 = vmatpush1.bf16.msra.mxu0 0
        %783 = vmatprep.subr.bf16.mxu0 0
        %784 = vmatpush1.bf16.msra.mxu0 0
        %785 = vmatprep.subr.bf16.mxu0 0
        %786 = vmatpush1.bf16.msra.mxu0 0
        %787 = vmatprep.subr.bf16.mxu0 0
        %788 = vmatpush1.bf16.msra.mxu0 0
        %789 = vmatprep.subr.bf16.mxu0 0
        %790 = vmatpush1.bf16.msra.mxu0 %v736
        %791 = vmatprep.subr.bf16.mxu0 0
        %792 = vmatpush2.bf16.msra.mxu0 0
        %793 = vmatprep.subr.bf16.mxu0 0
        %794 = vmatpush2.bf16.msra.mxu0 0
        %795 = vmatprep.subr.bf16.mxu0 0
        %796 = vmatpush2.bf16.msra.mxu0 0
        %797 = vmatprep.subr.bf16.mxu0 0
        %798 = vmatpush2.bf16.msra.mxu0 0
        %799 = vmatprep.subr.bf16.mxu0 0
        %800 = vmatpush2.bf16.msra.mxu0 0
        %801 = vmatprep.subr.bf16.mxu0 0
        %802 = vmatpush2.bf16.msra.mxu0 0
        %803 = vmatprep.subr.bf16.mxu0 0
        %804 = vmatpush2.bf16.msra.mxu0 0
        %805 = vmatprep.subr.bf16.mxu0 0
        %806 = vmatpush2.bf16.msra.mxu0 0
        %807 = vmatprep.mubr.bf16.mxu0 0
        %808 = vmatmul.mubr.bf16.gmra.mxu0 %v773
        %v809 = vpop.f32.mrf.mxu0
        %v810 = vadd.f32 %v742, %v809
        %v811 = vpop.f32.mrf.mxu0
        %v812 = vpop.f32.mrf.mxu0
        %v813 = vadd.f32 %v747, %v812
        %v814 = vpop.f32.mrf.mxu0
        %815 = vdwg.mxu0
        %v816 = vmax.f32 %v810, 0.0
        %v817 = vmax.f32 %v813, 0.0
        %v818 = vld [vmem:[%s6] sm:$0xf]
        %v819 = vld [vmem:[%s6 + $0x4] sm:$0xf]
        %v820 = vld [vmem:[%s6 + $0x8] sm:$0xf]
        %v821 = vld [vmem:[%s6 + $0xc] sm:$0xf]
        %v822 = vld [vmem:[%s7] sm:$0xff]
        %v823 = vld [vmem:[%s7 + $0x8] sm:$0xff]
        %825 = vset.pattern.permute.xlu0 0
        %826 = vperm.xlu0 %825, %v822
        %v827 = vpop.permute.xlu0 %826
        %830 = vset.pattern.permute.xlu0 0
        %831 = vperm.xlu0 %830, %v823
        %v832 = vpop.permute.xlu0 %831
        %v838 = vunpack.c.l.b16 %v818
        %v839 = vunpack.c.l.b16 %v819
        %v840 = vunpack.c.l.b16 %v820
        %v841 = vunpack.c.l.b16 %v821
        %v842 = vpack.c.b16 %v839, %v838
        %v843 = vpack.c.b16 %v841, %v840
        %846 = vxpose.xlu0.c.b16.start [1/8] %v842, 128
        %847 = vxpose.xlu0.c.b16.cont [2/8] %v843, 128
        %848 = vxpose.xlu0.c.b16.cont [3/8] 0, 128
        %849 = vxpose.xlu0.c.b16.cont [4/8] 0, 128
        %850 = vxpose.xlu0.c.b16.cont [5/8] 0, 128
        %851 = vxpose.xlu0.c.b16.cont [6/8] 0, 128
        %852 = vxpose.xlu0.c.b16.cont [7/8] 0, 128
        %853 = vxpose.xlu0.c.b16.end [8/8] 0, 128
        %v854 = vpop.trf.xlu0
        %v855 = vpop.trf.xlu0
        %v856 = vpop.trf.xlu0
        %v857 = vpop.trf.xlu0
        %v858 = vpop.trf.xlu0
        %v859 = vpop.trf.xlu0
        %v860 = vpop.trf.xlu0
        %v861 = vpop.trf.xlu0
        %v863 = vsel %vm557, %v854, 0
        %865 = vmatprep.subr.bf16.mxu0 0
        %866 = vmatpush1.bf16.msra.mxu0 0
        %867 = vmatprep.subr.bf16.mxu0 0
        %868 = vmatpush1.bf16.msra.mxu0 0
        %869 = vmatprep.subr.bf16.mxu0 0
        %870 = vmatpush1.bf16.msra.mxu0 0
        %871 = vmatprep.subr.bf16.mxu0 0
        %872 = vmatpush1.bf16.msra.mxu0 0
        %873 = vmatprep.subr.bf16.mxu0 0
        %874 = vmatpush1.bf16.msra.mxu0 0
        %875 = vmatprep.subr.bf16.mxu0 0
        %876 = vmatpush1.bf16.msra.mxu0 0
        %877 = vmatprep.subr.bf16.mxu0 0
        %878 = vmatpush1.bf16.msra.mxu0 %v643
        %879 = vmatprep.subr.bf16.mxu0 0
        %880 = vmatpush1.bf16.msra.mxu0 %v642
        %881 = vmatprep.subr.bf16.mxu0 0
        %882 = vmatpush2.bf16.msra.mxu0 0
        %883 = vmatprep.subr.bf16.mxu0 0
        %884 = vmatpush2.bf16.msra.mxu0 0
        %885 = vmatprep.subr.bf16.mxu0 0
        %886 = vmatpush2.bf16.msra.mxu0 0
        %887 = vmatprep.subr.bf16.mxu0 0
        %888 = vmatpush2.bf16.msra.mxu0 0
        %889 = vmatprep.subr.bf16.mxu0 0
        %890 = vmatpush2.bf16.msra.mxu0 0
        %891 = vmatprep.subr.bf16.mxu0 0
        %892 = vmatpush2.bf16.msra.mxu0 0
        %893 = vmatprep.subr.bf16.mxu0 0
        %894 = vmatpush2.bf16.msra.mxu0 0
        %895 = vmatprep.subr.bf16.mxu0 0
        %896 = vmatpush2.bf16.msra.mxu0 0
        %897 = vmatprep.mubr.bf16.mxu0 0
        %898 = vmatmul.mubr.bf16.gmra.mxu0 %v863
        %v899 = vpop.f32.mrf.mxu0
        %v900 = vadd.f32 %v827, %v899
        %v901 = vpop.f32.mrf.mxu0
        %v902 = vpop.f32.mrf.mxu0
        %v903 = vadd.f32 %v832, %v902
        %v904 = vpop.f32.mrf.mxu0
        %905 = vdwg.mxu0
        %v906 = vmax.f32 %v900, 0.0
        %v907 = vmax.f32 %v903, 0.0
        %v908 = vpack.c.bf16 %v817, %v816
        %v910 = vunpack.c.l.b16 %v908
        %v911 = vunpack.c.h.b16 %v908
        %v912 = vpack.c.b16 %v910, %v910
        %v913 = vpack.c.b16 %v911, %v911
        %vm916 = vcmask 27648
        %917 = vst.msk [vmem:[%s404] sm:$0xf] %vm916, %v912
        %918 = vst.msk [vmem:[%s404 + $0x4] sm:$0xf] %vm916, %v913
        %v919 = vpack.c.bf16 %v907, %v906
        %v921 = vunpack.c.l.b16 %v919
        %v922 = vunpack.c.h.b16 %v919
        %v923 = vpack.c.b16 %v921, %v921
        %v924 = vpack.c.b16 %v922, %v922
        %927 = vst.msk [vmem:[%s409] sm:$0xf] %vm916, %v923
        %928 = vst.msk [vmem:[%s409 + $0x4] sm:$0xf] %vm916, %v924
      $region60: #{ocrnet_forward.6} parent=51 // pred_fallthru
        _
      %p929 = scmp.lt.s32.totalorder %s25, 1
      %s930 = scalar_select %p929, %s25, 1
      %s931 = smul.addr %s930, 2
      %s932 = smul.addr %s931, 4
      %s933 = scalar_lea.vmem %s8, %s932
      %p934 = scmp.lt.s32.totalorder %s25, 1
      %s935 = scalar_select %p934, %s25, 1
      %s936 = smul.addr %s935, 2
      %s937 = smul.addr %s936, 4
      %s938 = scalar_lea.vmem %s9, %s937
      // Predicated region
      $region61: #{ocrnet_forward.6} parent=51 // pred_check
        %p939 = pneg %p233
      $region62: #{ocrnet_forward.6} parent=51 // pred_check_branch
        %941 = sbr.rel (%p939) target = $region64
      $region63: #{ocrnet_forward.6} parent=51 // pred_region
        _
      $region64: #{ocrnet_forward.6} parent=51 // pred_fallthru
        _
      // Predicated region
      $region65: #{ocrnet_forward.6} parent=51 // pred_check
        %p942 = pneg %p259
      $region66: #{ocrnet_forward.6} parent=51 // pred_check_branch
        %944 = sbr.rel (%p942) target = $region68
      $region67: #{ocrnet_forward.6} parent=51 // pred_region
        _
      $region68: #{ocrnet_forward.6} parent=51 // pred_fallthru
        _
    $region52: #{ocrnet_forward.6} parent=5 // pred_fallthru
      _
    %p945 = scmp.le.s32.totalorder 2, %s16
    // Predicated region
    $region69: #{ocrnet_forward.6} parent=5 // pred_check
      %p946 = pneg %p945
    $region70: #{ocrnet_forward.6} parent=5 // pred_check_branch
      %948 = sbr.rel (%p946) target = $region72
    $region71: #{ocrnet_forward.6} parent=5 // pred_region
      %s949 = ssub.s32 %s16, 2
      // Predicated region
      $region73: #{ocrnet_forward.6} parent=71 // pred_check
        %p950 = pneg %p239
      $region74: #{ocrnet_forward.6} parent=71 // pred_check_branch
        %952 = sbr.rel (%p950) target = $region76
      $region75: #{ocrnet_forward.6} parent=71 // pred_region
        %p953 = scmp.lt.s32.totalorder %s27, 1
        %s954 = scalar_select %p953, %s27, 1
        %s955 = smul.addr %s954, 2
        %s956 = smul.addr %s955, 4
        %s957 = scalar_lea.vmem %s8, %s956
      $region76: #{ocrnet_forward.6} parent=71 // pred_fallthru
        _
      // Predicated region
      $region77: #{ocrnet_forward.6} parent=71 // pred_check
        %p958 = pneg %p265
      $region78: #{ocrnet_forward.6} parent=71 // pred_check_branch
        %960 = sbr.rel (%p958) target = $region80
      $region79: #{ocrnet_forward.6} parent=71 // pred_region
        %p961 = scmp.lt.s32.totalorder %s27, 1
        %s962 = scalar_select %p961, %s27, 1
        %s963 = smul.addr %s962, 2
        %s964 = smul.addr %s963, 4
        %s965 = scalar_lea.vmem %s9, %s964
      $region80: #{ocrnet_forward.6} parent=71 // pred_fallthru
        _
    $region72: #{ocrnet_forward.6} parent=5 // pred_fallthru
      _
  $region6: #{ocrnet_forward.6} parent=0 // loop_footer
    %s20 = sadd.s32 1, %s16
  $region7: #{ocrnet_forward.6} parent=0 // loop_footer_branch
    %15 = sbr.rel target = $region3
  $region8: #{ocrnet_forward.6} parent=0 // loop_exit
    _

// kernel: ocrnet_forward.7
$region0: #{ocrnet_forward.7}
  #allocation0 [shape = 'u32[]', space=smem, size = 0x4, offset = 0x4, fixed_abs, tag = 'smem constant byte address 0x4 - core index']
  #allocation1 [shape = 'u32[144,128]{1,0:T(1,128)}', space=vmem, size = 0x12000, scoped, tag = 'internal scratch']
  %s0 = inlined_call_operand.vmem [shape: bf16[2,64,32], index: 0, kind: input, shape index: {}]
  %s1 = inlined_call_operand.vmem [shape: bf16[2,16,4], index: 1, kind: input, shape index: {}]
  %s2 = inlined_call_operand.vmem [shape: bf16[2,16,4], index: 2, kind: input, shape index: {}]
  %s3 = inlined_call_operand.vmem [shape: bf16[32,16], index: 3, kind: input, shape index: {}]
  %s4 = inlined_call_operand.vmem [shape: f32[1,16], index: 4, kind: input, shape index: {}]
  %s5 = inlined_call_operand.vmem [shape: bf16[16,16], index: 5, kind: input, shape index: {}]
  %s6 = inlined_call_operand.vmem [shape: f32[1,16], index: 6, kind: input, shape index: {}]
  %s7 = inlined_call_operand.vmem [shape: bf16[16,32], index: 7, kind: input, shape index: {}]
  %s8 = inlined_call_operand.vmem [shape: f32[1,32], index: 8, kind: input, shape index: {}]
  %s9 = inlined_call_operand.vmem [shape: bf16[32,32], index: 9, kind: input, shape index: {}]
  %s10 = inlined_call_operand.vmem [shape: bf16[32,32], index: 10, kind: input, shape index: {}]
  %s11 = inlined_call_operand.vmem [shape: f32[1,32], index: 11, kind: input, shape index: {}]
  %s12 = inlined_call_operand.vmem [shape: bf16[32,128], index: 12, kind: input, shape index: {}]
  %s13 = inlined_call_operand.vmem [shape: f32[1,128], index: 13, kind: input, shape index: {}]
  %s14 = inlined_call_operand.vmem [shape: f32[2,64,128], index: 14, kind: output, shape index: {}]
  %s15 = sld [smem:[#allocation0]]
  $region89: #{ocrnet_forward.7} parent=0
    _
  %s17 = ssub.s32 1, %s15
  %s18 = scalar_select 0, %s17, %s15
  loop: start=0, step=1, limit=6
  $region2: #{ocrnet_forward.7} parent=0 // loop_pre_header
    _
  $region3: #{ocrnet_forward.7} parent=0 // loop_header
    %s20 = sphi 0, %s24
    %p21 = scmp.ge.s32.totalorder %s20, 6
    %s27 = sphi 0, %s39
    %s28 = sphi 0, %s35
    %s29 = sphi 0, %s27
    %s30 = sphi 0, %s28
    %s31 = sphi 0, %s29
    %s32 = sphi 0, %s30
    %s44 = sphi 0, %s46
    %s47 = sphi 0, %s44
    %s48 = sphi 0, %s47
    %s64 = sphi 0, %s48
    %s70 = sphi 0, %s72
    %s73 = sphi 0, %s70
    %s74 = sphi 0, %s73
    %s90 = sphi 0, %s74
    %s96 = sphi 0, %s98
    %s99 = sphi 0, %s96
    %s100 = sphi 0, %s99
    %s116 = sphi 0, %s100
    %s120 = sphi 0, %s120
    %s122 = sphi 0, %s120
    %s123 = sphi 0, %s122
    %s137 = sphi 0, %s123
    %s141 = sphi 0, %s141
    %s143 = sphi 0, %s141
    %s144 = sphi 0, %s143
    %s158 = sphi 0, %s144
    %s162 = sphi 0, %s162
    %s164 = sphi 0, %s162
    %s165 = sphi 0, %s164
    %s179 = sphi 0, %s165
    %s183 = sphi 0, %s183
    %s185 = sphi 0, %s183
    %s186 = sphi 0, %s185
    %s200 = sphi 0, %s186
    %s204 = sphi 0, %s204
    %s206 = sphi 0, %s204
    %s207 = sphi 0, %s206
    %s221 = sphi 0, %s207
    %s225 = sphi 0, %s225
    %s227 = sphi 0, %s225
    %s228 = sphi 0, %s227
    %s242 = sphi 0, %s228
    %s246 = sphi 0, %s246
    %s248 = sphi 0, %s246
    %s249 = sphi 0, %s248
    %s263 = sphi 0, %s249
    %s267 = sphi 0, %s267
    %s269 = sphi 0, %s267
    %s270 = sphi 0, %s269
    %s284 = sphi 0, %s270
    %s288 = sphi 0, %s288
    %s290 = sphi 0, %s288
    %s291 = sphi 0, %s290
    %s305 = sphi 0, %s291
    %s309 = sphi 0, %s309
    %s311 = sphi 0, %s309
    %s312 = sphi 0, %s311
    %s326 = sphi 0, %s312
    %s330 = sphi 0, %s330
    %s332 = sphi 0, %s330
    %s333 = sphi 0, %s332
    %s347 = sphi 0, %s333
    %s355 = sphi 0, %s357
    %s358 = sphi 0, %s355
    %s359 = sphi 0, %s358
    %s375 = sphi 0, %s359
  $region4: #{ocrnet_forward.7} parent=0 // loop_header_branch
    %23 = sbr.rel (%p21) target = $region8
  $region5: #{ocrnet_forward.7} parent=0 // loop_body
    %s25 = ssub.s32 %s20, 1
    %s26 = ssub.s32 %s20, 2
    %s33 = sadd.s32 1, %s28
    %p34 = scmp.ge.s32.totalorder %s33, 2
    %s35 = scalar_select %p34, 0, %s33
    %s36 = sadd.s32 1, %s27
    %s37 = scalar_select %p34, %s36, %s27
    %p38 = scmp.ge.s32.totalorder %s37, 2
    %s39 = scalar_select %p38, 0, %s37
    %s40 = ssub.s32 %s27, %s39
    %s41 = ssub.s32 %s28, %s35
    %s42 = sor.u32 %s40, %s41
    %p43 = scmp.eq.s32.totalorder %s42, 0
    %s45 = sadd.s32 %s44, 1
    %s46 = scalar_select %p43, %s44, %s45
    %p49 = pneg %p43
    %p50 = scmp.eq.s32.totalorder %s20, 3
    %p51 = por %p49, %p50
    %p52 = scmp.ne.s32.totalorder %s44, %s47
    %p53 = scmp.eq.s32.totalorder %s20, 0
    %p54 = por %p52, %p53
    %p55 = scmp.ne.s32.totalorder %s44, %s47
    %p56 = scmp.eq.s32.totalorder %s25, 3
    %p57 = por %p55, %p56
    %p58 = scmp.ne.s32.totalorder %s47, %s48
    %p59 = scmp.eq.s32.totalorder %s25, 0
    %p60 = por %p58, %p59
    %p61 = scmp.ne.s32.totalorder %s47, %s48
    %p62 = scmp.eq.s32.totalorder %s26, 3
    %p63 = por %p61, %p62
    %p65 = scmp.ne.s32.totalorder %s48, %s64
    %p66 = scmp.eq.s32.totalorder %s26, 0
    %p67 = por %p65, %p66
    %s68 = ssub.s32 %s27, %s39
    %p69 = scmp.eq.s32.totalorder %s68, 0
    %s71 = sadd.s32 %s70, 1
    %s72 = scalar_select %p69, %s70, %s71
    %p75 = pneg %p69
    %p76 = scmp.eq.s32.totalorder %s20, 3
    %p77 = por %p75, %p76
    %p78 = scmp.ne.s32.totalorder %s70, %s73
    %p79 = scmp.eq.s32.totalorder %s20, 0
    %p80 = por %p78, %p79
    %p81 = scmp.ne.s32.totalorder %s70, %s73
    %p82 = scmp.eq.s32.totalorder %s25, 3
    %p83 = por %p81, %p82
    %p84 = scmp.ne.s32.totalorder %s73, %s74
    %p85 = scmp.eq.s32.totalorder %s25, 0
    %p86 = por %p84, %p85
    %p87 = scmp.ne.s32.totalorder %s73, %s74
    %p88 = scmp.eq.s32.totalorder %s26, 3
    %p89 = por %p87, %p88
    %p91 = scmp.ne.s32.totalorder %s74, %s90
    %p92 = scmp.eq.s32.totalorder %s26, 0
    %p93 = por %p91, %p92
    %s94 = ssub.s32 %s27, %s39
    %p95 = scmp.eq.s32.totalorder %s94, 0
    %s97 = sadd.s32 %s96, 1
    %s98 = scalar_select %p95, %s96, %s97
    %p101 = pneg %p95
    %p102 = scmp.eq.s32.totalorder %s20, 3
    %p103 = por %p101, %p102
    %p104 = scmp.ne.s32.totalorder %s96, %s99
    %p105 = scmp.eq.s32.totalorder %s20, 0
    %p106 = por %p104, %p105
    %p107 = scmp.ne.s32.totalorder %s96, %s99
    %p108 = scmp.eq.s32.totalorder %s25, 3
    %p109 = por %p107, %p108
    %p110 = scmp.ne.s32.totalorder %s99, %s100
    %p111 = scmp.eq.s32.totalorder %s25, 0
    %p112 = por %p110, %p111
    %p113 = scmp.ne.s32.totalorder %s99, %s100
    %p114 = scmp.eq.s32.totalorder %s26, 3
    %p115 = por %p113, %p114
    %p117 = scmp.ne.s32.totalorder %s100, %s116
    %p118 = scmp.eq.s32.totalorder %s26, 0
    %p119 = por %p117, %p118
    %s121 = sadd.s32 %s120, 1
    %p124 = scmp.eq.s32.totalorder %s20, 3
    %p125 = scmp.ne.s32.totalorder %s120, %s122
    %p126 = scmp.eq.s32.totalorder %s20, 0
    %p127 = por %p125, %p126
    %p128 = scmp.ne.s32.totalorder %s120, %s122
    %p129 = scmp.eq.s32.totalorder %s25, 3
    %p130 = por %p128, %p129
    %p131 = scmp.ne.s32.totalorder %s122, %s123
    %p132 = scmp.eq.s32.totalorder %s25, 0
    %p133 = por %p131, %p132
    %p134 = scmp.ne.s32.totalorder %s122, %s123
    %p135 = scmp.eq.s32.totalorder %s26, 3
    %p136 = por %p134, %p135
    %p138 = scmp.ne.s32.totalorder %s123, %s137
    %p139 = scmp.eq.s32.totalorder %s26, 0
    %p140 = por %p138, %p139
    %s142 = sadd.s32 %s141, 1
    %p145 = scmp.eq.s32.totalorder %s20, 3
    %p146 = scmp.ne.s32.totalorder %s141, %s143
    %p147 = scmp.eq.s32.totalorder %s20, 0
    %p148 = por %p146, %p147
    %p149 = scmp.ne.s32.totalorder %s141, %s143
    %p150 = scmp.eq.s32.totalorder %s25, 3
    %p151 = por %p149, %p150
    %p152 = scmp.ne.s32.totalorder %s143, %s144
    %p153 = scmp.eq.s32.totalorder %s25, 0
    %p154 = por %p152, %p153
    %p155 = scmp.ne.s32.totalorder %s143, %s144
    %p156 = scmp.eq.s32.totalorder %s26, 3
    %p157 = por %p155, %p156
    %p159 = scmp.ne.s32.totalorder %s144, %s158
    %p160 = scmp.eq.s32.totalorder %s26, 0
    %p161 = por %p159, %p160
    %s163 = sadd.s32 %s162, 1
    %p166 = scmp.eq.s32.totalorder %s20, 3
    %p167 = scmp.ne.s32.totalorder %s162, %s164
    %p168 = scmp.eq.s32.totalorder %s20, 0
    %p169 = por %p167, %p168
    %p170 = scmp.ne.s32.totalorder %s162, %s164
    %p171 = scmp.eq.s32.totalorder %s25, 3
    %p172 = por %p170, %p171
    %p173 = scmp.ne.s32.totalorder %s164, %s165
    %p174 = scmp.eq.s32.totalorder %s25, 0
    %p175 = por %p173, %p174
    %p176 = scmp.ne.s32.totalorder %s164, %s165
    %p177 = scmp.eq.s32.totalorder %s26, 3
    %p178 = por %p176, %p177
    %p180 = scmp.ne.s32.totalorder %s165, %s179
    %p181 = scmp.eq.s32.totalorder %s26, 0
    %p182 = por %p180, %p181
    %s184 = sadd.s32 %s183, 1
    %p187 = scmp.eq.s32.totalorder %s20, 3
    %p188 = scmp.ne.s32.totalorder %s183, %s185
    %p189 = scmp.eq.s32.totalorder %s20, 0
    %p190 = por %p188, %p189
    %p191 = scmp.ne.s32.totalorder %s183, %s185
    %p192 = scmp.eq.s32.totalorder %s25, 3
    %p193 = por %p191, %p192
    %p194 = scmp.ne.s32.totalorder %s185, %s186
    %p195 = scmp.eq.s32.totalorder %s25, 0
    %p196 = por %p194, %p195
    %p197 = scmp.ne.s32.totalorder %s185, %s186
    %p198 = scmp.eq.s32.totalorder %s26, 3
    %p199 = por %p197, %p198
    %p201 = scmp.ne.s32.totalorder %s186, %s200
    %p202 = scmp.eq.s32.totalorder %s26, 0
    %p203 = por %p201, %p202
    %s205 = sadd.s32 %s204, 1
    %p208 = scmp.eq.s32.totalorder %s20, 3
    %p209 = scmp.ne.s32.totalorder %s204, %s206
    %p210 = scmp.eq.s32.totalorder %s20, 0
    %p211 = por %p209, %p210
    %p212 = scmp.ne.s32.totalorder %s204, %s206
    %p213 = scmp.eq.s32.totalorder %s25, 3
    %p214 = por %p212, %p213
    %p215 = scmp.ne.s32.totalorder %s206, %s207
    %p216 = scmp.eq.s32.totalorder %s25, 0
    %p217 = por %p215, %p216
    %p218 = scmp.ne.s32.totalorder %s206, %s207
    %p219 = scmp.eq.s32.totalorder %s26, 3
    %p220 = por %p218, %p219
    %p222 = scmp.ne.s32.totalorder %s207, %s221
    %p223 = scmp.eq.s32.totalorder %s26, 0
    %p224 = por %p222, %p223
    %s226 = sadd.s32 %s225, 1
    %p229 = scmp.eq.s32.totalorder %s20, 3
    %p230 = scmp.ne.s32.totalorder %s225, %s227
    %p231 = scmp.eq.s32.totalorder %s20, 0
    %p232 = por %p230, %p231
    %p233 = scmp.ne.s32.totalorder %s225, %s227
    %p234 = scmp.eq.s32.totalorder %s25, 3
    %p235 = por %p233, %p234
    %p236 = scmp.ne.s32.totalorder %s227, %s228
    %p237 = scmp.eq.s32.totalorder %s25, 0
    %p238 = por %p236, %p237
    %p239 = scmp.ne.s32.totalorder %s227, %s228
    %p240 = scmp.eq.s32.totalorder %s26, 3
    %p241 = por %p239, %p240
    %p243 = scmp.ne.s32.totalorder %s228, %s242
    %p244 = scmp.eq.s32.totalorder %s26, 0
    %p245 = por %p243, %p244
    %s247 = sadd.s32 %s246, 1
    %p250 = scmp.eq.s32.totalorder %s20, 3
    %p251 = scmp.ne.s32.totalorder %s246, %s248
    %p252 = scmp.eq.s32.totalorder %s20, 0
    %p253 = por %p251, %p252
    %p254 = scmp.ne.s32.totalorder %s246, %s248
    %p255 = scmp.eq.s32.totalorder %s25, 3
    %p256 = por %p254, %p255
    %p257 = scmp.ne.s32.totalorder %s248, %s249
    %p258 = scmp.eq.s32.totalorder %s25, 0
    %p259 = por %p257, %p258
    %p260 = scmp.ne.s32.totalorder %s248, %s249
    %p261 = scmp.eq.s32.totalorder %s26, 3
    %p262 = por %p260, %p261
    %p264 = scmp.ne.s32.totalorder %s249, %s263
    %p265 = scmp.eq.s32.totalorder %s26, 0
    %p266 = por %p264, %p265
    %s268 = sadd.s32 %s267, 1
    %p271 = scmp.eq.s32.totalorder %s20, 3
    %p272 = scmp.ne.s32.totalorder %s267, %s269
    %p273 = scmp.eq.s32.totalorder %s20, 0
    %p274 = por %p272, %p273
    %p275 = scmp.ne.s32.totalorder %s267, %s269
    %p276 = scmp.eq.s32.totalorder %s25, 3
    %p277 = por %p275, %p276
    %p278 = scmp.ne.s32.totalorder %s269, %s270
    %p279 = scmp.eq.s32.totalorder %s25, 0
    %p280 = por %p278, %p279
    %p281 = scmp.ne.s32.totalorder %s269, %s270
    %p282 = scmp.eq.s32.totalorder %s26, 3
    %p283 = por %p281, %p282
    %p285 = scmp.ne.s32.totalorder %s270, %s284
    %p286 = scmp.eq.s32.totalorder %s26, 0
    %p287 = por %p285, %p286
    %s289 = sadd.s32 %s288, 1
    %p292 = scmp.eq.s32.totalorder %s20, 3
    %p293 = scmp.ne.s32.totalorder %s288, %s290
    %p294 = scmp.eq.s32.totalorder %s20, 0
    %p295 = por %p293, %p294
    %p296 = scmp.ne.s32.totalorder %s288, %s290
    %p297 = scmp.eq.s32.totalorder %s25, 3
    %p298 = por %p296, %p297
    %p299 = scmp.ne.s32.totalorder %s290, %s291
    %p300 = scmp.eq.s32.totalorder %s25, 0
    %p301 = por %p299, %p300
    %p302 = scmp.ne.s32.totalorder %s290, %s291
    %p303 = scmp.eq.s32.totalorder %s26, 3
    %p304 = por %p302, %p303
    %p306 = scmp.ne.s32.totalorder %s291, %s305
    %p307 = scmp.eq.s32.totalorder %s26, 0
    %p308 = por %p306, %p307
    %s310 = sadd.s32 %s309, 1
    %p313 = scmp.eq.s32.totalorder %s20, 3
    %p314 = scmp.ne.s32.totalorder %s309, %s311
    %p315 = scmp.eq.s32.totalorder %s20, 0
    %p316 = por %p314, %p315
    %p317 = scmp.ne.s32.totalorder %s309, %s311
    %p318 = scmp.eq.s32.totalorder %s25, 3
    %p319 = por %p317, %p318
    %p320 = scmp.ne.s32.totalorder %s311, %s312
    %p321 = scmp.eq.s32.totalorder %s25, 0
    %p322 = por %p320, %p321
    %p323 = scmp.ne.s32.totalorder %s311, %s312
    %p324 = scmp.eq.s32.totalorder %s26, 3
    %p325 = por %p323, %p324
    %p327 = scmp.ne.s32.totalorder %s312, %s326
    %p328 = scmp.eq.s32.totalorder %s26, 0
    %p329 = por %p327, %p328
    %s331 = sadd.s32 %s330, 1
    %p334 = scmp.eq.s32.totalorder %s20, 3
    %p335 = scmp.ne.s32.totalorder %s330, %s332
    %p336 = scmp.eq.s32.totalorder %s20, 0
    %p337 = por %p335, %p336
    %p338 = scmp.ne.s32.totalorder %s330, %s332
    %p339 = scmp.eq.s32.totalorder %s25, 3
    %p340 = por %p338, %p339
    %p341 = scmp.ne.s32.totalorder %s332, %s333
    %p342 = scmp.eq.s32.totalorder %s25, 0
    %p343 = por %p341, %p342
    %p344 = scmp.ne.s32.totalorder %s332, %s333
    %p345 = scmp.eq.s32.totalorder %s26, 3
    %p346 = por %p344, %p345
    %p348 = scmp.ne.s32.totalorder %s333, %s347
    %p349 = scmp.eq.s32.totalorder %s26, 0
    %p350 = por %p348, %p349
    %s351 = ssub.s32 %s27, %s39
    %s352 = ssub.s32 %s28, %s35
    %s353 = sor.u32 %s351, %s352
    %p354 = scmp.eq.s32.totalorder %s353, 0
    %s356 = sadd.s32 %s355, 1
    %s357 = scalar_select %p354, %s355, %s356
    %p360 = pneg %p354
    %p361 = scmp.eq.s32.totalorder %s20, 3
    %p362 = por %p360, %p361
    %p363 = scmp.ne.s32.totalorder %s355, %s358
    %p364 = scmp.eq.s32.totalorder %s20, 0
    %p365 = por %p363, %p364
    %p366 = scmp.ne.s32.totalorder %s355, %s358
    %p367 = scmp.eq.s32.totalorder %s25, 3
    %p368 = por %p366, %p367
    %p369 = scmp.ne.s32.totalorder %s358, %s359
    %p370 = scmp.eq.s32.totalorder %s25, 0
    %p371 = por %p369, %p370
    %p372 = scmp.ne.s32.totalorder %s358, %s359
    %p373 = scmp.eq.s32.totalorder %s26, 3
    %p374 = por %p372, %p373
    %p376 = scmp.ne.s32.totalorder %s359, %s375
    %p377 = scmp.eq.s32.totalorder %s26, 0
    %p378 = por %p376, %p377
    %p379 = scmp.le.s32.totalorder 1, %s20
    %p380 = scmp.lt.s32.totalorder %s20, 5
    %p381 = pnand %p379, %p380
    %p382 = pneg %p381
    // Predicated region
    $region9: #{ocrnet_forward.7} parent=5 // pred_check
      _
    $region10: #{ocrnet_forward.7} parent=5 // pred_check_branch
      %384 = sbr.rel (%p381) target = $region12
    $region11: #{ocrnet_forward.7} parent=5 // pred_region
      %s385 = ssub.s32 %s20, 1
      // Predicated region
      $region13: #{ocrnet_forward.7} parent=11 // pred_check
        %p386 = pneg %p133
      $region14: #{ocrnet_forward.7} parent=11 // pred_check_branch
        %388 = sbr.rel (%p386) target = $region16
      $region15: #{ocrnet_forward.7} parent=11 // pred_region
        _
      $region16: #{ocrnet_forward.7} parent=11 // pred_fallthru
        _
      // Predicated region
      $region17: #{ocrnet_forward.7} parent=11 // pred_check
        %p389 = pneg %p154
      $region18: #{ocrnet_forward.7} parent=11 // pred_check_branch
        %391 = sbr.rel (%p389) target = $region20
      $region19: #{ocrnet_forward.7} parent=11 // pred_region
        _
      $region20: #{ocrnet_forward.7} parent=11 // pred_fallthru
        _
      // Predicated region
      $region21: #{ocrnet_forward.7} parent=11 // pred_check
        %p392 = pneg %p175
      $region22: #{ocrnet_forward.7} parent=11 // pred_check_branch
        %394 = sbr.rel (%p392) target = $region24
      $region23: #{ocrnet_forward.7} parent=11 // pred_region
        _
      $region24: #{ocrnet_forward.7} parent=11 // pred_fallthru
        _
      // Predicated region
      $region25: #{ocrnet_forward.7} parent=11 // pred_check
        %p395 = pneg %p196
      $region26: #{ocrnet_forward.7} parent=11 // pred_check_branch
        %397 = sbr.rel (%p395) target = $region28
      $region27: #{ocrnet_forward.7} parent=11 // pred_region
        _
      $region28: #{ocrnet_forward.7} parent=11 // pred_fallthru
        _
      // Predicated region
      $region29: #{ocrnet_forward.7} parent=11 // pred_check
        %p398 = pneg %p217
      $region30: #{ocrnet_forward.7} parent=11 // pred_check_branch
        %400 = sbr.rel (%p398) target = $region32
      $region31: #{ocrnet_forward.7} parent=11 // pred_region
        _
      $region32: #{ocrnet_forward.7} parent=11 // pred_fallthru
        _
      // Predicated region
      $region33: #{ocrnet_forward.7} parent=11 // pred_check
        %p401 = pneg %p238
      $region34: #{ocrnet_forward.7} parent=11 // pred_check_branch
        %403 = sbr.rel (%p401) target = $region36
      $region35: #{ocrnet_forward.7} parent=11 // pred_region
        _
      $region36: #{ocrnet_forward.7} parent=11 // pred_fallthru
        _
      // Predicated region
      $region37: #{ocrnet_forward.7} parent=11 // pred_check
        %p404 = pneg %p259
      $region38: #{ocrnet_forward.7} parent=11 // pred_check_branch
        %406 = sbr.rel (%p404) target = $region40
      $region39: #{ocrnet_forward.7} parent=11 // pred_region
        _
      $region40: #{ocrnet_forward.7} parent=11 // pred_fallthru
        _
      // Predicated region
      $region41: #{ocrnet_forward.7} parent=11 // pred_check
        %p407 = pneg %p280
      $region42: #{ocrnet_forward.7} parent=11 // pred_check_branch
        %409 = sbr.rel (%p407) target = $region44
      $region43: #{ocrnet_forward.7} parent=11 // pred_region
        _
      $region44: #{ocrnet_forward.7} parent=11 // pred_fallthru
        _
      // Predicated region
      $region45: #{ocrnet_forward.7} parent=11 // pred_check
        %p410 = pneg %p301
      $region46: #{ocrnet_forward.7} parent=11 // pred_check_branch
        %412 = sbr.rel (%p410) target = $region48
      $region47: #{ocrnet_forward.7} parent=11 // pred_region
        _
      $region48: #{ocrnet_forward.7} parent=11 // pred_fallthru
        _
      // Predicated region
      $region49: #{ocrnet_forward.7} parent=11 // pred_check
        %p413 = pneg %p322
      $region50: #{ocrnet_forward.7} parent=11 // pred_check_branch
        %415 = sbr.rel (%p413) target = $region52
      $region51: #{ocrnet_forward.7} parent=11 // pred_region
        _
      $region52: #{ocrnet_forward.7} parent=11 // pred_fallthru
        _
      // Predicated region
      $region53: #{ocrnet_forward.7} parent=11 // pred_check
        %p416 = pneg %p343
      $region54: #{ocrnet_forward.7} parent=11 // pred_check_branch
        %418 = sbr.rel (%p416) target = $region56
      $region55: #{ocrnet_forward.7} parent=11 // pred_region
        _
      $region56: #{ocrnet_forward.7} parent=11 // pred_fallthru
        _
    $region12: #{ocrnet_forward.7} parent=5 // pred_fallthru
      _
    %p419 = scmp.lt.s32.totalorder %s20, 4
    // Predicated region
    $region57: #{ocrnet_forward.7} parent=5 // pred_check
      %p420 = pneg %p419
    $region58: #{ocrnet_forward.7} parent=5 // pred_check_branch
      %422 = sbr.rel (%p420) target = $region60
    $region59: #{ocrnet_forward.7} parent=5 // pred_region
      // Predicated region
      $region61: #{ocrnet_forward.7} parent=59 // pred_check
        %p423 = pneg %p54
      $region62: #{ocrnet_forward.7} parent=59 // pred_check_branch
        %425 = sbr.rel (%p423) target = $region64
      $region63: #{ocrnet_forward.7} parent=59 // pred_region
        %s426 = smul.u32 4, %s28
        %p427 = scmp.lt.s32.totalorder %s27, 1
        %s428 = scalar_select %p427, %s27, 1
        %p429 = scmp.lt.s32.totalorder %s426, 7
        %s430 = scalar_select %p429, %s426, 7
        %s431 = smul.addr %s428, 8
        %s432 = sadd.s32 %s430, %s431
        %s433 = smul.addr %s432, 4
        %s434 = scalar_lea.vmem %s0, %s433
        %s435 = smul.u32 4, %s28
      $region64: #{ocrnet_forward.7} parent=59 // pred_fallthru
        _
      // Predicated region
      $region65: #{ocrnet_forward.7} parent=59 // pred_check
        %p436 = pneg %p80
      $region66: #{ocrnet_forward.7} parent=59 // pred_check_branch
        %438 = sbr.rel (%p436) target = $region68
      $region67: #{ocrnet_forward.7} parent=59 // pred_region
        %p439 = scmp.lt.s32.totalorder %s27, 1
        %s440 = scalar_select %p439, %s27, 1
        %s441 = smul.addr %s440, 2
        %s442 = smul.addr %s441, 4
        %s443 = scalar_lea.vmem %s1, %s442
      $region68: #{ocrnet_forward.7} parent=59 // pred_fallthru
        _
      // Predicated region
      $region69: #{ocrnet_forward.7} parent=59 // pred_check
        %p444 = pneg %p106
      $region70: #{ocrnet_forward.7} parent=59 // pred_check_branch
        %446 = sbr.rel (%p444) target = $region72
      $region71: #{ocrnet_forward.7} parent=59 // pred_region
        %p447 = scmp.lt.s32.totalorder %s27, 1
        %s448 = scalar_select %p447, %s27, 1
        %s449 = smul.addr %s448, 2
        %s450 = smul.addr %s449, 4
        %s451 = scalar_lea.vmem %s2, %s450
      $region72: #{ocrnet_forward.7} parent=59 // pred_fallthru
        _
    $region60: #{ocrnet_forward.7} parent=5 // pred_fallthru
      _
    %p452 = scmp.le.s32.totalorder 1, %s20
    %p453 = scmp.lt.s32.totalorder %s20, 5
    %p454 = pnand %p452, %p453
    %p455 = pneg %p454
    // Predicated region
    $region73: #{ocrnet_forward.7} parent=5 // pred_check
      _
    $region74: #{ocrnet_forward.7} parent=5 // pred_check_branch
      %457 = sbr.rel (%p454) target = $region76
    $region75: #{ocrnet_forward.7} parent=5 // pred_region
      %s458 = ssub.s32 %s20, 1
      %s459 = smul.u32 4, %s30
      %p460 = scmp.lt.s32.totalorder %s29, 1
      %s461 = scalar_select %p460, %s29, 1
      %p462 = scmp.lt.s32.totalorder %s459, 7
      %s463 = scalar_select %p462, %s459, 7
      %s464 = smul.addr %s461, 8
      %s465 = sadd.s32 %s463, %s464
      %s466 = smul.addr %s465, 4
      %s467 = scalar_lea.vmem %s0, %s466
      %p468 = pneg %p60
      %p469 = pneg %p57
      %p470 = scmp.lt.s32.totalorder %s29, 1
      %s471 = scalar_select %p470, %s29, 1
      %s472 = smul.addr %s471, 2
      %s473 = smul.addr %s472, 4
      %s474 = scalar_lea.vmem %s1, %s473
      %p475 = pneg %p86
      %p476 = pneg %p83
      %p477 = scmp.lt.s32.totalorder %s29, 1
      %s478 = scalar_select %p477, %s29, 1
      %s479 = smul.addr %s478, 2
      %s480 = smul.addr %s479, 4
      %s481 = scalar_lea.vmem %s2, %s480
      %p482 = pneg %p112
      %p483 = pneg %p109
      %p484 = pneg %p133
      %p485 = pneg %p130
      %p486 = pneg %p154
      %p487 = pneg %p151
      %p488 = pneg %p175
      %p489 = pneg %p172
      %p490 = pneg %p196
      %p491 = pneg %p193
      %p492 = pneg %p217
      %p493 = pneg %p214
      %p494 = pneg %p238
      %p495 = pneg %p235
      %p496 = pneg %p259
      %p497 = pneg %p256
      %p498 = pneg %p280
      %p499 = pneg %p277
      %p500 = pneg %p301
      %p501 = pneg %p298
      %p502 = pneg %p322
      %p503 = pneg %p319
      %p504 = pneg %p343
      %p505 = pneg %p340
      %p506 = pneg %p371
      %p507 = pneg %p368
      %s508 = smul.u32 4, %s30
      %p509 = scmp.lt.s32.totalorder %s29, 1
      %s510 = scalar_select %p509, %s29, 1
      %p511 = scmp.lt.s32.totalorder %s508, 7
      %s512 = scalar_select %p511, %s508, 7
      %s513 = smul.addr %s510, 8
      %s514 = sadd.s32 %s512, %s513
      %s515 = smul.addr %s514, 8
      %s516 = scalar_lea.vmem %s14, %s515
      %s517 = smul.u32 4, %s30
      %p518 = scmp.lt.s32.totalorder %s29, 1
      %s519 = scalar_select %p518, %s29, 1
      %p520 = scmp.lt.s32.totalorder %s517, 7
      %s521 = scalar_select %p520, %s517, 7
      %s522 = smul.addr %s519, 8
      %s523 = sadd.s32 %s521, %s522
      %s524 = smul.addr %s523, 4
      %s525 = scalar_lea.vmem %s0, %s524
      %s526 = smul.u32 4, %s30
      %p527 = scmp.lt.s32.totalorder %s29, 1
      %s528 = scalar_select %p527, %s29, 1
      %s529 = smul.addr %s528, 2
      %s530 = smul.addr %s529, 4
      %s531 = scalar_lea.vmem %s1, %s530
      %p532 = scmp.lt.s32.totalorder %s29, 1
      %s533 = scalar_select %p532, %s29, 1
      %s534 = smul.addr %s533, 2
      %s535 = smul.addr %s534, 4
      %s536 = scalar_lea.vmem %s2, %s535
      %s537 = smul.u32 4, %s30
      %p538 = scmp.lt.s32.totalorder %s29, 1
      %s539 = scalar_select %p538, %s29, 1
      %p540 = scmp.lt.s32.totalorder %s537, 7
      %s541 = scalar_select %p540, %s537, 7
      %s542 = smul.addr %s539, 8
      %s543 = sadd.s32 %s541, %s542
      %s544 = smul.addr %s543, 8
      %s545 = scalar_lea.vmem %s14, %s544
      %s546 = smul.u32 4, %s30
      %v548 = vld [vmem:[%s525] sm:$0xf]
      %v549 = vld [vmem:[%s525 + $0x4] sm:$0xf]
      %v550 = vld [vmem:[%s525 + $0x8] sm:$0xf]
      %v551 = vld [vmem:[%s525 + $0xc] sm:$0xf]
      %v552 = vld [vmem:[%s3] sm:$0xf]
      %v553 = vld [vmem:[%s3 + $0x4] sm:$0xf]
      %v554 = vld [vmem:[%s3 + $0x8] sm:$0xf]
      %v555 = vld [vmem:[%s3 + $0xc] sm:$0xf]
      %v556 = vld [vmem:[%s4] sm:$0x1]
      %v558 = vlaneseq
      %v559 = vshrl.u32 %v558, 7
      %v560 = vsub.s32 0, %v559
      %v561 = vrot.slane %v556, %v560
      %v567 = vunpack.c.l.b16 %v548
      %v568 = vunpack.c.l.b16 %v549
      %v569 = vunpack.c.l.b16 %v550
      %v570 = vunpack.c.l.b16 %v551
      %v571 = vpack.c.b16 %v568, %v567
      %v572 = vpack.c.b16 %v570, %v569
      %v577 = vunpack.c.l.b16 %v552
      %v578 = vunpack.c.l.b16 %v553
      %v579 = vunpack.c.l.b16 %v554
      %v580 = vunpack.c.l.b16 %v555
      %v581 = vpack.c.b16 %v578, %v577
      %v582 = vpack.c.b16 %v580, %v579
      %vm585 = vcmask 261120
      %v587 = vsel %vm585, %v571, 0
      %v590 = vsel %vm585, %v572, 0
      %592 = vmatprep.subr.bf16.mxu0 0
      %593 = vmatpush1.bf16.msra.mxu0 0
      %594 = vmatprep.subr.bf16.mxu0 0
      %595 = vmatpush1.bf16.msra.mxu0 0
      %596 = vmatprep.subr.bf16.mxu0 0
      %597 = vmatpush1.bf16.msra.mxu0 0
      %598 = vmatprep.subr.bf16.mxu0 0
      %599 = vmatpush1.bf16.msra.mxu0 0
      %600 = vmatprep.subr.bf16.mxu0 0
      %601 = vmatpush1.bf16.msra.mxu0 0
      %602 = vmatprep.subr.bf16.mxu0 0
      %603 = vmatpush1.bf16.msra.mxu0 0
      %604 = vmatprep.subr.bf16.mxu0 0
      %605 = vmatpush1.bf16.msra.mxu0 %v582
      %606 = vmatprep.subr.bf16.mxu0 0
      %607 = vmatpush1.bf16.msra.mxu0 %v581
      %608 = vmatprep.subr.bf16.mxu0 0
      %609 = vmatpush2.bf16.msra.mxu0 0
      %610 = vmatprep.subr.bf16.mxu0 0
      %611 = vmatpush2.bf16.msra.mxu0 0
      %612 = vmatprep.subr.bf16.mxu0 0
      %613 = vmatpush2.bf16.msra.mxu0 0
      %614 = vmatprep.subr.bf16.mxu0 0
      %615 = vmatpush2.bf16.msra.mxu0 0
      %616 = vmatprep.subr.bf16.mxu0 0
      %617 = vmatpush2.bf16.msra.mxu0 0
      %618 = vmatprep.subr.bf16.mxu0 0
      %619 = vmatpush2.bf16.msra.mxu0 0
      %620 = vmatprep.subr.bf16.mxu0 0
      %621 = vmatpush2.bf16.msra.mxu0 0
      %622 = vmatprep.subr.bf16.mxu0 0
      %623 = vmatpush2.bf16.msra.mxu0 0
      %624 = vmatprep.mubr.bf16.mxu0 0
      %625 = vmatmul.mubr.bf16.gmra.mxu0 %v587
      %v626 = vpop.f32.mrf.mxu0
      %v627 = vadd.f32 %v561, %v626
      %v628 = vpop.f32.mrf.mxu0
      %v629 = vpop.f32.mrf.mxu0
      %v630 = vadd.f32 %v561, %v629
      %v631 = vpop.f32.mrf.mxu0
      %632 = vmatprep.mubr.bf16.mxu0 0
      %633 = vmatmul.mubr.bf16.gmra.mxu0 %v590
      %v634 = vpop.f32.mrf.mxu0
      %v635 = vadd.f32 %v561, %v634
      %v636 = vpop.f32.mrf.mxu0
      %v637 = vpop.f32.mrf.mxu0
      %v638 = vadd.f32 %v561, %v637
      %v639 = vpop.f32.mrf.mxu0
      %640 = vdwg.mxu0
      %v641 = vmax.f32 %v627, 0.0
      %v642 = vmax.f32 %v630, 0.0
      %v643 = vmax.f32 %v635, 0.0
      %v644 = vmax.f32 %v638, 0.0
      %v645 = vpack.c.bf16 %v642, %v641
      %v646 = vpack.c.bf16 %v644, %v643
      %v647 = vld [vmem:[%s5] sm:$0xf]
      %v648 = vld [vmem:[%s5 + $0x4] sm:$0xf]
      %v649 = vld [vmem:[%s6] sm:$0x1]
      %v651 = vlaneseq
      %v652 = vshrl.u32 %v651, 7
      %v653 = vsub.s32 0, %v652
      %v654 = vrot.slane %v649, %v653
      %v658 = vunpack.c.l.b16 %v647
      %v659 = vunpack.c.l.b16 %v648
      %v660 = vpack.c.b16 %v659, %v658
      %vm662 = vcmask 130048
      %v664 = vsel %vm662, %v645, 0
      %v667 = vsel %vm662, %v646, 0
      %669 = vmatprep.subr.bf16.mxu0 0
      %670 = vmatpush1.bf16.msra.mxu0 0
      %671 = vmatprep.subr.bf16.mxu0 0
      %672 = vmatpush1.bf16.msra.mxu0 0
      %673 = vmatprep.subr.bf16.mxu0 0
      %674 = vmatpush1.bf16.msra.mxu0 0
      %675 = vmatprep.subr.bf16.mxu0 0
      %676 = vmatpush1.bf16.msra.mxu0 0
      %677 = vmatprep.subr.bf16.mxu0 0
      %678 = vmatpush1.bf16.msra.mxu0 0
      %679 = vmatprep.subr.bf16.mxu0 0
      %680 = vmatpush1.bf16.msra.mxu0 0
      %681 = vmatprep.subr.bf16.mxu0 0
      %682 = vmatpush1.bf16.msra.mxu0 0
      %683 = vmatprep.subr.bf16.mxu0 0
      %684 = vmatpush1.bf16.msra.mxu0 %v660
      %685 = vmatprep.subr.bf16.mxu0 0
      %686 = vmatpush2.bf16.msra.mxu0 0
      %687 = vmatprep.subr.bf16.mxu0 0
      %688 = vmatpush2.bf16.msra.mxu0 0
      %689 = vmatprep.subr.bf16.mxu0 0
      %690 = vmatpush2.bf16.msra.mxu0 0
      %691 = vmatprep.subr.bf16.mxu0 0
      %692 = vmatpush2.bf16.msra.mxu0 0
      %693 = vmatprep.subr.bf16.mxu0 0
      %694 = vmatpush2.bf16.msra.mxu0 0
      %695 = vmatprep.subr.bf16.mxu0 0
      %696 = vmatpush2.bf16.msra.mxu0 0
      %697 = vmatprep.subr.bf16.mxu0 0
      %698 = vmatpush2.bf16.msra.mxu0 0
      %699 = vmatprep.subr.bf16.mxu0 0
      %700 = vmatpush2.bf16.msra.mxu0 0
      %701 = vmatprep.mubr.bf16.mxu0 0
      %702 = vmatmul.mubr.bf16.gmra.mxu0 %v664
      %v703 = vpop.f32.mrf.mxu0
      %v704 = vadd.f32 %v654, %v703
      %v705 = vpop.f32.mrf.mxu0
      %v706 = vpop.f32.mrf.mxu0
      %v707 = vadd.f32 %v654, %v706
      %v708 = vpop.f32.mrf.mxu0
      %709 = vmatprep.mubr.bf16.mxu0 0
      %710 = vmatmul.mubr.bf16.gmra.mxu0 %v667
      %v711 = vpop.f32.mrf.mxu0
      %v712 = vadd.f32 %v654, %v711
      %v713 = vpop.f32.mrf.mxu0
      %v714 = vpop.f32.mrf.mxu0
      %v715 = vadd.f32 %v654, %v714
      %v716 = vpop.f32.mrf.mxu0
      %717 = vdwg.mxu0
      %v718 = vmax.f32 %v704, 0.0
      %v719 = vmax.f32 %v707, 0.0
      %v720 = vmax.f32 %v712, 0.0
      %v721 = vmax.f32 %v715, 0.0
      %v722 = vpack.c.bf16 %v719, %v718
      %v723 = vpack.c.bf16 %v721, %v720
      %v724 = vld [vmem:[%s531] sm:$0xf]
      %v725 = vld [vmem:[%s531 + $0x4] sm:$0xf]
      %v728 = vunpack.c.l.b16 %v724
      %v729 = vunpack.c.l.b16 %v725
      %v730 = vpack.c.b16 %v729, %v728
      %v733 = vsel %vm662, %v722, 0
      %v736 = vsel %vm662, %v723, 0
      %738 = vmatprep.subr.bf16.mxu0 0
      %739 = vmatpush1.bf16.msra.mxu0 0
      %740 = vmatprep.subr.bf16.mxu0 0
      %741 = vmatpush1.bf16.msra.mxu0 0
      %742 = vmatprep.subr.bf16.mxu0 0
      %743 = vmatpush1.bf16.msra.mxu0 0
      %744 = vmatprep.subr.bf16.mxu0 0
      %745 = vmatpush1.bf16.msra.mxu0 0
      %746 = vmatprep.subr.bf16.mxu0 0
      %747 = vmatpush1.bf16.msra.mxu0 0
      %748 = vmatprep.subr.bf16.mxu0 0
      %749 = vmatpush1.bf16.msra.mxu0 0
      %750 = vmatprep.subr.bf16.mxu0 0
      %751 = vmatpush1.bf16.msra.mxu0 0
      %752 = vmatprep.subr.bf16.mxu0 0
      %753 = vmatpush1.bf16.msra.mxu0 %v730
      %754 = vmatprep.subr.bf16.mxu0 0
      %755 = vmatpush2.bf16.msra.mxu0 0
      %756 = vmatprep.subr.bf16.mxu0 0
      %757 = vmatpush2.bf16.msra.mxu0 0
      %758 = vmatprep.subr.bf16.mxu0 0
      %759 = vmatpush2.bf16.msra.mxu0 0
      %760 = vmatprep.subr.bf16.mxu0 0
      %761 = vmatpush2.bf16.msra.mxu0 0
      %762 = vmatprep.subr.bf16.mxu0 0
      %763 = vmatpush2.bf16.msra.mxu0 0
      %764 = vmatprep.subr.bf16.mxu0 0
      %765 = vmatpush2.bf16.msra.mxu0 0
      %766 = vmatprep.subr.bf16.mxu0 0
      %767 = vmatpush2.bf16.msra.mxu0 0
      %768 = vmatprep.subr.bf16.mxu0 0
      %769 = vmatpush2.bf16.msra.mxu0 0
      %770 = vmatprep.mubr.bf16.mxu0 0
      %771 = vmatmul.mubr.bf16.gmra.mxu0 %v733
      %v772 = vpop.f32.mrf.mxu0
      %v773 = vadd.f32 0.0, %v772
      %v774 = vpop.f32.mrf.mxu0
      %v775 = vpop.f32.mrf.mxu0
      %v776 = vadd.f32 0.0, %v775
      %v777 = vpop.f32.mrf.mxu0
      %778 = vmatprep.mubr.bf16.mxu0 0
      %779 = vmatmul.mubr.bf16.gmra.mxu0 %v736
      %v780 = vpop.f32.mrf.mxu0
      %v781 = vadd.f32 0.0, %v780
      %v782 = vpop.f32.mrf.mxu0
      %v783 = vpop.f32.mrf.mxu0
      %v784 = vadd.f32 0.0, %v783
      %v785 = vpop.f32.mrf.mxu0
      %786 = vdwg.mxu0
      %vm787 = vcmask 31744
      %v788 = vsel %vm787, %v773, -inf
      %789 = vmax.xlane.f32.xlu0 %v788
      %v790 = vpop.xlane.xlu0 %789
      %v791 = vsel %vm787, %v776, -inf
      %792 = vmax.xlane.f32.xlu0 %v791
      %v793 = vpop.xlane.xlu0 %792
      %v794 = vsel %vm787, %v781, -inf
      %795 = vmax.xlane.f32.xlu0 %v794
      %v796 = vpop.xlane.xlu0 %795
      %v797 = vsel %vm787, %v784, -inf
      %798 = vmax.xlane.f32.xlu0 %v797
      %v799 = vpop.xlane.xlu0 %798
      %v800 = vsub.f32 %v773, %v790
      %v801 = vsub.f32 %v776, %v793
      %v802 = vsub.f32 %v781, %v796
      %v803 = vsub.f32 %v784, %v799
      %v804 = vmul.f32 %v800, 1.442695
      %v805 = vpow.pop %v804
      %v806 = vmul.f32 %v801, 1.442695
      %v807 = vpow.pop %v806
      %v808 = vmul.f32 %v802, 1.442695
      %v809 = vpow.pop %v808
      %v810 = vmul.f32 %v803, 1.442695
      %v811 = vpow.pop %v810
      %v812 = vsel %vm787, %v805, 0.0
      %813 = vadd.xlane.f32.xlu0 %v812
      %v814 = vpop.xlane.xlu0 %813
      %v815 = vsel %vm787, %v807, 0.0
      %816 = vadd.xlane.f32.xlu0 %v815
      %v817 = vpop.xlane.xlu0 %816
      %v818 = vsel %vm787, %v809, 0.0
      %819 = vadd.xlane.f32.xlu0 %v818
      %v820 = vpop.xlane.xlu0 %819
      %v821 = vsel %vm787, %v811, 0.0
      %822 = vadd.xlane.f32.xlu0 %v821
      %v823 = vpop.xlane.xlu0 %822
      %v824 = vrcp.pop %v814
      %v825 = vmul.f32 %v805, %v824
      %v826 = vrcp.pop %v817
      %v827 = vmul.f32 %v807, %v826
      %v828 = vrcp.pop %v820
      %v829 = vmul.f32 %v809, %v828
      %v830 = vrcp.pop %v823
      %v831 = vmul.f32 %v811, %v830
      %v832 = vpack.c.bf16 %v827, %v825
      %v833 = vpack.c.bf16 %v831, %v829
      %v834 = vld [vmem:[%s536] sm:$0xf]
      %v835 = vld [vmem:[%s536 + $0x4] sm:$0xf]
      %v838 = vunpack.c.l.b16 %v834
      %v839 = vunpack.c.l.b16 %v835
      %v840 = vpack.c.b16 %v839, %v838
      %v842 = vsel %vm787, %v832, 0
      %v845 = vsel %vm787, %v833, 0
      %v848 = vsel %vm787, %v840, 0
      %850 = vmatprep.subr.bf16.mxu0 0
      %851 = vmatpush1.bf16.xpose.msra.mxu0 0
      %852 = vmatprep.subr.bf16.mxu0 0
      %853 = vmatpush1.bf16.xpose.msra.mxu0 0
      %854 = vmatprep.subr.bf16.mxu0 0
      %855 = vmatpush1.bf16.xpose.msra.mxu0 0
      %856 = vmatprep.subr.bf16.mxu0 0
      %857 = vmatpush1.bf16.xpose.msra.mxu0 0
      %858 = vmatprep.subr.bf16.mxu0 0
      %859 = vmatpush1.bf16.xpose.msra.mxu0 0
      %860 = vmatprep.subr.bf16.mxu0 0
      %861 = vmatpush1.bf16.xpose.msra.mxu0 0
      %862 = vmatprep.subr.bf16.mxu0 0
      %863 = vmatpush1.bf16.xpose.msra.mxu0 0
      %864 = vmatprep.subr.bf16.mxu0 0
      %865 = vmatpush1.bf16.xpose.msra.mxu0 %v848
      %866 = vmatprep.subr.bf16.mxu0 0
      %867 = vmatpush2.bf16.xpose.msra.mxu0 0
      %868 = vmatprep.subr.bf16.mxu0 0
      %869 = vmatpush2.bf16.xpose.msra.mxu0 0
      %870 = vmatprep.subr.bf16.mxu0 0
      %871 = vmatpush2.bf16.xpose.msra.mxu0 0
      %872 = vmatprep.subr.bf16.mxu0 0
      %873 = vmatpush2.bf16.xpose.msra.mxu0 0
      %874 = vmatprep.subr.bf16.mxu0 0
      %875 = vmatpush2.bf16.xpose.msra.mxu0 0
      %876 = vmatprep.subr.bf16.mxu0 0
      %877 = vmatpush2.bf16.xpose.msra.mxu0 0
      %878 = vmatprep.subr.bf16.mxu0 0
      %879 = vmatpush2.bf16.xpose.msra.mxu0 0
      %880 = vmatprep.subr.bf16.mxu0 0
      %881 = vmatpush2.bf16.xpose.msra.mxu0 0
      %882 = vmatprep.mubr.bf16.mxu0 0
      %883 = vmatmul.mubr.bf16.gmra.mxu0 %v842
      %v884 = vpop.f32.mrf.mxu0
      %v885 = vadd.f32 0.0, %v884
      %v886 = vpop.f32.mrf.mxu0
      %v887 = vpop.f32.mrf.mxu0
      %v888 = vadd.f32 0.0, %v887
      %v889 = vpop.f32.mrf.mxu0
      %890 = vmatprep.mubr.bf16.mxu0 0
      %891 = vmatmul.mubr.bf16.gmra.mxu0 %v845
      %v892 = vpop.f32.mrf.mxu0
      %v893 = vadd.f32 0.0, %v892
      %v894 = vpop.f32.mrf.mxu0
      %v895 = vpop.f32.mrf.mxu0
      %v896 = vadd.f32 0.0, %v895
      %v897 = vpop.f32.mrf.mxu0
      %898 = vdwg.mxu0
      %v899 = vpack.c.bf16 %v888, %v885
      %v900 = vpack.c.bf16 %v896, %v893
      %v901 = vld [vmem:[%s7] sm:$0xf]
      %v902 = vld [vmem:[%s7 + $0x4] sm:$0xf]
      %v903 = vld [vmem:[%s8] sm:$0x1]
      %v905 = vlaneseq
      %v906 = vshrl.u32 %v905, 7
      %v907 = vsub.s32 0, %v906
      %v908 = vrot.slane %v903, %v907
      %v912 = vunpack.c.l.b16 %v901
      %v913 = vunpack.c.l.b16 %v902
      %v914 = vpack.c.b16 %v913, %v912
      %v917 = vsel %vm662, %v899, 0
      %v920 = vsel %vm662, %v900, 0
      %922 = vmatprep.subr.bf16.mxu0 0
      %923 = vmatpush1.bf16.msra.mxu0 0
      %924 = vmatprep.subr.bf16.mxu0 0
      %925 = vmatpush1.bf16.msra.mxu0 0
      %926 = vmatprep.subr.bf16.mxu0 0
      %927 = vmatpush1.bf16.msra.mxu0 0
      %928 = vmatprep.subr.bf16.mxu0 0
      %929 = vmatpush1.bf16.msra.mxu0 0
      %930 = vmatprep.subr.bf16.mxu0 0
      %931 = vmatpush1.bf16.msra.mxu0 0
      %932 = vmatprep.subr.bf16.mxu0 0
      %933 = vmatpush1.bf16.msra.mxu0 0
      %934 = vmatprep.subr.bf16.mxu0 0
      %935 = vmatpush1.bf16.msra.mxu0 0
      %936 = vmatprep.subr.bf16.mxu0 0
      %937 = vmatpush1.bf16.msra.mxu0 %v914
      %938 = vmatprep.subr.bf16.mxu0 0
      %939 = vmatpush2.bf16.msra.mxu0 0
      %940 = vmatprep.subr.bf16.mxu0 0
      %941 = vmatpush2.bf16.msra.mxu0 0
      %942 = vmatprep.subr.bf16.mxu0 0
      %943 = vmatpush2.bf16.msra.mxu0 0
      %944 = vmatprep.subr.bf16.mxu0 0
      %945 = vmatpush2.bf16.msra.mxu0 0
      %946 = vmatprep.subr.bf16.mxu0 0
      %947 = vmatpush2.bf16.msra.mxu0 0
      %948 = vmatprep.subr.bf16.mxu0 0
      %949 = vmatpush2.bf16.msra.mxu0 0
      %950 = vmatprep.subr.bf16.mxu0 0
      %951 = vmatpush2.bf16.msra.mxu0 0
      %952 = vmatprep.subr.bf16.mxu0 0
      %953 = vmatpush2.bf16.msra.mxu0 0
      %954 = vmatprep.mubr.bf16.mxu0 0
      %955 = vmatmul.mubr.bf16.gmra.mxu0 %v917
      %v956 = vpop.f32.mrf.mxu0
      %v957 = vadd.f32 %v908, %v956
      %v958 = vpop.f32.mrf.mxu0
      %v959 = vpop.f32.mrf.mxu0
      %v960 = vadd.f32 %v908, %v959
      %v961 = vpop.f32.mrf.mxu0
      %962 = vmatprep.mubr.bf16.mxu0 0
      %963 = vmatmul.mubr.bf16.gmra.mxu0 %v920
      %v964 = vpop.f32.mrf.mxu0
      %v965 = vadd.f32 %v908, %v964
      %v966 = vpop.f32.mrf.mxu0
      %v967 = vpop.f32.mrf.mxu0
      %v968 = vadd.f32 %v908, %v967
      %v969 = vpop.f32.mrf.mxu0
      %970 = vdwg.mxu0
      %v971 = vmax.f32 %v957, 0.0
      %v972 = vmax.f32 %v960, 0.0
      %v973 = vmax.f32 %v965, 0.0
      %v974 = vmax.f32 %v968, 0.0
      %v975 = vpack.c.bf16 %v972, %v971
      %v976 = vpack.c.bf16 %v974, %v973
      %v977 = vld [vmem:[%s9] sm:$0xf]
      %v978 = vld [vmem:[%s9 + $0x4] sm:$0xf]
      %v979 = vld [vmem:[%s9 + $0x8] sm:$0xf]
      %v980 = vld [vmem:[%s9 + $0xc] sm:$0xf]
      %v981 = vld [vmem:[%s10] sm:$0xf]
      %v982 = vld [vmem:[%s10 + $0x4] sm:$0xf]
      %v983 = vld [vmem:[%s10 + $0x8] sm:$0xf]
      %v984 = vld [vmem:[%s10 + $0xc] sm:$0xf]
      %v989 = vunpack.c.l.b16 %v981
      %v990 = vunpack.c.l.b16 %v982
      %v991 = vunpack.c.l.b16 %v983
      %v992 = vunpack.c.l.b16 %v984
      %v993 = vpack.c.b16 %v990, %v989
      %v994 = vpack.c.b16 %v992, %v991
      %997 = vmatprep.subr.bf16.mxu0 0
      %998 = vmatpush1.bf16.msra.mxu0 0
      %999 = vmatprep.subr.bf16.mxu0 0
      %1000 = vmatpush1.bf16.msra.mxu0 0
      %1001 = vmatprep.subr.bf16.mxu0 0
      %1002 = vmatpush1.bf16.msra.mxu0 0
      %1003 = vmatprep.subr.bf16.mxu0 0
      %1004 = vmatpush1.bf16.msra.mxu0 0
      %1005 = vmatprep.subr.bf16.mxu0 0
      %1006 = vmatpush1.bf16.msra.mxu0 0
      %1007 = vmatprep.subr.bf16.mxu0 0
      %1008 = vmatpush1.bf16.msra.mxu0 0
      %1009 = vmatprep.subr.bf16.mxu0 0
      %1010 = vmatpush1.bf16.msra.mxu0 %v994
      %1011 = vmatprep.subr.bf16.mxu0 0
      %1012 = vmatpush1.bf16.msra.mxu0 %v993
      %1013 = vmatprep.subr.bf16.mxu0 0
      %1014 = vmatpush2.bf16.msra.mxu0 0
      %1015 = vmatprep.subr.bf16.mxu0 0
      %1016 = vmatpush2.bf16.msra.mxu0 0
      %1017 = vmatprep.subr.bf16.mxu0 0
      %1018 = vmatpush2.bf16.msra.mxu0 0
      %1019 = vmatprep.subr.bf16.mxu0 0
      %1020 = vmatpush2.bf16.msra.mxu0 0
      %1021 = vmatprep.subr.bf16.mxu0 0
      %1022 = vmatpush2.bf16.msra.mxu0 0
      %1023 = vmatprep.subr.bf16.mxu0 0
      %1024 = vmatpush2.bf16.msra.mxu0 0
      %1025 = vmatprep.subr.bf16.mxu0 0
      %1026 = vmatpush2.bf16.msra.mxu0 0
      %1027 = vmatprep.subr.bf16.mxu0 0
      %1028 = vmatpush2.bf16.msra.mxu0 0
      %1029 = vmatprep.mubr.bf16.mxu0 0
      %1030 = vmatmul.mubr.bf16.gmra.mxu0 %v587
      %v1031 = vpop.f32.mrf.mxu0
      %v1032 = vadd.f32 0.0, %v1031
      %v1033 = vpop.f32.mrf.mxu0
      %v1034 = vpop.f32.mrf.mxu0
      %v1035 = vadd.f32 0.0, %v1034
      %v1036 = vpop.f32.mrf.mxu0
      %1037 = vmatprep.mubr.bf16.mxu0 0
      %1038 = vmatmul.mubr.bf16.gmra.mxu0 %v590
      %v1039 = vpop.f32.mrf.mxu0
      %v1040 = vadd.f32 0.0, %v1039
      %v1041 = vpop.f32.mrf.mxu0
      %v1042 = vpop.f32.mrf.mxu0
      %v1043 = vadd.f32 0.0, %v1042
      %v1044 = vpop.f32.mrf.mxu0
      %1045 = vdwg.mxu0
      %v1050 = vunpack.c.l.b16 %v977
      %v1051 = vunpack.c.l.b16 %v978
      %v1052 = vunpack.c.l.b16 %v979
      %v1053 = vunpack.c.l.b16 %v980
      %v1054 = vpack.c.b16 %v1051, %v1050
      %v1055 = vpack.c.b16 %v1053, %v1052
      %v1059 = vsel %vm585, %v975, 0
      %v1062 = vsel %vm585, %v976, 0
      %1064 = vmatprep.subr.bf16.mxu0 0
      %1065 = vmatpush1.bf16.msra.mxu0 0
      %1066 = vmatprep.subr.bf16.mxu0 0
      %1067 = vmatpush1.bf16.msra.mxu0 0
      %1068 = vmatprep.subr.bf16.mxu0 0
      %1069 = vmatpush1.bf16.msra.mxu0 0
      %1070 = vmatprep.subr.bf16.mxu0 0
      %1071 = vmatpush1.bf16.msra.mxu0 0
      %1072 = vmatprep.subr.bf16.mxu0 0
      %1073 = vmatpush1.bf16.msra.mxu0 0
      %1074 = vmatprep.subr.bf16.mxu0 0
      %1075 = vmatpush1.bf16.msra.mxu0 0
      %1076 = vmatprep.subr.bf16.mxu0 0
      %1077 = vmatpush1.bf16.msra.mxu0 %v1055
      %1078 = vmatprep.subr.bf16.mxu0 0
      %1079 = vmatpush1.bf16.msra.mxu0 %v1054
      %1080 = vmatprep.subr.bf16.mxu0 0
      %1081 = vmatpush2.bf16.msra.mxu0 0
      %1082 = vmatprep.subr.bf16.mxu0 0
      %1083 = vmatpush2.bf16.msra.mxu0 0
      %1084 = vmatprep.subr.bf16.mxu0 0
      %1085 = vmatpush2.bf16.msra.mxu0 0
      %1086 = vmatprep.subr.bf16.mxu0 0
      %1087 = vmatpush2.bf16.msra.mxu0 0
      %1088 = vmatprep.subr.bf16.mxu0 0
      %1089 = vmatpush2.bf16.msra.mxu0 0
      %1090 = vmatprep.subr.bf16.mxu0 0
      %1091 = vmatpush2.bf16.msra.mxu0 0
      %1092 = vmatprep.subr.bf16.mxu0 0
      %1093 = vmatpush2.bf16.msra.mxu0 0
      %1094 = vmatprep.subr.bf16.mxu0 0
      %1095 = vmatpush2.bf16.msra.mxu0 0
      %1096 = vmatprep.mubr.bf16.mxu0 0
      %1097 = vmatmul.mubr.bf16.gmra.mxu0 %v1059
      %v1098 = vpop.f32.mrf.mxu0
      %v1099 = vadd.f32 %v1032, %v1098
      %v1100 = vpop.f32.mrf.mxu0
      %v1101 = vpop.f32.mrf.mxu0
      %v1102 = vadd.f32 %v1035, %v1101
      %v1103 = vpop.f32.mrf.mxu0
      %1104 = vmatprep.mubr.bf16.mxu0 0
      %1105 = vmatmul.mubr.bf16.gmra.mxu0 %v1062
      %v1106 = vpop.f32.mrf.mxu0
      %v1107 = vadd.f32 %v1040, %v1106
      %v1108 = vpop.f32.mrf.mxu0
      %v1109 = vpop.f32.mrf.mxu0
      %v1110 = vadd.f32 %v1043, %v1109
      %v1111 = vpop.f32.mrf.mxu0
      %1112 = vdwg.mxu0
      %v1113 = vld [vmem:[%s11] sm:$0x1]
      %v1115 = vlaneseq
      %v1116 = vshrl.u32 %v1115, 7
      %v1117 = vsub.s32 0, %v1116
      %v1118 = vrot.slane %v1113, %v1117
      %v1120 = vadd.f32 %v1099, %v1118
      %v1121 = vadd.f32 %v1102, %v1118
      %v1122 = vadd.f32 %v1107, %v1118
      %v1123 = vadd.f32 %v1110, %v1118
      %v1124 = vmax.f32 %v1120, 0.0
      %v1125 = vmax.f32 %v1121, 0.0
      %v1126 = vmax.f32 %v1122, 0.0
      %v1127 = vmax.f32 %v1123, 0.0
      %v1128 = vpack.c.bf16 %v1125, %v1124
      %v1129 = vpack.c.bf16 %v1127, %v1126
      %v1130 = vld [vmem:[%s12] sm:$0xf]
      %v1131 = vld [vmem:[%s12 + $0x4] sm:$0xf]
      %v1132 = vld [vmem:[%s12 + $0x8] sm:$0xf]
      %v1133 = vld [vmem:[%s12 + $0xc] sm:$0xf]
      %v1134 = vld [vmem:[%s13] sm:$0x1]
      %v1136 = vlaneseq
      %v1137 = vshrl.u32 %v1136, 7
      %v1138 = vsub.s32 0, %v1137
      %v1139 = vrot.slane %v1134, %v1138
      %v1145 = vunpack.c.l.b16 %v1130
      %v1146 = vunpack.c.l.b16 %v1131
      %v1147 = vunpack.c.l.b16 %v1132
      %v1148 = vunpack.c.l.b16 %v1133
      %v1149 = vpack.c.b16 %v1146, %v1145
      %v1150 = vpack.c.b16 %v1148, %v1147
      %v1154 = vsel %vm585, %v1128, 0
      %v1157 = vsel %vm585, %v1129, 0
      %1159 = vmatprep.subr.bf16.mxu0 0
      %1160 = vmatpush1.bf16.msra.mxu0 0
      %1161 = vmatprep.subr.bf16.mxu0 0
      %1162 = vmatpush1.bf16.msra.mxu0 0
      %1163 = vmatprep.subr.bf16.mxu0 0
      %1164 = vmatpush1.bf16.msra.mxu0 0
      %1165 = vmatprep.subr.bf16.mxu0 0
      %1166 = vmatpush1.bf16.msra.mxu0 0
      %1167 = vmatprep.subr.bf16.mxu0 0
      %1168 = vmatpush1.bf16.msra.mxu0 0
      %1169 = vmatprep.subr.bf16.mxu0 0
      %1170 = vmatpush1.bf16.msra.mxu0 0
      %1171 = vmatprep.subr.bf16.mxu0 0
      %1172 = vmatpush1.bf16.msra.mxu0 %v1150
      %1173 = vmatprep.subr.bf16.mxu0 0
      %1174 = vmatpush1.bf16.msra.mxu0 %v1149
      %1175 = vmatprep.subr.bf16.mxu0 0
      %1176 = vmatpush2.bf16.msra.mxu0 0
      %1177 = vmatprep.subr.bf16.mxu0 0
      %1178 = vmatpush2.bf16.msra.mxu0 0
      %1179 = vmatprep.subr.bf16.mxu0 0
      %1180 = vmatpush2.bf16.msra.mxu0 0
      %1181 = vmatprep.subr.bf16.mxu0 0
      %1182 = vmatpush2.bf16.msra.mxu0 0
      %1183 = vmatprep.subr.bf16.mxu0 0
      %1184 = vmatpush2.bf16.msra.mxu0 0
      %1185 = vmatprep.subr.bf16.mxu0 0
      %1186 = vmatpush2.bf16.msra.mxu0 0
      %1187 = vmatprep.subr.bf16.mxu0 0
      %1188 = vmatpush2.bf16.msra.mxu0 0
      %1189 = vmatprep.subr.bf16.mxu0 0
      %1190 = vmatpush2.bf16.msra.mxu0 0
      %1191 = vmatprep.mubr.bf16.mxu0 0
      %1192 = vmatmul.mubr.bf16.gmra.mxu0 %v1154
      %v1193 = vpop.f32.mrf.mxu0
      %v1194 = vadd.f32 %v1139, %v1193
      %v1195 = vpop.f32.mrf.mxu0
      %v1196 = vpop.f32.mrf.mxu0
      %v1197 = vadd.f32 %v1139, %v1196
      %v1198 = vpop.f32.mrf.mxu0
      %1199 = vmatprep.mubr.bf16.mxu0 0
      %1200 = vmatmul.mubr.bf16.gmra.mxu0 %v1157
      %v1201 = vpop.f32.mrf.mxu0
      %v1202 = vadd.f32 %v1139, %v1201
      %v1203 = vpop.f32.mrf.mxu0
      %v1204 = vpop.f32.mrf.mxu0
      %v1205 = vadd.f32 %v1139, %v1204
      %v1206 = vpop.f32.mrf.mxu0
      %1207 = vdwg.mxu0
      %1208 = vst [vmem:[%s545] sm:$0xff] %v1194
      %1209 = vst [vmem:[%s545 + $0x8] sm:$0xff] %v1197
      %1210 = vst [vmem:[%s545 + $0x10] sm:$0xff] %v1202
      %1211 = vst [vmem:[%s545 + $0x18] sm:$0xff] %v1205
      %s1212 = smul.u32 4, %s30
      %p1213 = scmp.lt.s32.totalorder %s29, 1
      %s1214 = scalar_select %p1213, %s29, 1
      %p1215 = scmp.lt.s32.totalorder %s1212, 7
      %s1216 = scalar_select %p1215, %s1212, 7
      %s1217 = smul.addr %s1214, 8
      %s1218 = sadd.s32 %s1216, %s1217
      %s1219 = smul.addr %s1218, 8
      %s1220 = scalar_lea.vmem %s14, %s1219
      // Predicated region
      $region77: #{ocrnet_forward.7} parent=75 // pred_check
        %p1221 = pneg %p368
      $region78: #{ocrnet_forward.7} parent=75 // pred_check_branch
        %1223 = sbr.rel (%p1221) target = $region80
      $region79: #{ocrnet_forward.7} parent=75 // pred_region
        %s1224 = smul.u32 4, %s30
      $region80: #{ocrnet_forward.7} parent=75 // pred_fallthru
        _
    $region76: #{ocrnet_forward.7} parent=5 // pred_fallthru
      _
    %p1225 = scmp.le.s32.totalorder 2, %s20
    // Predicated region
    $region81: #{ocrnet_forward.7} parent=5 // pred_check
      %p1226 = pneg %p1225
    $region82: #{ocrnet_forward.7} parent=5 // pred_check_branch
      %1228 = sbr.rel (%p1226) target = $region84
    $region83: #{ocrnet_forward.7} parent=5 // pred_region
      %s1229 = ssub.s32 %s20, 2
      // Predicated region
      $region85: #{ocrnet_forward.7} parent=83 // pred_check
        %p1230 = pneg %p374
      $region86: #{ocrnet_forward.7} parent=83 // pred_check_branch
        %1232 = sbr.rel (%p1230) target = $region88
      $region87: #{ocrnet_forward.7} parent=83 // pred_region
        %s1233 = smul.u32 4, %s32
        %p1234 = scmp.lt.s32.totalorder %s31, 1
        %s1235 = scalar_select %p1234, %s31, 1
        %p1236 = scmp.lt.s32.totalorder %s1233, 7
        %s1237 = scalar_select %p1236, %s1233, 7
        %s1238 = smul.addr %s1235, 8
        %s1239 = sadd.s32 %s1237, %s1238
        %s1240 = smul.addr %s1239, 8
        %s1241 = scalar_lea.vmem %s14, %s1240
      $region88: #{ocrnet_forward.7} parent=83 // pred_fallthru
        _
    $region84: #{ocrnet_forward.7} parent=5 // pred_fallthru
      _
  $region6: #{ocrnet_forward.7} parent=0 // loop_footer
    %s24 = sadd.s32 1, %s20
  $region7: #{ocrnet_forward.7} parent=0 // loop_footer_branch
    %19 = sbr.rel target = $region3
  $region8: #{ocrnet_forward.7} parent=0 // loop_exit
    _

</llo_original>
